<compile_context>
chip_gen: v6e
topology: v6e:2x2x1
jax: 0.10.0
libtpu: 0.0.40
codegen_flags: <defaults>
</compile_context>

<pallas_src>
import numpy as np
import jax
import jax.numpy as jnp
from jax import lax
from jax.experimental import pallas as pl
from jax.experimental.pallas import tpu as pltpu


# ---------------------------------------------------------------------------
# Flattened 2-D DFT matrices implementing rfft2 / irfft2 with norm='ortho'
#   spatial flat index  n = h*P + w   (matches x.view(B, P, P, C))
#   freq    flat index  f = u*Wd + v  (matches complex_weight[..., r].reshape)
# Returned stacked (bf16 MXU operands):
#   A2   = [Ar; Ai]  : [2F, N]   forward:  Fr = A2[:F] @ x,  Fi = A2[F:] @ x
#   Bcat = [Br | Bi] : [N, 2F]   inverse:  y  = Bcat @ [Ur; Ui]
# ---------------------------------------------------------------------------
def _dft2_matrices(P: int):
    Wd = P // 2 + 1
    h = np.repeat(np.arange(P), P)            # [N]
    w = np.tile(np.arange(P), P)              # [N]
    u = np.repeat(np.arange(P), Wd)           # [F]
    v = np.tile(np.arange(Wd), P)             # [F]
    phase = (2.0 * np.pi / P) * (np.outer(u, h) + np.outer(v, w))   # [F, N]
    s = 1.0 / P                               # 'ortho' scale over both axes

    ar = np.cos(phase) * s                    # forward DFT (real part)
    ai = -np.sin(phase) * s                   # forward DFT (imag part)
    # Hermitian fold factors for the real inverse (even P): v=0 and v=P/2
    # columns appear once, all others twice.
    cv = np.where((v == 0) | (v == P // 2), 1.0, 2.0)                # [F]
    br = (cv[:, None] * np.cos(phase)).T * s                         # [N, F]
    bi = (-(cv[:, None]) * np.sin(phase)).T * s                      # [N, F]

    a2 = np.concatenate([ar, ai], axis=0)                            # [2F, N]
    bcat = np.concatenate([br, bi], axis=1)                          # [N, 2F]
    return jnp.asarray(a2, jnp.bfloat16), jnp.asarray(bcat, jnp.bfloat16)


# ---------------------------------------------------------------------------
# Generation-aware tiling plan
# ---------------------------------------------------------------------------
def _vmem_plan():
    """(per-step x-block byte target, vmem_limit_bytes) for this TPU generation."""
    vmem_bytes = None
    try:
        vmem_bytes = int(pltpu.get_tpu_info().vmem_capacity_bytes)
    except Exception:
        try:
            kind = jax.devices()[0].device_kind.lower()
            if "v5" in kind or "v6" in kind:
                vmem_bytes = 128 * 1024 * 1024
        except Exception:
            pass
    if vmem_bytes is None:
        vmem_bytes = 64 * 1024 * 1024            # conservative: v7x-class budget
    if vmem_bytes >= 100 * 1024 * 1024:          # v5e / v6e: 128 MiB physical
        return 8 * 1024 * 1024, 96 * 1024 * 1024
    return 4 * 1024 * 1024, 44 * 1024 * 1024     # v7x: 64 MiB per TensorCore


def _channel_tile(C: int, N: int, itemsize: int, target_bytes: int) -> int:
    """Prefer TC = C (contiguous DMA rows); split at multiples of 128 only when
    a single batch row already exceeds the per-step byte budget."""
    if N * C * itemsize <= target_bytes or C % 128 != 0:
        return C
    tc = C
    while tc % 2 == 0 and (tc // 2) % 128 == 0 and N * tc * itemsize > target_bytes:
        tc //= 2
    return tc


def _batch_tile(B: int, N: int, TC: int, itemsize: int,
                target_bytes: int, max_nb: int = 32) -> int:
    """Batches per grid step: fill the per-step byte budget."""
    cap = int(max(1, min(max_nb, target_bytes // max(1, N * TC * itemsize))))
    for nb in range(min(B, cap), 0, -1):
        if B % nb == 0:
            return nb
    return 1


# ---------------------------------------------------------------------------
# Pallas kernel: one (NB batches x TC channels) tile per grid step
# ---------------------------------------------------------------------------
def _global_filter_kernel(x_ref, wr_ref, wi_ref, a2_ref, bc_ref, o_ref):
    a2 = a2_ref[...]          # [2F, N]  bf16   stacked forward DFT [Ar; Ai]
    bc = bc_ref[...]          # [N, 2F]  bf16   stacked inverse DFT [Br | Bi]
    wr = wr_ref[...]          # [F, TC]  f32    learned filter (real)
    wi = wi_ref[...]          # [F, TC]  f32    learned filter (imag)
    F = wr.shape[0]
    nb = x_ref.shape[0]

    def one_batch(b):
        xb = x_ref[b].astype(jnp.bfloat16)                            # [N, TC]
        # rfft2 (flattened), single MXU pass:  [Fr; Fi] = A2 @ x
        f2 = jnp.dot(a2, xb, preferred_element_type=jnp.float32)      # [2F, TC]
        fr = f2[:F]                                                   # F=P*Wd, mult of 8
        fi = f2[F:]
        # complex elementwise filter (kept in f32)
        ur = (fr * wr - fi * wi).astype(jnp.bfloat16)
        ui = (fr * wi + fi * wr).astype(jnp.bfloat16)
        # irfft2 (flattened), single MXU pass:  y = [Br | Bi] @ [Ur; Ui]
        u2 = jnp.concatenate([ur, ui], axis=0)                        # [2F, TC]
        yb = jnp.dot(bc, u2, preferred_element_type=jnp.float32)      # [N, TC]
        o_ref[b] = yb.astype(o_ref.dtype)

    if nb <= 8:
        # Small tile: static unroll keeps full LLO scheduling visibility.
        for b in range(nb):
            one_batch(b)
    else:
        # Large tile: bound fr/fi/ur/ui live ranges (VMEM scratch) per iteration.
        def body(b, carry):
            one_batch(b)
            return carry
        lax.fori_loop(0, nb, body, 0, unroll=2)


# ---------------------------------------------------------------------------
# Wrapper: no layout changes — x is consumed directly as [B, N, C]
# ---------------------------------------------------------------------------
def global_filter_forward(x, complex_weight, patch_size=16):
    """x: [B, N, C]; complex_weight: [P, P//2+1, C, 2] (as in the nn.Module)."""
    B, N, C = x.shape
    P = patch_size
    Wd = P // 2 + 1
    F = P * Wd
    assert N == P * P, "x must be [B, P*P, C]"
    assert P % 2 == 0, "patch_size must be even (Hermitian fold assumes even P)"

    # Filter -> real/imag [F, C]; pure reshape of [P, Wd, C, 2], no transpose.
    cw = jnp.asarray(complex_weight, jnp.float32)
    wr = cw[..., 0].reshape(F, C)
    wi = cw[..., 1].reshape(F, C)

    # Constant DFT matrices (constant index_map -> DMA'd once, VMEM-resident).
    a2, bcat = _dft2_matrices(P)

    target_bytes, vmem_limit = _vmem_plan()
    TC = _channel_tile(C, N, x.dtype.itemsize, target_bytes)
    NB = _batch_tile(B, N, TC, x.dtype.itemsize, target_bytes)
    grid = (C // TC, B // NB)     # channel tiles outer, batch inner -> the
                                  # filter weights are not re-fetched per batch.

    def build(single_buffer_consts: bool):
        def const_spec(shape, index_map):
            if single_buffer_consts:
                try:
                    return pl.BlockSpec(shape, index_map,
                                        pipeline_mode=pl.Buffered(1))
                except TypeError:      # older jax: no pipeline_mode kwarg
                    pass
            return pl.BlockSpec(shape, index_map)

        return pl.pallas_call(
            _global_filter_kernel,
            out_shape=jax.ShapeDtypeStruct((B, N, C), x.dtype),
            grid=grid,
            in_specs=[
                pl.BlockSpec((NB, N, TC), lambda ci, bj: (bj, 0, ci)),   # x tile
                const_spec((F, TC), lambda ci, bj: (0, ci)),             # filter re
                const_spec((F, TC), lambda ci, bj: (0, ci)),             # filter im
                const_spec((2 * F, N), lambda ci, bj: (0, 0)),           # fwd DFT (stacked)
                const_spec((N, 2 * F), lambda ci, bj: (0, 0)),           # inv DFT (stacked)
            ],
            out_specs=pl.BlockSpec((NB, N, TC), lambda ci, bj: (bj, 0, ci)),
            compiler_params=pltpu.CompilerParams(
                dimension_semantics=("parallel", "parallel"),
                vmem_limit_bytes=vmem_limit),
        )

    try:
        return build(True)(x, wr, wi, a2, bcat)
    except Exception:
        # Fallback if single-buffered pipeline_mode is rejected by this jax build.
        return build(False)(x, wr, wi, a2, bcat)


# ---------------------------------------------------------------------------
# Pure-numpy reference (mirrors the torch forward exactly)
# ---------------------------------------------------------------------------
def _reference(x, complex_weight, patch_size):
    B, N, C = x.shape
    P = patch_size
    xf = np.asarray(x, np.float32).reshape(B, P, P, C)
    Xf = np.fft.rfft2(xf, axes=(1, 2), norm="ortho")
    w = np.asarray(complex_weight[..., 0]) + 1j * np.asarray(complex_weight[..., 1])
    Xf = Xf * w[None]
    y = np.fft.irfft2(Xf, s=(P, P), axes=(1, 2), norm="ortho")
    return y.reshape(B, N, C).astype(np.asarray(x).dtype)


if __name__ == "__main__":
    B, C, P = 2, 4, 16
    N = P * P
    Wd = P // 2 + 1

    key = jax.random.PRNGKey(0)
    kx, kw = jax.random.split(key)
    x = jax.random.normal(kx, (B, N, C), dtype=jnp.float32)
    # matches nn.Parameter(torch.randn(P, Wd, C, 2) * 0.02)
    complex_weight = jax.random.normal(kw, (P, Wd, C, 2), dtype=jnp.float32) * 0.02

    out = global_filter_forward(x, complex_weight, patch_size=P)
    out = jax.block_until_ready(out)

    ref = _reference(np.asarray(x), np.asarray(complex_weight), P)
    np.testing.assert_allclose(np.asarray(out), ref, atol=2e-3, rtol=2e-2)

    print("KERNEL_OK")
</pallas_src>

<mosaic_0001>
module attributes {stable_mosaic.version = 11 : i64} {
  func.func @_global_filter_kernel(%arg0: i32, %arg1: i32, %arg2: memref<2x256x4xf32, #tpu.memory_space<vmem>>, %arg3: memref<144x4xf32, #tpu.memory_space<vmem>>, %arg4: memref<144x4xf32, #tpu.memory_space<vmem>>, %arg5: memref<288x256xbf16, #tpu.memory_space<vmem>>, %arg6: memref<256x288xbf16, #tpu.memory_space<vmem>>, %arg7: memref<2x256x4xf32, #tpu.memory_space<vmem>>) attributes {dimension_semantics = [#tpu.dimension_semantics<parallel>, #tpu.dimension_semantics<parallel>], iteration_bounds = array<i64: 1, 1>, scalar_prefetch = 0 : i64, scratch_operands = 0 : i64, tpu.core_type = #tpu.core_type<tc>, window_params = [{transform_indices = @transform_0, window_bounds = array<i64: 2, 256, 4>}, {pipeline_mode = #tpu.pipeline_mode<synchronous>, transform_indices = @transform_1, window_bounds = array<i64: 144, 4>}, {pipeline_mode = #tpu.pipeline_mode<synchronous>, transform_indices = @transform_2, window_bounds = array<i64: 144, 4>}, {pipeline_mode = #tpu.pipeline_mode<synchronous>, transform_indices = @transform_3, window_bounds = array<i64: 288, 256>}, {pipeline_mode = #tpu.pipeline_mode<synchronous>, transform_indices = @transform_4, window_bounds = array<i64: 256, 288>}, {transform_indices = @transform_5, window_bounds = array<i64: 2, 256, 4>}]} {
    %c0 = arith.constant 0 : index
    %c0_0 = arith.constant 0 : index
    %0 = vector.load %arg5[%c0, %c0_0] : memref<288x256xbf16, #tpu.memory_space<vmem>>, vector<288x256xbf16>
    %c0_1 = arith.constant 0 : index
    %c0_2 = arith.constant 0 : index
    %1 = vector.load %arg6[%c0_1, %c0_2] : memref<256x288xbf16, #tpu.memory_space<vmem>>, vector<256x288xbf16>
    %c0_3 = arith.constant 0 : index
    %c0_4 = arith.constant 0 : index
    %2 = vector.load %arg3[%c0_3, %c0_4] : memref<144x4xf32, #tpu.memory_space<vmem>>, vector<144x4xf32>
    %c0_5 = arith.constant 0 : index
    %c0_6 = arith.constant 0 : index
    %3 = vector.load %arg4[%c0_5, %c0_6] : memref<144x4xf32, #tpu.memory_space<vmem>>, vector<144x4xf32>
    %c0_7 = arith.constant 0 : index
    %c0_8 = arith.constant 0 : index
    %c0_9 = arith.constant 0 : index
    %4 = vector.load %arg2[%c0_7, %c0_8, %c0_9] : memref<2x256x4xf32, #tpu.memory_space<vmem>>, vector<1x256x4xf32>
    %5 = vector.shape_cast %4 : vector<1x256x4xf32> to vector<256x4xf32>
    %6 = arith.truncf %5 : vector<256x4xf32> to vector<256x4xbf16>
    %cst = arith.constant dense<0.000000e+00> : vector<288x4xf32>
    %7 = tpu.matmul %0, %6, %cst {dimension_numbers = #tpu.dot_dimension_numbers<[1], [0], [0], [1], [0, 0, 1, 1], [], []>} : vector<288x256xbf16>, vector<256x4xbf16>, vector<288x4xf32> -> vector<288x4xf32>
    %8 = vector.extract_strided_slice %7 {offsets = [0, 0], sizes = [144, 4], strides = [1, 1]} : vector<288x4xf32> to vector<144x4xf32>
    %9 = vector.extract_strided_slice %7 {offsets = [144, 0], sizes = [144, 4], strides = [1, 1]} : vector<288x4xf32> to vector<144x4xf32>
    %10 = arith.mulf %8, %2 : vector<144x4xf32>
    %11 = arith.mulf %9, %3 : vector<144x4xf32>
    %12 = arith.subf %10, %11 : vector<144x4xf32>
    %13 = arith.truncf %12 : vector<144x4xf32> to vector<144x4xbf16>
    %14 = arith.mulf %8, %3 : vector<144x4xf32>
    %15 = arith.mulf %9, %2 : vector<144x4xf32>
    %16 = arith.addf %14, %15 : vector<144x4xf32>
    %17 = arith.truncf %16 : vector<144x4xf32> to vector<144x4xbf16>
    %18 = tpu.concatenate %13, %17 in 0 : vector<144x4xbf16>, vector<144x4xbf16> -> vector<288x4xbf16>
    %cst_10 = arith.constant dense<0.000000e+00> : vector<256x4xf32>
    %19 = tpu.matmul %1, %18, %cst_10 {dimension_numbers = #tpu.dot_dimension_numbers<[1], [0], [0], [1], [0, 0, 1, 1], [], []>} : vector<256x288xbf16>, vector<288x4xbf16>, vector<256x4xf32> -> vector<256x4xf32>
    %c0_11 = arith.constant 0 : index
    %c0_12 = arith.constant 0 : index
    %c0_13 = arith.constant 0 : index
    %20 = vector.load %arg7[%c0_11, %c0_12, %c0_13] : memref<2x256x4xf32, #tpu.memory_space<vmem>>, vector<1x256x4xf32>
    %21 = vector.shape_cast %20 : vector<1x256x4xf32> to vector<256x4xf32>
    %22 = vector.shape_cast %19 : vector<256x4xf32> to vector<1x256x4xf32>
    tpu.vector_store %arg7[%c0_11, %c0_12, %c0_13], %22 {strides = array<i32>} : memref<2x256x4xf32, #tpu.memory_space<vmem>>, vector<1x256x4xf32>,
    %c1 = arith.constant 1 : index
    %c0_14 = arith.constant 0 : index
    %c0_15 = arith.constant 0 : index
    %23 = vector.load %arg2[%c1, %c0_14, %c0_15] : memref<2x256x4xf32, #tpu.memory_space<vmem>>, vector<1x256x4xf32>
    %24 = vector.shape_cast %23 : vector<1x256x4xf32> to vector<256x4xf32>
    %25 = arith.truncf %24 : vector<256x4xf32> to vector<256x4xbf16>
    %cst_16 = arith.constant dense<0.000000e+00> : vector<288x4xf32>
    %26 = tpu.matmul %0, %25, %cst_16 {dimension_numbers = #tpu.dot_dimension_numbers<[1], [0], [0], [1], [0, 0, 1, 1], [], []>} : vector<288x256xbf16>, vector<256x4xbf16>, vector<288x4xf32> -> vector<288x4xf32>
    %27 = vector.extract_strided_slice %26 {offsets = [0, 0], sizes = [144, 4], strides = [1, 1]} : vector<288x4xf32> to vector<144x4xf32>
    %28 = vector.extract_strided_slice %26 {offsets = [144, 0], sizes = [144, 4], strides = [1, 1]} : vector<288x4xf32> to vector<144x4xf32>
    %29 = arith.mulf %27, %2 : vector<144x4xf32>
    %30 = arith.mulf %28, %3 : vector<144x4xf32>
    %31 = arith.subf %29, %30 : vector<144x4xf32>
    %32 = arith.truncf %31 : vector<144x4xf32> to vector<144x4xbf16>
    %33 = arith.mulf %27, %3 : vector<144x4xf32>
    %34 = arith.mulf %28, %2 : vector<144x4xf32>
    %35 = arith.addf %33, %34 : vector<144x4xf32>
    %36 = arith.truncf %35 : vector<144x4xf32> to vector<144x4xbf16>
    %37 = tpu.concatenate %32, %36 in 0 : vector<144x4xbf16>, vector<144x4xbf16> -> vector<288x4xbf16>
    %cst_17 = arith.constant dense<0.000000e+00> : vector<256x4xf32>
    %38 = tpu.matmul %1, %37, %cst_17 {dimension_numbers = #tpu.dot_dimension_numbers<[1], [0], [0], [1], [0, 0, 1, 1], [], []>} : vector<256x288xbf16>, vector<288x4xbf16>, vector<256x4xf32> -> vector<256x4xf32>
    %c1_18 = arith.constant 1 : index
    %c0_19 = arith.constant 0 : index
    %c0_20 = arith.constant 0 : index
    %39 = vector.load %arg7[%c1_18, %c0_19, %c0_20] : memref<2x256x4xf32, #tpu.memory_space<vmem>>, vector<1x256x4xf32>
    %40 = vector.shape_cast %39 : vector<1x256x4xf32> to vector<256x4xf32>
    %41 = vector.shape_cast %38 : vector<256x4xf32> to vector<1x256x4xf32>
    tpu.vector_store %arg7[%c1_18, %c0_19, %c0_20], %41 {strides = array<i32>} : memref<2x256x4xf32, #tpu.memory_space<vmem>>, vector<1x256x4xf32>,
    return
  }
  func.func @transform_0(%arg0: i32, %arg1: i32) -> (i32, i32, i32) {
    %c0_i32 = arith.constant 0 : i32
    %c0_i32_0 = arith.constant 0 : i32
    return %arg1, %c0_i32, %arg0 : i32, i32, i32
  }
  func.func @transform_1(%arg0: i32, %arg1: i32) -> (i32, i32) {
    %c0_i32 = arith.constant 0 : i32
    %c0_i32_0 = arith.constant 0 : i32
    return %c0_i32, %arg0 : i32, i32
  }
  func.func @transform_2(%arg0: i32, %arg1: i32) -> (i32, i32) {
    %c0_i32 = arith.constant 0 : i32
    %c0_i32_0 = arith.constant 0 : i32
    return %c0_i32, %arg0 : i32, i32
  }
  func.func @transform_3(%arg0: i32, %arg1: i32) -> (i32, i32) {
    %c0_i32 = arith.constant 0 : i32
    %c0_i32_0 = arith.constant 0 : i32
    %c0_i32_1 = arith.constant 0 : i32
    return %c0_i32, %c0_i32_0 : i32, i32
  }
  func.func @transform_4(%arg0: i32, %arg1: i32) -> (i32, i32) {
    %c0_i32 = arith.constant 0 : i32
    %c0_i32_0 = arith.constant 0 : i32
    %c0_i32_1 = arith.constant 0 : i32
    return %c0_i32, %c0_i32_0 : i32, i32
  }
  func.func @transform_5(%arg0: i32, %arg1: i32) -> (i32, i32, i32) {
    %c0_i32 = arith.constant 0 : i32
    %c0_i32_0 = arith.constant 0 : i32
    return %arg1, %c0_i32, %arg0 : i32, i32, i32
  }
}

module attributes {stable_mosaic.version = 11 : i64} {
  func.func @_global_filter_kernel(%arg0: i32, %arg1: i32, %arg2: memref<2x256x4xf32, #tpu.memory_space<vmem>>, %arg3: memref<144x4xf32, #tpu.memory_space<vmem>>, %arg4: memref<144x4xf32, #tpu.memory_space<vmem>>, %arg5: memref<288x256xbf16, #tpu.memory_space<vmem>>, %arg6: memref<256x288xbf16, #tpu.memory_space<vmem>>, %arg7: memref<2x256x4xf32, #tpu.memory_space<vmem>>) attributes {dimension_semantics = [#tpu.dimension_semantics<parallel>, #tpu.dimension_semantics<parallel>], iteration_bounds = array<i64: 1, 1>, scalar_prefetch = 0 : i64, scratch_operands = 0 : i64, tpu.core_type = #tpu.core_type<tc>, window_params = [{transform_indices = @transform_0, window_bounds = array<i64: 2, 256, 4>}, {transform_indices = @transform_1, window_bounds = array<i64: 144, 4>}, {transform_indices = @transform_2, window_bounds = array<i64: 144, 4>}, {pipeline_mode = #tpu.pipeline_mode<synchronous>, transform_indices = @transform_3, window_bounds = array<i64: 288, 256>}, {pipeline_mode = #tpu.pipeline_mode<synchronous>, transform_indices = @transform_4, window_bounds = array<i64: 256, 288>}, {transform_indices = @transform_5, window_bounds = array<i64: 2, 256, 4>}]} {
    %c0 = arith.constant 0 : index
    %c0_0 = arith.constant 0 : index
    %0 = vector.load %arg5[%c0, %c0_0] : memref<288x256xbf16, #tpu.memory_space<vmem>>, vector<288x256xbf16>
    %c0_1 = arith.constant 0 : index
    %c0_2 = arith.constant 0 : index
    %1 = vector.load %arg6[%c0_1, %c0_2] : memref<256x288xbf16, #tpu.memory_space<vmem>>, vector<256x288xbf16>
    %c0_3 = arith.constant 0 : index
    %c0_4 = arith.constant 0 : index
    %2 = vector.load %arg3[%c0_3, %c0_4] : memref<144x4xf32, #tpu.memory_space<vmem>>, vector<144x4xf32>
    %c0_5 = arith.constant 0 : index
    %c0_6 = arith.constant 0 : index
    %3 = vector.load %arg4[%c0_5, %c0_6] : memref<144x4xf32, #tpu.memory_space<vmem>>, vector<144x4xf32>
    %c0_7 = arith.constant 0 : index
    %c0_8 = arith.constant 0 : index
    %c0_9 = arith.constant 0 : index
    %4 = vector.load %arg2[%c0_7, %c0_8, %c0_9] : memref<2x256x4xf32, #tpu.memory_space<vmem>>, vector<1x256x4xf32>
    %5 = vector.shape_cast %4 : vector<1x256x4xf32> to vector<256x4xf32>
    %6 = arith.truncf %5 : vector<256x4xf32> to vector<256x4xbf16>
    %cst = arith.constant dense<0.000000e+00> : vector<288x4xf32>
    %7 = tpu.matmul %0, %6, %cst {dimension_numbers = #tpu.dot_dimension_numbers<[1], [0], [0], [1], [0, 0, 1, 1], [], []>} : vector<288x256xbf16>, vector<256x4xbf16>, vector<288x4xf32> -> vector<288x4xf32>
    %8 = vector.extract_strided_slice %7 {offsets = [0, 0], sizes = [144, 4], strides = [1, 1]} : vector<288x4xf32> to vector<144x4xf32>
    %9 = vector.extract_strided_slice %7 {offsets = [144, 0], sizes = [144, 4], strides = [1, 1]} : vector<288x4xf32> to vector<144x4xf32>
    %10 = arith.mulf %8, %2 : vector<144x4xf32>
    %11 = arith.mulf %9, %3 : vector<144x4xf32>
    %12 = arith.subf %10, %11 : vector<144x4xf32>
    %13 = arith.truncf %12 : vector<144x4xf32> to vector<144x4xbf16>
    %14 = arith.mulf %8, %3 : vector<144x4xf32>
    %15 = arith.mulf %9, %2 : vector<144x4xf32>
    %16 = arith.addf %14, %15 : vector<144x4xf32>
    %17 = arith.truncf %16 : vector<144x4xf32> to vector<144x4xbf16>
    %18 = tpu.concatenate %13, %17 in 0 : vector<144x4xbf16>, vector<144x4xbf16> -> vector<288x4xbf16>
    %cst_10 = arith.constant dense<0.000000e+00> : vector<256x4xf32>
    %19 = tpu.matmul %1, %18, %cst_10 {dimension_numbers = #tpu.dot_dimension_numbers<[1], [0], [0], [1], [0, 0, 1, 1], [], []>} : vector<256x288xbf16>, vector<288x4xbf16>, vector<256x4xf32> -> vector<256x4xf32>
    %c0_11 = arith.constant 0 : index
    %c0_12 = arith.constant 0 : index
    %c0_13 = arith.constant 0 : index
    %20 = vector.load %arg7[%c0_11, %c0_12, %c0_13] : memref<2x256x4xf32, #tpu.memory_space<vmem>>, vector<1x256x4xf32>
    %21 = vector.shape_cast %20 : vector<1x256x4xf32> to vector<256x4xf32>
    %22 = vector.shape_cast %19 : vector<256x4xf32> to vector<1x256x4xf32>
    tpu.vector_store %arg7[%c0_11, %c0_12, %c0_13], %22 {strides = array<i32>} : memref<2x256x4xf32, #tpu.memory_space<vmem>>, vector<1x256x4xf32>,
    %c1 = arith.constant 1 : index
    %c0_14 = arith.constant 0 : index
    %c0_15 = arith.constant 0 : index
    %23 = vector.load %arg2[%c1, %c0_14, %c0_15] : memref<2x256x4xf32, #tpu.memory_space<vmem>>, vector<1x256x4xf32>
    %24 = vector.shape_cast %23 : vector<1x256x4xf32> to vector<256x4xf32>
    %25 = arith.truncf %24 : vector<256x4xf32> to vector<256x4xbf16>
    %cst_16 = arith.constant dense<0.000000e+00> : vector<288x4xf32>
    %26 = tpu.matmul %0, %25, %cst_16 {dimension_numbers = #tpu.dot_dimension_numbers<[1], [0], [0], [1], [0, 0, 1, 1], [], []>} : vector<288x256xbf16>, vector<256x4xbf16>, vector<288x4xf32> -> vector<288x4xf32>
    %27 = vector.extract_strided_slice %26 {offsets = [0, 0], sizes = [144, 4], strides = [1, 1]} : vector<288x4xf32> to vector<144x4xf32>
    %28 = vector.extract_strided_slice %26 {offsets = [144, 0], sizes = [144, 4], strides = [1, 1]} : vector<288x4xf32> to vector<144x4xf32>
    %29 = arith.mulf %27, %2 : vector<144x4xf32>
    %30 = arith.mulf %28, %3 : vector<144x4xf32>
    %31 = arith.subf %29, %30 : vector<144x4xf32>
    %32 = arith.truncf %31 : vector<144x4xf32> to vector<144x4xbf16>
    %33 = arith.mulf %27, %3 : vector<144x4xf32>
    %34 = arith.mulf %28, %2 : vector<144x4xf32>
    %35 = arith.addf %33, %34 : vector<144x4xf32>
    %36 = arith.truncf %35 : vector<144x4xf32> to vector<144x4xbf16>
    %37 = tpu.concatenate %32, %36 in 0 : vector<144x4xbf16>, vector<144x4xbf16> -> vector<288x4xbf16>
    %cst_17 = arith.constant dense<0.000000e+00> : vector<256x4xf32>
    %38 = tpu.matmul %1, %37, %cst_17 {dimension_numbers = #tpu.dot_dimension_numbers<[1], [0], [0], [1], [0, 0, 1, 1], [], []>} : vector<256x288xbf16>, vector<288x4xbf16>, vector<256x4xf32> -> vector<256x4xf32>
    %c1_18 = arith.constant 1 : index
    %c0_19 = arith.constant 0 : index
    %c0_20 = arith.constant 0 : index
    %39 = vector.load %arg7[%c1_18, %c0_19, %c0_20] : memref<2x256x4xf32, #tpu.memory_space<vmem>>, vector<1x256x4xf32>
    %40 = vector.shape_cast %39 : vector<1x256x4xf32> to vector<256x4xf32>
    %41 = vector.shape_cast %38 : vector<256x4xf32> to vector<1x256x4xf32>
    tpu.vector_store %arg7[%c1_18, %c0_19, %c0_20], %41 {strides = array<i32>} : memref<2x256x4xf32, #tpu.memory_space<vmem>>, vector<1x256x4xf32>,
    return
  }
  func.func @transform_0(%arg0: i32, %arg1: i32) -> (i32, i32, i32) {
    %c0_i32 = arith.constant 0 : i32
    %c0_i32_0 = arith.constant 0 : i32
    return %arg1, %c0_i32, %arg0 : i32, i32, i32
  }
  func.func @transform_1(%arg0: i32, %arg1: i32) -> (i32, i32) {
    %c0_i32 = arith.constant 0 : i32
    %c0_i32_0 = arith.constant 0 : i32
    return %c0_i32, %arg0 : i32, i32
  }
  func.func @transform_2(%arg0: i32, %arg1: i32) -> (i32, i32) {
    %c0_i32 = arith.constant 0 : i32
    %c0_i32_0 = arith.constant 0 : i32
    return %c0_i32, %arg0 : i32, i32
  }
  func.func @transform_3(%arg0: i32, %arg1: i32) -> (i32, i32) {
    %c0_i32 = arith.constant 0 : i32
    %c0_i32_0 = arith.constant 0 : i32
    %c0_i32_1 = arith.constant 0 : i32
    return %c0_i32, %c0_i32_0 : i32, i32
  }
  func.func @transform_4(%arg0: i32, %arg1: i32) -> (i32, i32) {
    %c0_i32 = arith.constant 0 : i32
    %c0_i32_0 = arith.constant 0 : i32
    %c0_i32_1 = arith.constant 0 : i32
    return %c0_i32, %c0_i32_0 : i32, i32
  }
  func.func @transform_5(%arg0: i32, %arg1: i32) -> (i32, i32, i32) {
    %c0_i32 = arith.constant 0 : i32
    %c0_i32_0 = arith.constant 0 : i32
    return %arg1, %c0_i32, %arg0 : i32, i32, i32
  }
}

</mosaic_0001>

<llo_original>
// kernel: tpu_custom_call.1
$region0: #{tpu_custom_call.1}
  #allocation0 [shape = 'u32[]', space=smem, size = 0x4, offset = 0x4, fixed_abs, tag = 'smem constant byte address 0x4 - core index']
  #allocation1 [shape = 'u32[144,128]{1,0:T(1,128)}', space=vmem, size = 0x12000, scoped, tag = 'internal scratch']
  %s0 = inlined_call_operand.vmem [shape: f32[2,256,4], index: 0, kind: input, shape index: {}]
  %s1 = inlined_call_operand.vmem [shape: f32[144,4], index: 1, kind: input, shape index: {}]
  %s2 = inlined_call_operand.vmem [shape: f32[144,4], index: 2, kind: input, shape index: {}]
  %s3 = inlined_call_operand.vmem [shape: bf16[288,256], index: 3, kind: input, shape index: {}]
  %s4 = inlined_call_operand.vmem [shape: bf16[256,288], index: 4, kind: input, shape index: {}]
  %s5 = inlined_call_operand.vmem [shape: f32[2,256,4], index: 5, kind: output, shape index: {}]
  %s6 = sld [smem:[#allocation0]]
  $region30: #{tpu_custom_call.1} parent=0
    _
  %s8 = ssub.s32 1, %s6
  %s9 = scalar_select 0, %s8, %s6
  // Predicated region
  $region2: #{tpu_custom_call.1} parent=0 // pred_check
    _
  $region3: #{tpu_custom_call.1} parent=0 // pred_check_branch
    %11 = sbr.rel (0) target = $region5
  $region4: #{tpu_custom_call.1} parent=0 // pred_region
    _
  $region5: #{tpu_custom_call.1} parent=0 // pred_fallthru
    _
  // Predicated region
  $region6: #{tpu_custom_call.1} parent=0 // pred_check
    _
  $region7: #{tpu_custom_call.1} parent=0 // pred_check_branch
    %13 = sbr.rel (0) target = $region9
  $region8: #{tpu_custom_call.1} parent=0 // pred_region
    _
  $region9: #{tpu_custom_call.1} parent=0 // pred_fallthru
    _
  // Predicated region
  $region10: #{tpu_custom_call.1} parent=0 // pred_check
    _
  $region11: #{tpu_custom_call.1} parent=0 // pred_check_branch
    %15 = sbr.rel (0) target = $region13
  $region12: #{tpu_custom_call.1} parent=0 // pred_region
    _
  $region13: #{tpu_custom_call.1} parent=0 // pred_fallthru
    _
  // Predicated region
  $region14: #{tpu_custom_call.1} parent=0 // pred_check
    _
  $region15: #{tpu_custom_call.1} parent=0 // pred_check_branch
    %17 = sbr.rel (0) target = $region17
  $region16: #{tpu_custom_call.1} parent=0 // pred_region
    _
  $region17: #{tpu_custom_call.1} parent=0 // pred_fallthru
    _
  // Predicated region
  $region18: #{tpu_custom_call.1} parent=0 // pred_check
    _
  $region19: #{tpu_custom_call.1} parent=0 // pred_check_branch
    %19 = sbr.rel (0) target = $region21
  $region20: #{tpu_custom_call.1} parent=0 // pred_region
    _
  $region21: #{tpu_custom_call.1} parent=0 // pred_fallthru
    _
  %v21 = vld [vmem:[%s3] sm:$0xff]
  %v22 = vld [vmem:[%s3 + $0x8] sm:$0xff]
  %v23 = vld [vmem:[%s3 + $0x10] sm:$0xff]
  %v24 = vld [vmem:[%s3 + $0x18] sm:$0xff]
  %v25 = vld [vmem:[%s3 + $0x20] sm:$0xff]
  %v26 = vld [vmem:[%s3 + $0x28] sm:$0xff]
  %v27 = vld [vmem:[%s3 + $0x30] sm:$0xff]
  %v28 = vld [vmem:[%s3 + $0x38] sm:$0xff]
  %v29 = vld [vmem:[%s3 + $0x40] sm:$0xff]
  %v30 = vld [vmem:[%s3 + $0x48] sm:$0xff]
  %v31 = vld [vmem:[%s3 + $0x50] sm:$0xff]
  %v32 = vld [vmem:[%s3 + $0x58] sm:$0xff]
  %v33 = vld [vmem:[%s3 + $0x60] sm:$0xff]
  %v34 = vld [vmem:[%s3 + $0x68] sm:$0xff]
  %v35 = vld [vmem:[%s3 + $0x70] sm:$0xff]
  %v36 = vld [vmem:[%s3 + $0x78] sm:$0xff]
  %v37 = vld [vmem:[%s3 + $0x80] sm:$0xff]
  %v38 = vld [vmem:[%s3 + $0x88] sm:$0xff]
  %v39 = vld [vmem:[%s3 + $0x90] sm:$0xff]
  %v40 = vld [vmem:[%s3 + $0x98] sm:$0xff]
  %v41 = vld [vmem:[%s3 + $0xa0] sm:$0xff]
  %v42 = vld [vmem:[%s3 + $0xa8] sm:$0xff]
  %v43 = vld [vmem:[%s3 + $0xb0] sm:$0xff]
  %v44 = vld [vmem:[%s3 + $0xb8] sm:$0xff]
  %v45 = vld [vmem:[%s3 + $0xc0] sm:$0xff]
  %v46 = vld [vmem:[%s3 + $0xc8] sm:$0xff]
  %v47 = vld [vmem:[%s3 + $0xd0] sm:$0xff]
  %v48 = vld [vmem:[%s3 + $0xd8] sm:$0xff]
  %v49 = vld [vmem:[%s3 + $0xe0] sm:$0xff]
  %v50 = vld [vmem:[%s3 + $0xe8] sm:$0xff]
  %v51 = vld [vmem:[%s3 + $0xf0] sm:$0xff]
  %v52 = vld [vmem:[%s3 + $0xf8] sm:$0xff]
  %v53 = vld [vmem:[%s3 + $0x100] sm:$0xff]
  %v54 = vld [vmem:[%s3 + $0x108] sm:$0xff]
  %v55 = vld [vmem:[%s3 + $0x110] sm:$0xff]
  %v56 = vld [vmem:[%s3 + $0x118] sm:$0xff]
  %v57 = vld [vmem:[%s4] sm:$0xff]
  %v58 = vld [vmem:[%s4 + $0x8] sm:$0xf]
  %v59 = vld [vmem:[%s4 + $0xc] sm:$0xff]
  %v60 = vld [vmem:[%s4 + $0x14] sm:$0xf]
  %v61 = vld [vmem:[%s4 + $0x18] sm:$0xff]
  %v62 = vld [vmem:[%s4 + $0x20] sm:$0xf]
  %v63 = vld [vmem:[%s4 + $0x24] sm:$0xff]
  %v64 = vld [vmem:[%s4 + $0x2c] sm:$0xf]
  %v65 = vld [vmem:[%s4 + $0x30] sm:$0xff]
  %v66 = vld [vmem:[%s4 + $0x38] sm:$0xf]
  %v67 = vld [vmem:[%s4 + $0x3c] sm:$0xff]
  %v68 = vld [vmem:[%s4 + $0x44] sm:$0xf]
  %v69 = vld [vmem:[%s4 + $0x48] sm:$0xff]
  %v70 = vld [vmem:[%s4 + $0x50] sm:$0xf]
  %v71 = vld [vmem:[%s4 + $0x54] sm:$0xff]
  %v72 = vld [vmem:[%s4 + $0x5c] sm:$0xf]
  %v73 = vld [vmem:[%s4 + $0x60] sm:$0xff]
  %v74 = vld [vmem:[%s4 + $0x68] sm:$0xf]
  %v75 = vld [vmem:[%s4 + $0x6c] sm:$0xff]
  %v76 = vld [vmem:[%s4 + $0x74] sm:$0xf]
  %v77 = vld [vmem:[%s4 + $0x78] sm:$0xff]
  %v78 = vld [vmem:[%s4 + $0x80] sm:$0xf]
  %v79 = vld [vmem:[%s4 + $0x84] sm:$0xff]
  %v80 = vld [vmem:[%s4 + $0x8c] sm:$0xf]
  %v81 = vld [vmem:[%s4 + $0x90] sm:$0xff]
  %v82 = vld [vmem:[%s4 + $0x98] sm:$0xf]
  %v83 = vld [vmem:[%s4 + $0x9c] sm:$0xff]
  %v84 = vld [vmem:[%s4 + $0xa4] sm:$0xf]
  %v85 = vld [vmem:[%s4 + $0xa8] sm:$0xff]
  %v86 = vld [vmem:[%s4 + $0xb0] sm:$0xf]
  %v87 = vld [vmem:[%s4 + $0xb4] sm:$0xff]
  %v88 = vld [vmem:[%s4 + $0xbc] sm:$0xf]
  %v89 = vld [vmem:[%s4 + $0xc0] sm:$0xff]
  %v90 = vld [vmem:[%s4 + $0xc8] sm:$0xf]
  %v91 = vld [vmem:[%s4 + $0xcc] sm:$0xff]
  %v92 = vld [vmem:[%s4 + $0xd4] sm:$0xf]
  %v93 = vld [vmem:[%s4 + $0xd8] sm:$0xff]
  %v94 = vld [vmem:[%s4 + $0xe0] sm:$0xf]
  %v95 = vld [vmem:[%s4 + $0xe4] sm:$0xff]
  %v96 = vld [vmem:[%s4 + $0xec] sm:$0xf]
  %v97 = vld [vmem:[%s4 + $0xf0] sm:$0xff]
  %v98 = vld [vmem:[%s4 + $0xf8] sm:$0xf]
  %v99 = vld [vmem:[%s4 + $0xfc] sm:$0xff]
  %v100 = vld [vmem:[%s4 + $0x104] sm:$0xf]
  %v101 = vld [vmem:[%s4 + $0x108] sm:$0xff]
  %v102 = vld [vmem:[%s4 + $0x110] sm:$0xf]
  %v103 = vld [vmem:[%s4 + $0x114] sm:$0xff]
  %v104 = vld [vmem:[%s4 + $0x11c] sm:$0xf]
  %v105 = vld [vmem:[%s4 + $0x120] sm:$0xff]
  %v106 = vld [vmem:[%s4 + $0x128] sm:$0xf]
  %v107 = vld [vmem:[%s4 + $0x12c] sm:$0xff]
  %v108 = vld [vmem:[%s4 + $0x134] sm:$0xf]
  %v109 = vld [vmem:[%s4 + $0x138] sm:$0xff]
  %v110 = vld [vmem:[%s4 + $0x140] sm:$0xf]
  %v111 = vld [vmem:[%s4 + $0x144] sm:$0xff]
  %v112 = vld [vmem:[%s4 + $0x14c] sm:$0xf]
  %v113 = vld [vmem:[%s4 + $0x150] sm:$0xff]
  %v114 = vld [vmem:[%s4 + $0x158] sm:$0xf]
  %v115 = vld [vmem:[%s4 + $0x15c] sm:$0xff]
  %v116 = vld [vmem:[%s4 + $0x164] sm:$0xf]
  %v117 = vld [vmem:[%s4 + $0x168] sm:$0xff]
  %v118 = vld [vmem:[%s4 + $0x170] sm:$0xf]
  %v119 = vld [vmem:[%s4 + $0x174] sm:$0xff]
  %v120 = vld [vmem:[%s4 + $0x17c] sm:$0xf]
  %v121 = vld [vmem:[%s1] sm:$0xff]
  %v122 = vld [vmem:[%s1 + $0x8] sm:$0xff]
  %v123 = vld [vmem:[%s1 + $0x10] sm:$0xff]
  %v124 = vld [vmem:[%s1 + $0x18] sm:$0xff]
  %v125 = vld [vmem:[%s1 + $0x20] sm:$0xff]
  %v126 = vld [vmem:[%s1 + $0x28] sm:$0xff]
  %v127 = vld [vmem:[%s1 + $0x30] sm:$0xff]
  %v128 = vld [vmem:[%s1 + $0x38] sm:$0xff]
  %v129 = vld [vmem:[%s1 + $0x40] sm:$0xff]
  %v130 = vld [vmem:[%s1 + $0x48] sm:$0xff]
  %v131 = vld [vmem:[%s1 + $0x50] sm:$0xff]
  %v132 = vld [vmem:[%s1 + $0x58] sm:$0xff]
  %v133 = vld [vmem:[%s1 + $0x60] sm:$0xff]
  %v134 = vld [vmem:[%s1 + $0x68] sm:$0xff]
  %v135 = vld [vmem:[%s1 + $0x70] sm:$0xff]
  %v136 = vld [vmem:[%s1 + $0x78] sm:$0xff]
  %v137 = vld [vmem:[%s1 + $0x80] sm:$0xff]
  %v138 = vld [vmem:[%s1 + $0x88] sm:$0xff]
  %v139 = vld [vmem:[%s2] sm:$0xff]
  %v140 = vld [vmem:[%s2 + $0x8] sm:$0xff]
  %v141 = vld [vmem:[%s2 + $0x10] sm:$0xff]
  %v142 = vld [vmem:[%s2 + $0x18] sm:$0xff]
  %v143 = vld [vmem:[%s2 + $0x20] sm:$0xff]
  %v144 = vld [vmem:[%s2 + $0x28] sm:$0xff]
  %v145 = vld [vmem:[%s2 + $0x30] sm:$0xff]
  %v146 = vld [vmem:[%s2 + $0x38] sm:$0xff]
  %v147 = vld [vmem:[%s2 + $0x40] sm:$0xff]
  %v148 = vld [vmem:[%s2 + $0x48] sm:$0xff]
  %v149 = vld [vmem:[%s2 + $0x50] sm:$0xff]
  %v150 = vld [vmem:[%s2 + $0x58] sm:$0xff]
  %v151 = vld [vmem:[%s2 + $0x60] sm:$0xff]
  %v152 = vld [vmem:[%s2 + $0x68] sm:$0xff]
  %v153 = vld [vmem:[%s2 + $0x70] sm:$0xff]
  %v154 = vld [vmem:[%s2 + $0x78] sm:$0xff]
  %v155 = vld [vmem:[%s2 + $0x80] sm:$0xff]
  %v156 = vld [vmem:[%s2 + $0x88] sm:$0xff]
  %v157 = vld [vmem:[%s0] sm:$0xff]
  %v158 = vld [vmem:[%s0 + $0x8] sm:$0xff]
  %v159 = vld [vmem:[%s0 + $0x10] sm:$0xff]
  %v160 = vld [vmem:[%s0 + $0x18] sm:$0xff]
  %v161 = vld [vmem:[%s0 + $0x20] sm:$0xff]
  %v162 = vld [vmem:[%s0 + $0x28] sm:$0xff]
  %v163 = vld [vmem:[%s0 + $0x30] sm:$0xff]
  %v164 = vld [vmem:[%s0 + $0x38] sm:$0xff]
  %v165 = vld [vmem:[%s0 + $0x40] sm:$0xff]
  %v166 = vld [vmem:[%s0 + $0x48] sm:$0xff]
  %v167 = vld [vmem:[%s0 + $0x50] sm:$0xff]
  %v168 = vld [vmem:[%s0 + $0x58] sm:$0xff]
  %v169 = vld [vmem:[%s0 + $0x60] sm:$0xff]
  %v170 = vld [vmem:[%s0 + $0x68] sm:$0xff]
  %v171 = vld [vmem:[%s0 + $0x70] sm:$0xff]
  %v172 = vld [vmem:[%s0 + $0x78] sm:$0xff]
  %v173 = vld [vmem:[%s0 + $0x80] sm:$0xff]
  %v174 = vld [vmem:[%s0 + $0x88] sm:$0xff]
  %v175 = vld [vmem:[%s0 + $0x90] sm:$0xff]
  %v176 = vld [vmem:[%s0 + $0x98] sm:$0xff]
  %v177 = vld [vmem:[%s0 + $0xa0] sm:$0xff]
  %v178 = vld [vmem:[%s0 + $0xa8] sm:$0xff]
  %v179 = vld [vmem:[%s0 + $0xb0] sm:$0xff]
  %v180 = vld [vmem:[%s0 + $0xb8] sm:$0xff]
  %v181 = vld [vmem:[%s0 + $0xc0] sm:$0xff]
  %v182 = vld [vmem:[%s0 + $0xc8] sm:$0xff]
  %v183 = vld [vmem:[%s0 + $0xd0] sm:$0xff]
  %v184 = vld [vmem:[%s0 + $0xd8] sm:$0xff]
  %v185 = vld [vmem:[%s0 + $0xe0] sm:$0xff]
  %v186 = vld [vmem:[%s0 + $0xe8] sm:$0xff]
  %v187 = vld [vmem:[%s0 + $0xf0] sm:$0xff]
  %v188 = vld [vmem:[%s0 + $0xf8] sm:$0xff]
  %v189 = vpack.c.bf16 %v158, %v157
  %v190 = vpack.c.bf16 %v160, %v159
  %v191 = vpack.c.bf16 %v162, %v161
  %v192 = vpack.c.bf16 %v164, %v163
  %v193 = vpack.c.bf16 %v166, %v165
  %v194 = vpack.c.bf16 %v168, %v167
  %v195 = vpack.c.bf16 %v170, %v169
  %v196 = vpack.c.bf16 %v172, %v171
  %v197 = vpack.c.bf16 %v174, %v173
  %v198 = vpack.c.bf16 %v176, %v175
  %v199 = vpack.c.bf16 %v178, %v177
  %v200 = vpack.c.bf16 %v180, %v179
  %v201 = vpack.c.bf16 %v182, %v181
  %v202 = vpack.c.bf16 %v184, %v183
  %v203 = vpack.c.bf16 %v186, %v185
  %v204 = vpack.c.bf16 %v188, %v187
  %v241 = vunpack.c.l.b16 %v21
  %v242 = vunpack.c.h.b16 %v21
  %v243 = vunpack.c.l.b16 %v22
  %v244 = vunpack.c.h.b16 %v22
  %v245 = vunpack.c.l.b16 %v23
  %v246 = vunpack.c.h.b16 %v23
  %v247 = vunpack.c.l.b16 %v24
  %v248 = vunpack.c.h.b16 %v24
  %v249 = vunpack.c.l.b16 %v25
  %v250 = vunpack.c.h.b16 %v25
  %v251 = vunpack.c.l.b16 %v26
  %v252 = vunpack.c.h.b16 %v26
  %v253 = vunpack.c.l.b16 %v27
  %v254 = vunpack.c.h.b16 %v27
  %v255 = vunpack.c.l.b16 %v28
  %v256 = vunpack.c.h.b16 %v28
  %v257 = vunpack.c.l.b16 %v29
  %v258 = vunpack.c.h.b16 %v29
  %v259 = vunpack.c.l.b16 %v30
  %v260 = vunpack.c.h.b16 %v30
  %v261 = vunpack.c.l.b16 %v31
  %v262 = vunpack.c.h.b16 %v31
  %v263 = vunpack.c.l.b16 %v32
  %v264 = vunpack.c.h.b16 %v32
  %v265 = vunpack.c.l.b16 %v33
  %v266 = vunpack.c.h.b16 %v33
  %v267 = vunpack.c.l.b16 %v34
  %v268 = vunpack.c.h.b16 %v34
  %v269 = vunpack.c.l.b16 %v35
  %v270 = vunpack.c.h.b16 %v35
  %v271 = vunpack.c.l.b16 %v36
  %v272 = vunpack.c.h.b16 %v36
  %v273 = vunpack.c.l.b16 %v37
  %v274 = vunpack.c.h.b16 %v37
  %v275 = vunpack.c.l.b16 %v38
  %v276 = vunpack.c.h.b16 %v38
  %v277 = vunpack.c.l.b16 %v39
  %v278 = vunpack.c.h.b16 %v39
  %v279 = vunpack.c.l.b16 %v40
  %v280 = vunpack.c.h.b16 %v40
  %v281 = vunpack.c.l.b16 %v41
  %v282 = vunpack.c.h.b16 %v41
  %v283 = vunpack.c.l.b16 %v42
  %v284 = vunpack.c.h.b16 %v42
  %v285 = vunpack.c.l.b16 %v43
  %v286 = vunpack.c.h.b16 %v43
  %v287 = vunpack.c.l.b16 %v44
  %v288 = vunpack.c.h.b16 %v44
  %v289 = vunpack.c.l.b16 %v45
  %v290 = vunpack.c.h.b16 %v45
  %v291 = vunpack.c.l.b16 %v46
  %v292 = vunpack.c.h.b16 %v46
  %v293 = vunpack.c.l.b16 %v47
  %v294 = vunpack.c.h.b16 %v47
  %v295 = vunpack.c.l.b16 %v48
  %v296 = vunpack.c.h.b16 %v48
  %v297 = vunpack.c.l.b16 %v49
  %v298 = vunpack.c.h.b16 %v49
  %v299 = vunpack.c.l.b16 %v50
  %v300 = vunpack.c.h.b16 %v50
  %v301 = vunpack.c.l.b16 %v51
  %v302 = vunpack.c.h.b16 %v51
  %v303 = vunpack.c.l.b16 %v52
  %v304 = vunpack.c.h.b16 %v52
  %v305 = vunpack.c.l.b16 %v53
  %v306 = vunpack.c.h.b16 %v53
  %v307 = vunpack.c.l.b16 %v54
  %v308 = vunpack.c.h.b16 %v54
  %v309 = vunpack.c.l.b16 %v55
  %v310 = vunpack.c.h.b16 %v55
  %v311 = vunpack.c.l.b16 %v56
  %v312 = vunpack.c.h.b16 %v56
  %v313 = vpack.c.b16 %v243, %v241
  %v314 = vpack.c.b16 %v244, %v242
  %v315 = vpack.c.b16 %v247, %v245
  %v316 = vpack.c.b16 %v248, %v246
  %v317 = vpack.c.b16 %v251, %v249
  %v318 = vpack.c.b16 %v252, %v250
  %v319 = vpack.c.b16 %v255, %v253
  %v320 = vpack.c.b16 %v256, %v254
  %v321 = vpack.c.b16 %v259, %v257
  %v322 = vpack.c.b16 %v260, %v258
  %v323 = vpack.c.b16 %v263, %v261
  %v324 = vpack.c.b16 %v264, %v262
  %v325 = vpack.c.b16 %v267, %v265
  %v326 = vpack.c.b16 %v268, %v266
  %v327 = vpack.c.b16 %v271, %v269
  %v328 = vpack.c.b16 %v272, %v270
  %v329 = vpack.c.b16 %v275, %v273
  %v330 = vpack.c.b16 %v276, %v274
  %v331 = vpack.c.b16 %v279, %v277
  %v332 = vpack.c.b16 %v280, %v278
  %v333 = vpack.c.b16 %v283, %v281
  %v334 = vpack.c.b16 %v284, %v282
  %v335 = vpack.c.b16 %v287, %v285
  %v336 = vpack.c.b16 %v288, %v286
  %v337 = vpack.c.b16 %v291, %v289
  %v338 = vpack.c.b16 %v292, %v290
  %v339 = vpack.c.b16 %v295, %v293
  %v340 = vpack.c.b16 %v296, %v294
  %v341 = vpack.c.b16 %v299, %v297
  %v342 = vpack.c.b16 %v300, %v298
  %v343 = vpack.c.b16 %v303, %v301
  %v344 = vpack.c.b16 %v304, %v302
  %v345 = vpack.c.b16 %v307, %v305
  %v346 = vpack.c.b16 %v308, %v306
  %v347 = vpack.c.b16 %v311, %v309
  %v348 = vpack.c.b16 %v312, %v310
  %385 = vmatprep.subr.bf16.mxu0 0
  %386 = vmatpush1.bf16.msra.mxu0 %v196
  %387 = vmatprep.subr.bf16.mxu0 0
  %388 = vmatpush1.bf16.msra.mxu0 %v195
  %389 = vmatprep.subr.bf16.mxu0 0
  %390 = vmatpush1.bf16.msra.mxu0 %v194
  %391 = vmatprep.subr.bf16.mxu0 0
  %392 = vmatpush1.bf16.msra.mxu0 %v193
  %393 = vmatprep.subr.bf16.mxu0 0
  %394 = vmatpush1.bf16.msra.mxu0 %v192
  %395 = vmatprep.subr.bf16.mxu0 0
  %396 = vmatpush1.bf16.msra.mxu0 %v191
  %397 = vmatprep.subr.bf16.mxu0 0
  %398 = vmatpush1.bf16.msra.mxu0 %v190
  %399 = vmatprep.subr.bf16.mxu0 0
  %400 = vmatpush1.bf16.msra.mxu0 %v189
  %401 = vmatprep.subr.bf16.mxu0 0
  %402 = vmatpush2.bf16.msra.mxu0 %v204
  %403 = vmatprep.subr.bf16.mxu0 0
  %404 = vmatpush2.bf16.msra.mxu0 %v203
  %405 = vmatprep.subr.bf16.mxu0 0
  %406 = vmatpush2.bf16.msra.mxu0 %v202
  %407 = vmatprep.subr.bf16.mxu0 0
  %408 = vmatpush2.bf16.msra.mxu0 %v201
  %409 = vmatprep.subr.bf16.mxu0 0
  %410 = vmatpush2.bf16.msra.mxu0 %v200
  %411 = vmatprep.subr.bf16.mxu0 0
  %412 = vmatpush2.bf16.msra.mxu0 %v199
  %413 = vmatprep.subr.bf16.mxu0 0
  %414 = vmatpush2.bf16.msra.mxu0 %v198
  %415 = vmatprep.subr.bf16.mxu0 0
  %416 = vmatpush2.bf16.msra.mxu0 %v197
  %417 = vmatprep.mubr.bf16.mxu0 %v314
  %418 = vmatmul.mubr.bf16.gmra.mxu0 %v313
  %v419 = vpop.f32.mrf.mxu0
  %v420 = vadd.f32 0.0, %v419
  %v421 = vpop.f32.mrf.mxu0
  %v422 = vpop.f32.mrf.mxu0
  %v423 = vadd.f32 0.0, %v422
  %v424 = vpop.f32.mrf.mxu0
  %425 = vmatprep.mubr.bf16.mxu0 %v316
  %426 = vmatmul.mubr.bf16.gmra.mxu0 %v315
  %v427 = vpop.f32.mrf.mxu0
  %v428 = vadd.f32 0.0, %v427
  %v429 = vpop.f32.mrf.mxu0
  %v430 = vpop.f32.mrf.mxu0
  %v431 = vadd.f32 0.0, %v430
  %v432 = vpop.f32.mrf.mxu0
  %433 = vmatprep.mubr.bf16.mxu0 %v318
  %434 = vmatmul.mubr.bf16.gmra.mxu0 %v317
  %v435 = vpop.f32.mrf.mxu0
  %v436 = vadd.f32 0.0, %v435
  %v437 = vpop.f32.mrf.mxu0
  %v438 = vpop.f32.mrf.mxu0
  %v439 = vadd.f32 0.0, %v438
  %v440 = vpop.f32.mrf.mxu0
  %441 = vmatprep.mubr.bf16.mxu0 %v320
  %442 = vmatmul.mubr.bf16.gmra.mxu0 %v319
  %v443 = vpop.f32.mrf.mxu0
  %v444 = vadd.f32 0.0, %v443
  %v445 = vpop.f32.mrf.mxu0
  %v446 = vpop.f32.mrf.mxu0
  %v447 = vadd.f32 0.0, %v446
  %v448 = vpop.f32.mrf.mxu0
  %449 = vmatprep.mubr.bf16.mxu0 %v322
  %450 = vmatmul.mubr.bf16.gmra.mxu0 %v321
  %v451 = vpop.f32.mrf.mxu0
  %v452 = vadd.f32 0.0, %v451
  %v453 = vpop.f32.mrf.mxu0
  %v454 = vpop.f32.mrf.mxu0
  %v455 = vadd.f32 0.0, %v454
  %v456 = vpop.f32.mrf.mxu0
  %457 = vmatprep.mubr.bf16.mxu0 %v324
  %458 = vmatmul.mubr.bf16.gmra.mxu0 %v323
  %v459 = vpop.f32.mrf.mxu0
  %v460 = vadd.f32 0.0, %v459
  %v461 = vpop.f32.mrf.mxu0
  %v462 = vpop.f32.mrf.mxu0
  %v463 = vadd.f32 0.0, %v462
  %v464 = vpop.f32.mrf.mxu0
  %465 = vmatprep.mubr.bf16.mxu0 %v326
  %466 = vmatmul.mubr.bf16.gmra.mxu0 %v325
  %v467 = vpop.f32.mrf.mxu0
  %v468 = vadd.f32 0.0, %v467
  %v469 = vpop.f32.mrf.mxu0
  %v470 = vpop.f32.mrf.mxu0
  %v471 = vadd.f32 0.0, %v470
  %v472 = vpop.f32.mrf.mxu0
  %473 = vmatprep.mubr.bf16.mxu0 %v328
  %474 = vmatmul.mubr.bf16.gmra.mxu0 %v327
  %v475 = vpop.f32.mrf.mxu0
  %v476 = vadd.f32 0.0, %v475
  %v477 = vpop.f32.mrf.mxu0
  %v478 = vpop.f32.mrf.mxu0
  %v479 = vadd.f32 0.0, %v478
  %v480 = vpop.f32.mrf.mxu0
  %481 = vmatprep.mubr.bf16.mxu0 %v330
  %482 = vmatmul.mubr.bf16.gmra.mxu0 %v329
  %v483 = vpop.f32.mrf.mxu0
  %v484 = vadd.f32 0.0, %v483
  %v485 = vpop.f32.mrf.mxu0
  %v486 = vpop.f32.mrf.mxu0
  %v487 = vadd.f32 0.0, %v486
  %v488 = vpop.f32.mrf.mxu0
  %489 = vmatprep.mubr.bf16.mxu0 %v332
  %490 = vmatmul.mubr.bf16.gmra.mxu0 %v331
  %v491 = vpop.f32.mrf.mxu0
  %v492 = vadd.f32 0.0, %v491
  %v493 = vpop.f32.mrf.mxu0
  %v494 = vpop.f32.mrf.mxu0
  %v495 = vadd.f32 0.0, %v494
  %v496 = vpop.f32.mrf.mxu0
  %497 = vmatprep.mubr.bf16.mxu0 %v334
  %498 = vmatmul.mubr.bf16.gmra.mxu0 %v333
  %v499 = vpop.f32.mrf.mxu0
  %v500 = vadd.f32 0.0, %v499
  %v501 = vpop.f32.mrf.mxu0
  %v502 = vpop.f32.mrf.mxu0
  %v503 = vadd.f32 0.0, %v502
  %v504 = vpop.f32.mrf.mxu0
  %505 = vmatprep.mubr.bf16.mxu0 %v336
  %506 = vmatmul.mubr.bf16.gmra.mxu0 %v335
  %v507 = vpop.f32.mrf.mxu0
  %v508 = vadd.f32 0.0, %v507
  %v509 = vpop.f32.mrf.mxu0
  %v510 = vpop.f32.mrf.mxu0
  %v511 = vadd.f32 0.0, %v510
  %v512 = vpop.f32.mrf.mxu0
  %513 = vmatprep.mubr.bf16.mxu0 %v338
  %514 = vmatmul.mubr.bf16.gmra.mxu0 %v337
  %v515 = vpop.f32.mrf.mxu0
  %v516 = vadd.f32 0.0, %v515
  %v517 = vpop.f32.mrf.mxu0
  %v518 = vpop.f32.mrf.mxu0
  %v519 = vadd.f32 0.0, %v518
  %v520 = vpop.f32.mrf.mxu0
  %521 = vmatprep.mubr.bf16.mxu0 %v340
  %522 = vmatmul.mubr.bf16.gmra.mxu0 %v339
  %v523 = vpop.f32.mrf.mxu0
  %v524 = vadd.f32 0.0, %v523
  %v525 = vpop.f32.mrf.mxu0
  %v526 = vpop.f32.mrf.mxu0
  %v527 = vadd.f32 0.0, %v526
  %v528 = vpop.f32.mrf.mxu0
  %529 = vmatprep.mubr.bf16.mxu0 %v342
  %530 = vmatmul.mubr.bf16.gmra.mxu0 %v341
  %v531 = vpop.f32.mrf.mxu0
  %v532 = vadd.f32 0.0, %v531
  %v533 = vpop.f32.mrf.mxu0
  %v534 = vpop.f32.mrf.mxu0
  %v535 = vadd.f32 0.0, %v534
  %v536 = vpop.f32.mrf.mxu0
  %537 = vmatprep.mubr.bf16.mxu0 %v344
  %538 = vmatmul.mubr.bf16.gmra.mxu0 %v343
  %v539 = vpop.f32.mrf.mxu0
  %v540 = vadd.f32 0.0, %v539
  %v541 = vpop.f32.mrf.mxu0
  %v542 = vpop.f32.mrf.mxu0
  %v543 = vadd.f32 0.0, %v542
  %v544 = vpop.f32.mrf.mxu0
  %545 = vmatprep.mubr.bf16.mxu0 %v346
  %546 = vmatmul.mubr.bf16.gmra.mxu0 %v345
  %v547 = vpop.f32.mrf.mxu0
  %v548 = vadd.f32 0.0, %v547
  %v549 = vpop.f32.mrf.mxu0
  %v550 = vpop.f32.mrf.mxu0
  %v551 = vadd.f32 0.0, %v550
  %v552 = vpop.f32.mrf.mxu0
  %553 = vmatprep.mubr.bf16.mxu0 %v348
  %554 = vmatmul.mubr.bf16.gmra.mxu0 %v347
  %v555 = vpop.f32.mrf.mxu0
  %v556 = vadd.f32 0.0, %v555
  %v557 = vpop.f32.mrf.mxu0
  %v558 = vpop.f32.mrf.mxu0
  %v559 = vadd.f32 0.0, %v558
  %v560 = vpop.f32.mrf.mxu0
  %561 = vdwg.mxu0
  %v562 = vmul.f32 %v420, %v121
  %v563 = vmul.f32 %v423, %v122
  %v564 = vmul.f32 %v428, %v123
  %v565 = vmul.f32 %v431, %v124
  %v566 = vmul.f32 %v436, %v125
  %v567 = vmul.f32 %v439, %v126
  %v568 = vmul.f32 %v444, %v127
  %v569 = vmul.f32 %v447, %v128
  %v570 = vmul.f32 %v452, %v129
  %v571 = vmul.f32 %v455, %v130
  %v572 = vmul.f32 %v460, %v131
  %v573 = vmul.f32 %v463, %v132
  %v574 = vmul.f32 %v468, %v133
  %v575 = vmul.f32 %v471, %v134
  %v576 = vmul.f32 %v476, %v135
  %v577 = vmul.f32 %v479, %v136
  %v578 = vmul.f32 %v484, %v137
  %v579 = vmul.f32 %v487, %v138
  %v580 = vmul.f32 %v492, %v139
  %v581 = vmul.f32 %v495, %v140
  %v582 = vmul.f32 %v500, %v141
  %v583 = vmul.f32 %v503, %v142
  %v584 = vmul.f32 %v508, %v143
  %v585 = vmul.f32 %v511, %v144
  %v586 = vmul.f32 %v516, %v145
  %v587 = vmul.f32 %v519, %v146
  %v588 = vmul.f32 %v524, %v147
  %v589 = vmul.f32 %v527, %v148
  %v590 = vmul.f32 %v532, %v149
  %v591 = vmul.f32 %v535, %v150
  %v592 = vmul.f32 %v540, %v151
  %v593 = vmul.f32 %v543, %v152
  %v594 = vmul.f32 %v548, %v153
  %v595 = vmul.f32 %v551, %v154
  %v596 = vmul.f32 %v556, %v155
  %v597 = vmul.f32 %v559, %v156
  %v598 = vsub.f32 %v562, %v580
  %v599 = vsub.f32 %v563, %v581
  %v600 = vsub.f32 %v564, %v582
  %v601 = vsub.f32 %v565, %v583
  %v602 = vsub.f32 %v566, %v584
  %v603 = vsub.f32 %v567, %v585
  %v604 = vsub.f32 %v568, %v586
  %v605 = vsub.f32 %v569, %v587
  %v606 = vsub.f32 %v570, %v588
  %v607 = vsub.f32 %v571, %v589
  %v608 = vsub.f32 %v572, %v590
  %v609 = vsub.f32 %v573, %v591
  %v610 = vsub.f32 %v574, %v592
  %v611 = vsub.f32 %v575, %v593
  %v612 = vsub.f32 %v576, %v594
  %v613 = vsub.f32 %v577, %v595
  %v614 = vsub.f32 %v578, %v596
  %v615 = vsub.f32 %v579, %v597
  %v616 = vpack.c.bf16 %v599, %v598
  %v617 = vpack.c.bf16 %v601, %v600
  %v618 = vpack.c.bf16 %v603, %v602
  %v619 = vpack.c.bf16 %v605, %v604
  %v620 = vpack.c.bf16 %v607, %v606
  %v621 = vpack.c.bf16 %v609, %v608
  %v622 = vpack.c.bf16 %v611, %v610
  %v623 = vpack.c.bf16 %v613, %v612
  %v624 = vpack.c.bf16 %v615, %v614
  %v625 = vmul.f32 %v420, %v139
  %v626 = vmul.f32 %v423, %v140
  %v627 = vmul.f32 %v428, %v141
  %v628 = vmul.f32 %v431, %v142
  %v629 = vmul.f32 %v436, %v143
  %v630 = vmul.f32 %v439, %v144
  %v631 = vmul.f32 %v444, %v145
  %v632 = vmul.f32 %v447, %v146
  %v633 = vmul.f32 %v452, %v147
  %v634 = vmul.f32 %v455, %v148
  %v635 = vmul.f32 %v460, %v149
  %v636 = vmul.f32 %v463, %v150
  %v637 = vmul.f32 %v468, %v151
  %v638 = vmul.f32 %v471, %v152
  %v639 = vmul.f32 %v476, %v153
  %v640 = vmul.f32 %v479, %v154
  %v641 = vmul.f32 %v484, %v155
  %v642 = vmul.f32 %v487, %v156
  %v643 = vmul.f32 %v492, %v121
  %v644 = vmul.f32 %v495, %v122
  %v645 = vmul.f32 %v500, %v123
  %v646 = vmul.f32 %v503, %v124
  %v647 = vmul.f32 %v508, %v125
  %v648 = vmul.f32 %v511, %v126
  %v649 = vmul.f32 %v516, %v127
  %v650 = vmul.f32 %v519, %v128
  %v651 = vmul.f32 %v524, %v129
  %v652 = vmul.f32 %v527, %v130
  %v653 = vmul.f32 %v532, %v131
  %v654 = vmul.f32 %v535, %v132
  %v655 = vmul.f32 %v540, %v133
  %v656 = vmul.f32 %v543, %v134
  %v657 = vmul.f32 %v548, %v135
  %v658 = vmul.f32 %v551, %v136
  %v659 = vmul.f32 %v556, %v137
  %v660 = vmul.f32 %v559, %v138
  %v661 = vadd.f32 %v625, %v643
  %v662 = vadd.f32 %v626, %v644
  %v663 = vadd.f32 %v627, %v645
  %v664 = vadd.f32 %v628, %v646
  %v665 = vadd.f32 %v629, %v647
  %v666 = vadd.f32 %v630, %v648
  %v667 = vadd.f32 %v631, %v649
  %v668 = vadd.f32 %v632, %v650
  %v669 = vadd.f32 %v633, %v651
  %v670 = vadd.f32 %v634, %v652
  %v671 = vadd.f32 %v635, %v653
  %v672 = vadd.f32 %v636, %v654
  %v673 = vadd.f32 %v637, %v655
  %v674 = vadd.f32 %v638, %v656
  %v675 = vadd.f32 %v639, %v657
  %v676 = vadd.f32 %v640, %v658
  %v677 = vadd.f32 %v641, %v659
  %v678 = vadd.f32 %v642, %v660
  %v679 = vpack.c.bf16 %v662, %v661
  %v680 = vpack.c.bf16 %v664, %v663
  %v681 = vpack.c.bf16 %v666, %v665
  %v682 = vpack.c.bf16 %v668, %v667
  %v683 = vpack.c.bf16 %v670, %v669
  %v684 = vpack.c.bf16 %v672, %v671
  %v685 = vpack.c.bf16 %v674, %v673
  %v686 = vpack.c.bf16 %v676, %v675
  %v687 = vpack.c.bf16 %v678, %v677
  %v752 = vunpack.c.l.b16 %v57
  %v753 = vunpack.c.h.b16 %v57
  %v754 = vunpack.c.l.b16 %v58
  %v755 = vunpack.c.l.b16 %v59
  %v756 = vunpack.c.h.b16 %v59
  %v757 = vunpack.c.l.b16 %v60
  %v758 = vunpack.c.l.b16 %v61
  %v759 = vunpack.c.h.b16 %v61
  %v760 = vunpack.c.l.b16 %v62
  %v761 = vunpack.c.l.b16 %v63
  %v762 = vunpack.c.h.b16 %v63
  %v763 = vunpack.c.l.b16 %v64
  %v764 = vunpack.c.l.b16 %v65
  %v765 = vunpack.c.h.b16 %v65
  %v766 = vunpack.c.l.b16 %v66
  %v767 = vunpack.c.l.b16 %v67
  %v768 = vunpack.c.h.b16 %v67
  %v769 = vunpack.c.l.b16 %v68
  %v770 = vunpack.c.l.b16 %v69
  %v771 = vunpack.c.h.b16 %v69
  %v772 = vunpack.c.l.b16 %v70
  %v773 = vunpack.c.l.b16 %v71
  %v774 = vunpack.c.h.b16 %v71
  %v775 = vunpack.c.l.b16 %v72
  %v776 = vunpack.c.l.b16 %v73
  %v777 = vunpack.c.h.b16 %v73
  %v778 = vunpack.c.l.b16 %v74
  %v779 = vunpack.c.l.b16 %v75
  %v780 = vunpack.c.h.b16 %v75
  %v781 = vunpack.c.l.b16 %v76
  %v782 = vunpack.c.l.b16 %v77
  %v783 = vunpack.c.h.b16 %v77
  %v784 = vunpack.c.l.b16 %v78
  %v785 = vunpack.c.l.b16 %v79
  %v786 = vunpack.c.h.b16 %v79
  %v787 = vunpack.c.l.b16 %v80
  %v788 = vunpack.c.l.b16 %v81
  %v789 = vunpack.c.h.b16 %v81
  %v790 = vunpack.c.l.b16 %v82
  %v791 = vunpack.c.l.b16 %v83
  %v792 = vunpack.c.h.b16 %v83
  %v793 = vunpack.c.l.b16 %v84
  %v794 = vunpack.c.l.b16 %v85
  %v795 = vunpack.c.h.b16 %v85
  %v796 = vunpack.c.l.b16 %v86
  %v797 = vunpack.c.l.b16 %v87
  %v798 = vunpack.c.h.b16 %v87
  %v799 = vunpack.c.l.b16 %v88
  %v800 = vunpack.c.l.b16 %v89
  %v801 = vunpack.c.h.b16 %v89
  %v802 = vunpack.c.l.b16 %v90
  %v803 = vunpack.c.l.b16 %v91
  %v804 = vunpack.c.h.b16 %v91
  %v805 = vunpack.c.l.b16 %v92
  %v806 = vunpack.c.l.b16 %v93
  %v807 = vunpack.c.h.b16 %v93
  %v808 = vunpack.c.l.b16 %v94
  %v809 = vunpack.c.l.b16 %v95
  %v810 = vunpack.c.h.b16 %v95
  %v811 = vunpack.c.l.b16 %v96
  %v812 = vunpack.c.l.b16 %v97
  %v813 = vunpack.c.h.b16 %v97
  %v814 = vunpack.c.l.b16 %v98
  %v815 = vunpack.c.l.b16 %v99
  %v816 = vunpack.c.h.b16 %v99
  %v817 = vunpack.c.l.b16 %v100
  %v818 = vunpack.c.l.b16 %v101
  %v819 = vunpack.c.h.b16 %v101
  %v820 = vunpack.c.l.b16 %v102
  %v821 = vunpack.c.l.b16 %v103
  %v822 = vunpack.c.h.b16 %v103
  %v823 = vunpack.c.l.b16 %v104
  %v824 = vunpack.c.l.b16 %v105
  %v825 = vunpack.c.h.b16 %v105
  %v826 = vunpack.c.l.b16 %v106
  %v827 = vunpack.c.l.b16 %v107
  %v828 = vunpack.c.h.b16 %v107
  %v829 = vunpack.c.l.b16 %v108
  %v830 = vunpack.c.l.b16 %v109
  %v831 = vunpack.c.h.b16 %v109
  %v832 = vunpack.c.l.b16 %v110
  %v833 = vunpack.c.l.b16 %v111
  %v834 = vunpack.c.h.b16 %v111
  %v835 = vunpack.c.l.b16 %v112
  %v836 = vunpack.c.l.b16 %v113
  %v837 = vunpack.c.h.b16 %v113
  %v838 = vunpack.c.l.b16 %v114
  %v839 = vunpack.c.l.b16 %v115
  %v840 = vunpack.c.h.b16 %v115
  %v841 = vunpack.c.l.b16 %v116
  %v842 = vunpack.c.l.b16 %v117
  %v843 = vunpack.c.h.b16 %v117
  %v844 = vunpack.c.l.b16 %v118
  %v845 = vunpack.c.l.b16 %v119
  %v846 = vunpack.c.h.b16 %v119
  %v847 = vunpack.c.l.b16 %v120
  %v848 = vpack.c.b16 %v755, %v752
  %v849 = vpack.c.b16 %v756, %v753
  %v850 = vpack.c.b16 %v757, %v754
  %v851 = vpack.c.b16 %v761, %v758
  %v852 = vpack.c.b16 %v762, %v759
  %v853 = vpack.c.b16 %v763, %v760
  %v854 = vpack.c.b16 %v767, %v764
  %v855 = vpack.c.b16 %v768, %v765
  %v856 = vpack.c.b16 %v769, %v766
  %v857 = vpack.c.b16 %v773, %v770
  %v858 = vpack.c.b16 %v774, %v771
  %v859 = vpack.c.b16 %v775, %v772
  %v860 = vpack.c.b16 %v779, %v776
  %v861 = vpack.c.b16 %v780, %v777
  %v862 = vpack.c.b16 %v781, %v778
  %v863 = vpack.c.b16 %v785, %v782
  %v864 = vpack.c.b16 %v786, %v783
  %v865 = vpack.c.b16 %v787, %v784
  %v866 = vpack.c.b16 %v791, %v788
  %v867 = vpack.c.b16 %v792, %v789
  %v868 = vpack.c.b16 %v793, %v790
  %v869 = vpack.c.b16 %v797, %v794
  %v870 = vpack.c.b16 %v798, %v795
  %v871 = vpack.c.b16 %v799, %v796
  %v872 = vpack.c.b16 %v803, %v800
  %v873 = vpack.c.b16 %v804, %v801
  %v874 = vpack.c.b16 %v805, %v802
  %v875 = vpack.c.b16 %v809, %v806
  %v876 = vpack.c.b16 %v810, %v807
  %v877 = vpack.c.b16 %v811, %v808
  %v878 = vpack.c.b16 %v815, %v812
  %v879 = vpack.c.b16 %v816, %v813
  %v880 = vpack.c.b16 %v817, %v814
  %v881 = vpack.c.b16 %v821, %v818
  %v882 = vpack.c.b16 %v822, %v819
  %v883 = vpack.c.b16 %v823, %v820
  %v884 = vpack.c.b16 %v827, %v824
  %v885 = vpack.c.b16 %v828, %v825
  %v886 = vpack.c.b16 %v829, %v826
  %v887 = vpack.c.b16 %v833, %v830
  %v888 = vpack.c.b16 %v834, %v831
  %v889 = vpack.c.b16 %v835, %v832
  %v890 = vpack.c.b16 %v839, %v836
  %v891 = vpack.c.b16 %v840, %v837
  %v892 = vpack.c.b16 %v841, %v838
  %v893 = vpack.c.b16 %v845, %v842
  %v894 = vpack.c.b16 %v846, %v843
  %v895 = vpack.c.b16 %v847, %v844
  %vm928 = vcmask 261120
  %v930 = vsel %vm928, %v850, 0
  %v933 = vsel %vm928, %v853, 0
  %v936 = vsel %vm928, %v856, 0
  %v939 = vsel %vm928, %v859, 0
  %v942 = vsel %vm928, %v862, 0
  %v945 = vsel %vm928, %v865, 0
  %v948 = vsel %vm928, %v868, 0
  %v951 = vsel %vm928, %v871, 0
  %v954 = vsel %vm928, %v874, 0
  %v957 = vsel %vm928, %v877, 0
  %v960 = vsel %vm928, %v880, 0
  %v963 = vsel %vm928, %v883, 0
  %v966 = vsel %vm928, %v886, 0
  %v969 = vsel %vm928, %v889, 0
  %v972 = vsel %vm928, %v892, 0
  %v975 = vsel %vm928, %v895, 0
  %977 = vmatprep.subr.bf16.mxu0 0
  %978 = vmatpush1.bf16.msra.mxu0 %v623
  %979 = vmatprep.subr.bf16.mxu0 0
  %980 = vmatpush1.bf16.msra.mxu0 %v622
  %981 = vmatprep.subr.bf16.mxu0 0
  %982 = vmatpush1.bf16.msra.mxu0 %v621
  %983 = vmatprep.subr.bf16.mxu0 0
  %984 = vmatpush1.bf16.msra.mxu0 %v620
  %985 = vmatprep.subr.bf16.mxu0 0
  %986 = vmatpush1.bf16.msra.mxu0 %v619
  %987 = vmatprep.subr.bf16.mxu0 0
  %988 = vmatpush1.bf16.msra.mxu0 %v618
  %989 = vmatprep.subr.bf16.mxu0 0
  %990 = vmatpush1.bf16.msra.mxu0 %v617
  %991 = vmatprep.subr.bf16.mxu0 0
  %992 = vmatpush1.bf16.msra.mxu0 %v616
  %993 = vmatprep.subr.bf16.mxu0 0
  %994 = vmatpush2.bf16.msra.mxu0 %v685
  %995 = vmatprep.subr.bf16.mxu0 0
  %996 = vmatpush2.bf16.msra.mxu0 %v684
  %997 = vmatprep.subr.bf16.mxu0 0
  %998 = vmatpush2.bf16.msra.mxu0 %v683
  %999 = vmatprep.subr.bf16.mxu0 0
  %1000 = vmatpush2.bf16.msra.mxu0 %v682
  %1001 = vmatprep.subr.bf16.mxu0 0
  %1002 = vmatpush2.bf16.msra.mxu0 %v681
  %1003 = vmatprep.subr.bf16.mxu0 0
  %1004 = vmatpush2.bf16.msra.mxu0 %v680
  %1005 = vmatprep.subr.bf16.mxu0 0
  %1006 = vmatpush2.bf16.msra.mxu0 %v679
  %1007 = vmatprep.subr.bf16.mxu0 0
  %1008 = vmatpush2.bf16.msra.mxu0 %v624
  %1009 = vmatprep.mubr.bf16.mxu0 %v849
  %1010 = vmatmul.mubr.bf16.gmra.mxu0 %v848
  %v1011 = vpop.f32.mrf.mxu0
  %v1012 = vadd.f32 0.0, %v1011
  %v1013 = vpop.f32.mrf.mxu0
  %v1014 = vpop.f32.mrf.mxu0
  %v1015 = vadd.f32 0.0, %v1014
  %v1016 = vpop.f32.mrf.mxu0
  %1017 = vmatprep.mubr.bf16.mxu0 %v852
  %1018 = vmatmul.mubr.bf16.gmra.mxu0 %v851
  %v1019 = vpop.f32.mrf.mxu0
  %v1020 = vadd.f32 0.0, %v1019
  %v1021 = vpop.f32.mrf.mxu0
  %v1022 = vpop.f32.mrf.mxu0
  %v1023 = vadd.f32 0.0, %v1022
  %v1024 = vpop.f32.mrf.mxu0
  %1025 = vmatprep.mubr.bf16.mxu0 %v855
  %1026 = vmatmul.mubr.bf16.gmra.mxu0 %v854
  %v1027 = vpop.f32.mrf.mxu0
  %v1028 = vadd.f32 0.0, %v1027
  %v1029 = vpop.f32.mrf.mxu0
  %v1030 = vpop.f32.mrf.mxu0
  %v1031 = vadd.f32 0.0, %v1030
  %v1032 = vpop.f32.mrf.mxu0
  %1033 = vmatprep.mubr.bf16.mxu0 %v858
  %1034 = vmatmul.mubr.bf16.gmra.mxu0 %v857
  %v1035 = vpop.f32.mrf.mxu0
  %v1036 = vadd.f32 0.0, %v1035
  %v1037 = vpop.f32.mrf.mxu0
  %v1038 = vpop.f32.mrf.mxu0
  %v1039 = vadd.f32 0.0, %v1038
  %v1040 = vpop.f32.mrf.mxu0
  %1041 = vmatprep.mubr.bf16.mxu0 %v861
  %1042 = vmatmul.mubr.bf16.gmra.mxu0 %v860
  %v1043 = vpop.f32.mrf.mxu0
  %v1044 = vadd.f32 0.0, %v1043
  %v1045 = vpop.f32.mrf.mxu0
  %v1046 = vpop.f32.mrf.mxu0
  %v1047 = vadd.f32 0.0, %v1046
  %v1048 = vpop.f32.mrf.mxu0
  %1049 = vmatprep.mubr.bf16.mxu0 %v864
  %1050 = vmatmul.mubr.bf16.gmra.mxu0 %v863
  %v1051 = vpop.f32.mrf.mxu0
  %v1052 = vadd.f32 0.0, %v1051
  %v1053 = vpop.f32.mrf.mxu0
  %v1054 = vpop.f32.mrf.mxu0
  %v1055 = vadd.f32 0.0, %v1054
  %v1056 = vpop.f32.mrf.mxu0
  %1057 = vmatprep.mubr.bf16.mxu0 %v867
  %1058 = vmatmul.mubr.bf16.gmra.mxu0 %v866
  %v1059 = vpop.f32.mrf.mxu0
  %v1060 = vadd.f32 0.0, %v1059
  %v1061 = vpop.f32.mrf.mxu0
  %v1062 = vpop.f32.mrf.mxu0
  %v1063 = vadd.f32 0.0, %v1062
  %v1064 = vpop.f32.mrf.mxu0
  %1065 = vmatprep.mubr.bf16.mxu0 %v870
  %1066 = vmatmul.mubr.bf16.gmra.mxu0 %v869
  %v1067 = vpop.f32.mrf.mxu0
  %v1068 = vadd.f32 0.0, %v1067
  %v1069 = vpop.f32.mrf.mxu0
  %v1070 = vpop.f32.mrf.mxu0
  %v1071 = vadd.f32 0.0, %v1070
  %v1072 = vpop.f32.mrf.mxu0
  %1073 = vmatprep.mubr.bf16.mxu0 %v873
  %1074 = vmatmul.mubr.bf16.gmra.mxu0 %v872
  %v1075 = vpop.f32.mrf.mxu0
  %v1076 = vadd.f32 0.0, %v1075
  %v1077 = vpop.f32.mrf.mxu0
  %v1078 = vpop.f32.mrf.mxu0
  %v1079 = vadd.f32 0.0, %v1078
  %v1080 = vpop.f32.mrf.mxu0
  %1081 = vmatprep.mubr.bf16.mxu0 %v876
  %1082 = vmatmul.mubr.bf16.gmra.mxu0 %v875
  %v1083 = vpop.f32.mrf.mxu0
  %v1084 = vadd.f32 0.0, %v1083
  %v1085 = vpop.f32.mrf.mxu0
  %v1086 = vpop.f32.mrf.mxu0
  %v1087 = vadd.f32 0.0, %v1086
  %v1088 = vpop.f32.mrf.mxu0
  %1089 = vmatprep.mubr.bf16.mxu0 %v879
  %1090 = vmatmul.mubr.bf16.gmra.mxu0 %v878
  %v1091 = vpop.f32.mrf.mxu0
  %v1092 = vadd.f32 0.0, %v1091
  %v1093 = vpop.f32.mrf.mxu0
  %v1094 = vpop.f32.mrf.mxu0
  %v1095 = vadd.f32 0.0, %v1094
  %v1096 = vpop.f32.mrf.mxu0
  %1097 = vmatprep.mubr.bf16.mxu0 %v882
  %1098 = vmatmul.mubr.bf16.gmra.mxu0 %v881
  %v1099 = vpop.f32.mrf.mxu0
  %v1100 = vadd.f32 0.0, %v1099
  %v1101 = vpop.f32.mrf.mxu0
  %v1102 = vpop.f32.mrf.mxu0
  %v1103 = vadd.f32 0.0, %v1102
  %v1104 = vpop.f32.mrf.mxu0
  %1105 = vmatprep.mubr.bf16.mxu0 %v885
  %1106 = vmatmul.mubr.bf16.gmra.mxu0 %v884
  %v1107 = vpop.f32.mrf.mxu0
  %v1108 = vadd.f32 0.0, %v1107
  %v1109 = vpop.f32.mrf.mxu0
  %v1110 = vpop.f32.mrf.mxu0
  %v1111 = vadd.f32 0.0, %v1110
  %v1112 = vpop.f32.mrf.mxu0
  %1113 = vmatprep.mubr.bf16.mxu0 %v888
  %1114 = vmatmul.mubr.bf16.gmra.mxu0 %v887
  %v1115 = vpop.f32.mrf.mxu0
  %v1116 = vadd.f32 0.0, %v1115
  %v1117 = vpop.f32.mrf.mxu0
  %v1118 = vpop.f32.mrf.mxu0
  %v1119 = vadd.f32 0.0, %v1118
  %v1120 = vpop.f32.mrf.mxu0
  %1121 = vmatprep.mubr.bf16.mxu0 %v891
  %1122 = vmatmul.mubr.bf16.gmra.mxu0 %v890
  %v1123 = vpop.f32.mrf.mxu0
  %v1124 = vadd.f32 0.0, %v1123
  %v1125 = vpop.f32.mrf.mxu0
  %v1126 = vpop.f32.mrf.mxu0
  %v1127 = vadd.f32 0.0, %v1126
  %v1128 = vpop.f32.mrf.mxu0
  %1129 = vmatprep.mubr.bf16.mxu0 %v894
  %1130 = vmatmul.mubr.bf16.gmra.mxu0 %v893
  %v1131 = vpop.f32.mrf.mxu0
  %v1132 = vadd.f32 0.0, %v1131
  %v1133 = vpop.f32.mrf.mxu0
  %v1134 = vpop.f32.mrf.mxu0
  %v1135 = vadd.f32 0.0, %v1134
  %v1136 = vpop.f32.mrf.mxu0
  %1137 = vdwg.mxu0
  %1138 = vmatprep.subr.bf16.mxu0 0
  %1139 = vmatpush1.bf16.msra.mxu0 0
  %1140 = vmatprep.subr.bf16.mxu0 0
  %1141 = vmatpush1.bf16.msra.mxu0 0
  %1142 = vmatprep.subr.bf16.mxu0 0
  %1143 = vmatpush1.bf16.msra.mxu0 0
  %1144 = vmatprep.subr.bf16.mxu0 0
  %1145 = vmatpush1.bf16.msra.mxu0 0
  %1146 = vmatprep.subr.bf16.mxu0 0
  %1147 = vmatpush1.bf16.msra.mxu0 0
  %1148 = vmatprep.subr.bf16.mxu0 0
  %1149 = vmatpush1.bf16.msra.mxu0 0
  %1150 = vmatprep.subr.bf16.mxu0 0
  %1151 = vmatpush1.bf16.msra.mxu0 %v687
  %1152 = vmatprep.subr.bf16.mxu0 0
  %1153 = vmatpush1.bf16.msra.mxu0 %v686
  %1154 = vmatprep.subr.bf16.mxu0 0
  %1155 = vmatpush2.bf16.msra.mxu0 0
  %1156 = vmatprep.subr.bf16.mxu0 0
  %1157 = vmatpush2.bf16.msra.mxu0 0
  %1158 = vmatprep.subr.bf16.mxu0 0
  %1159 = vmatpush2.bf16.msra.mxu0 0
  %1160 = vmatprep.subr.bf16.mxu0 0
  %1161 = vmatpush2.bf16.msra.mxu0 0
  %1162 = vmatprep.subr.bf16.mxu0 0
  %1163 = vmatpush2.bf16.msra.mxu0 0
  %1164 = vmatprep.subr.bf16.mxu0 0
  %1165 = vmatpush2.bf16.msra.mxu0 0
  %1166 = vmatprep.subr.bf16.mxu0 0
  %1167 = vmatpush2.bf16.msra.mxu0 0
  %1168 = vmatprep.subr.bf16.mxu0 0
  %1169 = vmatpush2.bf16.msra.mxu0 0
  %1170 = vmatprep.mubr.bf16.mxu0 0
  %1171 = vmatmul.mubr.bf16.gmra.mxu0 %v930
  %v1172 = vpop.f32.mrf.mxu0
  %v1173 = vadd.f32 %v1012, %v1172
  %v1174 = vpop.f32.mrf.mxu0
  %v1175 = vpop.f32.mrf.mxu0
  %v1176 = vadd.f32 %v1015, %v1175
  %v1177 = vpop.f32.mrf.mxu0
  %1178 = vmatprep.mubr.bf16.mxu0 0
  %1179 = vmatmul.mubr.bf16.gmra.mxu0 %v933
  %v1180 = vpop.f32.mrf.mxu0
  %v1181 = vadd.f32 %v1020, %v1180
  %v1182 = vpop.f32.mrf.mxu0
  %v1183 = vpop.f32.mrf.mxu0
  %v1184 = vadd.f32 %v1023, %v1183
  %v1185 = vpop.f32.mrf.mxu0
  %1186 = vmatprep.mubr.bf16.mxu0 0
  %1187 = vmatmul.mubr.bf16.gmra.mxu0 %v936
  %v1188 = vpop.f32.mrf.mxu0
  %v1189 = vadd.f32 %v1028, %v1188
  %v1190 = vpop.f32.mrf.mxu0
  %v1191 = vpop.f32.mrf.mxu0
  %v1192 = vadd.f32 %v1031, %v1191
  %v1193 = vpop.f32.mrf.mxu0
  %1194 = vmatprep.mubr.bf16.mxu0 0
  %1195 = vmatmul.mubr.bf16.gmra.mxu0 %v939
  %v1196 = vpop.f32.mrf.mxu0
  %v1197 = vadd.f32 %v1036, %v1196
  %v1198 = vpop.f32.mrf.mxu0
  %v1199 = vpop.f32.mrf.mxu0
  %v1200 = vadd.f32 %v1039, %v1199
  %v1201 = vpop.f32.mrf.mxu0
  %1202 = vmatprep.mubr.bf16.mxu0 0
  %1203 = vmatmul.mubr.bf16.gmra.mxu0 %v942
  %v1204 = vpop.f32.mrf.mxu0
  %v1205 = vadd.f32 %v1044, %v1204
  %v1206 = vpop.f32.mrf.mxu0
  %v1207 = vpop.f32.mrf.mxu0
  %v1208 = vadd.f32 %v1047, %v1207
  %v1209 = vpop.f32.mrf.mxu0
  %1210 = vmatprep.mubr.bf16.mxu0 0
  %1211 = vmatmul.mubr.bf16.gmra.mxu0 %v945
  %v1212 = vpop.f32.mrf.mxu0
  %v1213 = vadd.f32 %v1052, %v1212
  %v1214 = vpop.f32.mrf.mxu0
  %v1215 = vpop.f32.mrf.mxu0
  %v1216 = vadd.f32 %v1055, %v1215
  %v1217 = vpop.f32.mrf.mxu0
  %1218 = vmatprep.mubr.bf16.mxu0 0
  %1219 = vmatmul.mubr.bf16.gmra.mxu0 %v948
  %v1220 = vpop.f32.mrf.mxu0
  %v1221 = vadd.f32 %v1060, %v1220
  %v1222 = vpop.f32.mrf.mxu0
  %v1223 = vpop.f32.mrf.mxu0
  %v1224 = vadd.f32 %v1063, %v1223
  %v1225 = vpop.f32.mrf.mxu0
  %1226 = vmatprep.mubr.bf16.mxu0 0
  %1227 = vmatmul.mubr.bf16.gmra.mxu0 %v951
  %v1228 = vpop.f32.mrf.mxu0
  %v1229 = vadd.f32 %v1068, %v1228
  %v1230 = vpop.f32.mrf.mxu0
  %v1231 = vpop.f32.mrf.mxu0
  %v1232 = vadd.f32 %v1071, %v1231
  %v1233 = vpop.f32.mrf.mxu0
  %1234 = vmatprep.mubr.bf16.mxu0 0
  %1235 = vmatmul.mubr.bf16.gmra.mxu0 %v954
  %v1236 = vpop.f32.mrf.mxu0
  %v1237 = vadd.f32 %v1076, %v1236
  %v1238 = vpop.f32.mrf.mxu0
  %v1239 = vpop.f32.mrf.mxu0
  %v1240 = vadd.f32 %v1079, %v1239
  %v1241 = vpop.f32.mrf.mxu0
  %1242 = vmatprep.mubr.bf16.mxu0 0
  %1243 = vmatmul.mubr.bf16.gmra.mxu0 %v957
  %v1244 = vpop.f32.mrf.mxu0
  %v1245 = vadd.f32 %v1084, %v1244
  %v1246 = vpop.f32.mrf.mxu0
  %v1247 = vpop.f32.mrf.mxu0
  %v1248 = vadd.f32 %v1087, %v1247
  %v1249 = vpop.f32.mrf.mxu0
  %1250 = vmatprep.mubr.bf16.mxu0 0
  %1251 = vmatmul.mubr.bf16.gmra.mxu0 %v960
  %v1252 = vpop.f32.mrf.mxu0
  %v1253 = vadd.f32 %v1092, %v1252
  %v1254 = vpop.f32.mrf.mxu0
  %v1255 = vpop.f32.mrf.mxu0
  %v1256 = vadd.f32 %v1095, %v1255
  %v1257 = vpop.f32.mrf.mxu0
  %1258 = vmatprep.mubr.bf16.mxu0 0
  %1259 = vmatmul.mubr.bf16.gmra.mxu0 %v963
  %v1260 = vpop.f32.mrf.mxu0
  %v1261 = vadd.f32 %v1100, %v1260
  %v1262 = vpop.f32.mrf.mxu0
  %v1263 = vpop.f32.mrf.mxu0
  %v1264 = vadd.f32 %v1103, %v1263
  %v1265 = vpop.f32.mrf.mxu0
  %1266 = vmatprep.mubr.bf16.mxu0 0
  %1267 = vmatmul.mubr.bf16.gmra.mxu0 %v966
  %v1268 = vpop.f32.mrf.mxu0
  %v1269 = vadd.f32 %v1108, %v1268
  %v1270 = vpop.f32.mrf.mxu0
  %v1271 = vpop.f32.mrf.mxu0
  %v1272 = vadd.f32 %v1111, %v1271
  %v1273 = vpop.f32.mrf.mxu0
  %1274 = vmatprep.mubr.bf16.mxu0 0
  %1275 = vmatmul.mubr.bf16.gmra.mxu0 %v969
  %v1276 = vpop.f32.mrf.mxu0
  %v1277 = vadd.f32 %v1116, %v1276
  %v1278 = vpop.f32.mrf.mxu0
  %v1279 = vpop.f32.mrf.mxu0
  %v1280 = vadd.f32 %v1119, %v1279
  %v1281 = vpop.f32.mrf.mxu0
  %1282 = vmatprep.mubr.bf16.mxu0 0
  %1283 = vmatmul.mubr.bf16.gmra.mxu0 %v972
  %v1284 = vpop.f32.mrf.mxu0
  %v1285 = vadd.f32 %v1124, %v1284
  %v1286 = vpop.f32.mrf.mxu0
  %v1287 = vpop.f32.mrf.mxu0
  %v1288 = vadd.f32 %v1127, %v1287
  %v1289 = vpop.f32.mrf.mxu0
  %1290 = vmatprep.mubr.bf16.mxu0 0
  %1291 = vmatmul.mubr.bf16.gmra.mxu0 %v975
  %v1292 = vpop.f32.mrf.mxu0
  %v1293 = vadd.f32 %v1132, %v1292
  %v1294 = vpop.f32.mrf.mxu0
  %v1295 = vpop.f32.mrf.mxu0
  %v1296 = vadd.f32 %v1135, %v1295
  %v1297 = vpop.f32.mrf.mxu0
  %1298 = vdwg.mxu0
  %vm1299 = vcmask 31744
  %1300 = vst.msk [vmem:[%s5] sm:$0xff] %vm1299, %v1173
  %1301 = vst.msk [vmem:[%s5 + $0x8] sm:$0xff] %vm1299, %v1176
  %1302 = vst.msk [vmem:[%s5 + $0x10] sm:$0xff] %vm1299, %v1181
  %1303 = vst.msk [vmem:[%s5 + $0x18] sm:$0xff] %vm1299, %v1184
  %1304 = vst.msk [vmem:[%s5 + $0x20] sm:$0xff] %vm1299, %v1189
  %1305 = vst.msk [vmem:[%s5 + $0x28] sm:$0xff] %vm1299, %v1192
  %1306 = vst.msk [vmem:[%s5 + $0x30] sm:$0xff] %vm1299, %v1197
  %1307 = vst.msk [vmem:[%s5 + $0x38] sm:$0xff] %vm1299, %v1200
  %1308 = vst.msk [vmem:[%s5 + $0x40] sm:$0xff] %vm1299, %v1205
  %1309 = vst.msk [vmem:[%s5 + $0x48] sm:$0xff] %vm1299, %v1208
  %1310 = vst.msk [vmem:[%s5 + $0x50] sm:$0xff] %vm1299, %v1213
  %1311 = vst.msk [vmem:[%s5 + $0x58] sm:$0xff] %vm1299, %v1216
  %1312 = vst.msk [vmem:[%s5 + $0x60] sm:$0xff] %vm1299, %v1221
  %1313 = vst.msk [vmem:[%s5 + $0x68] sm:$0xff] %vm1299, %v1224
  %1314 = vst.msk [vmem:[%s5 + $0x70] sm:$0xff] %vm1299, %v1229
  %1315 = vst.msk [vmem:[%s5 + $0x78] sm:$0xff] %vm1299, %v1232
  %1316 = vst.msk [vmem:[%s5 + $0x80] sm:$0xff] %vm1299, %v1237
  %1317 = vst.msk [vmem:[%s5 + $0x88] sm:$0xff] %vm1299, %v1240
  %1318 = vst.msk [vmem:[%s5 + $0x90] sm:$0xff] %vm1299, %v1245
  %1319 = vst.msk [vmem:[%s5 + $0x98] sm:$0xff] %vm1299, %v1248
  %1320 = vst.msk [vmem:[%s5 + $0xa0] sm:$0xff] %vm1299, %v1253
  %1321 = vst.msk [vmem:[%s5 + $0xa8] sm:$0xff] %vm1299, %v1256
  %1322 = vst.msk [vmem:[%s5 + $0xb0] sm:$0xff] %vm1299, %v1261
  %1323 = vst.msk [vmem:[%s5 + $0xb8] sm:$0xff] %vm1299, %v1264
  %1324 = vst.msk [vmem:[%s5 + $0xc0] sm:$0xff] %vm1299, %v1269
  %1325 = vst.msk [vmem:[%s5 + $0xc8] sm:$0xff] %vm1299, %v1272
  %1326 = vst.msk [vmem:[%s5 + $0xd0] sm:$0xff] %vm1299, %v1277
  %1327 = vst.msk [vmem:[%s5 + $0xd8] sm:$0xff] %vm1299, %v1280
  %1328 = vst.msk [vmem:[%s5 + $0xe0] sm:$0xff] %vm1299, %v1285
  %1329 = vst.msk [vmem:[%s5 + $0xe8] sm:$0xff] %vm1299, %v1288
  %1330 = vst.msk [vmem:[%s5 + $0xf0] sm:$0xff] %vm1299, %v1293
  %1331 = vst.msk [vmem:[%s5 + $0xf8] sm:$0xff] %vm1299, %v1296
  %s1332 = scalar_lea.vmem %s0, 256
  %v1333 = vld [vmem:[%s1332] sm:$0xff]
  %v1334 = vld [vmem:[%s1332 + $0x8] sm:$0xff]
  %v1335 = vld [vmem:[%s1332 + $0x10] sm:$0xff]
  %v1336 = vld [vmem:[%s1332 + $0x18] sm:$0xff]
  %v1337 = vld [vmem:[%s1332 + $0x20] sm:$0xff]
  %v1338 = vld [vmem:[%s1332 + $0x28] sm:$0xff]
  %v1339 = vld [vmem:[%s1332 + $0x30] sm:$0xff]
  %v1340 = vld [vmem:[%s1332 + $0x38] sm:$0xff]
  %v1341 = vld [vmem:[%s1332 + $0x40] sm:$0xff]
  %v1342 = vld [vmem:[%s1332 + $0x48] sm:$0xff]
  %v1343 = vld [vmem:[%s1332 + $0x50] sm:$0xff]
  %v1344 = vld [vmem:[%s1332 + $0x58] sm:$0xff]
  %v1345 = vld [vmem:[%s1332 + $0x60] sm:$0xff]
  %v1346 = vld [vmem:[%s1332 + $0x68] sm:$0xff]
  %v1347 = vld [vmem:[%s1332 + $0x70] sm:$0xff]
  %v1348 = vld [vmem:[%s1332 + $0x78] sm:$0xff]
  %v1349 = vld [vmem:[%s1332 + $0x80] sm:$0xff]
  %v1350 = vld [vmem:[%s1332 + $0x88] sm:$0xff]
  %v1351 = vld [vmem:[%s1332 + $0x90] sm:$0xff]
  %v1352 = vld [vmem:[%s1332 + $0x98] sm:$0xff]
  %v1353 = vld [vmem:[%s1332 + $0xa0] sm:$0xff]
  %v1354 = vld [vmem:[%s1332 + $0xa8] sm:$0xff]
  %v1355 = vld [vmem:[%s1332 + $0xb0] sm:$0xff]
  %v1356 = vld [vmem:[%s1332 + $0xb8] sm:$0xff]
  %v1357 = vld [vmem:[%s1332 + $0xc0] sm:$0xff]
  %v1358 = vld [vmem:[%s1332 + $0xc8] sm:$0xff]
  %v1359 = vld [vmem:[%s1332 + $0xd0] sm:$0xff]
  %v1360 = vld [vmem:[%s1332 + $0xd8] sm:$0xff]
  %v1361 = vld [vmem:[%s1332 + $0xe0] sm:$0xff]
  %v1362 = vld [vmem:[%s1332 + $0xe8] sm:$0xff]
  %v1363 = vld [vmem:[%s1332 + $0xf0] sm:$0xff]
  %v1364 = vld [vmem:[%s1332 + $0xf8] sm:$0xff]
  %v1365 = vpack.c.bf16 %v1334, %v1333
  %v1366 = vpack.c.bf16 %v1336, %v1335
  %v1367 = vpack.c.bf16 %v1338, %v1337
  %v1368 = vpack.c.bf16 %v1340, %v1339
  %v1369 = vpack.c.bf16 %v1342, %v1341
  %v1370 = vpack.c.bf16 %v1344, %v1343
  %v1371 = vpack.c.bf16 %v1346, %v1345
  %v1372 = vpack.c.bf16 %v1348, %v1347
  %v1373 = vpack.c.bf16 %v1350, %v1349
  %v1374 = vpack.c.bf16 %v1352, %v1351
  %v1375 = vpack.c.bf16 %v1354, %v1353
  %v1376 = vpack.c.bf16 %v1356, %v1355
  %v1377 = vpack.c.bf16 %v1358, %v1357
  %v1378 = vpack.c.bf16 %v1360, %v1359
  %v1379 = vpack.c.bf16 %v1362, %v1361
  %v1380 = vpack.c.bf16 %v1364, %v1363
  %1381 = vmatprep.subr.bf16.mxu0 0
  %1382 = vmatpush1.bf16.msra.mxu0 %v1372
  %1383 = vmatprep.subr.bf16.mxu0 0
  %1384 = vmatpush1.bf16.msra.mxu0 %v1371
  %1385 = vmatprep.subr.bf16.mxu0 0
  %1386 = vmatpush1.bf16.msra.mxu0 %v1370
  %1387 = vmatprep.subr.bf16.mxu0 0
  %1388 = vmatpush1.bf16.msra.mxu0 %v1369
  %1389 = vmatprep.subr.bf16.mxu0 0
  %1390 = vmatpush1.bf16.msra.mxu0 %v1368
  %1391 = vmatprep.subr.bf16.mxu0 0
  %1392 = vmatpush1.bf16.msra.mxu0 %v1367
  %1393 = vmatprep.subr.bf16.mxu0 0
  %1394 = vmatpush1.bf16.msra.mxu0 %v1366
  %1395 = vmatprep.subr.bf16.mxu0 0
  %1396 = vmatpush1.bf16.msra.mxu0 %v1365
  %1397 = vmatprep.subr.bf16.mxu0 0
  %1398 = vmatpush2.bf16.msra.mxu0 %v1380
  %1399 = vmatprep.subr.bf16.mxu0 0
  %1400 = vmatpush2.bf16.msra.mxu0 %v1379
  %1401 = vmatprep.subr.bf16.mxu0 0
  %1402 = vmatpush2.bf16.msra.mxu0 %v1378
  %1403 = vmatprep.subr.bf16.mxu0 0
  %1404 = vmatpush2.bf16.msra.mxu0 %v1377
  %1405 = vmatprep.subr.bf16.mxu0 0
  %1406 = vmatpush2.bf16.msra.mxu0 %v1376
  %1407 = vmatprep.subr.bf16.mxu0 0
  %1408 = vmatpush2.bf16.msra.mxu0 %v1375
  %1409 = vmatprep.subr.bf16.mxu0 0
  %1410 = vmatpush2.bf16.msra.mxu0 %v1374
  %1411 = vmatprep.subr.bf16.mxu0 0
  %1412 = vmatpush2.bf16.msra.mxu0 %v1373
  %1413 = vmatprep.mubr.bf16.mxu0 %v314
  %1414 = vmatmul.mubr.bf16.gmra.mxu0 %v313
  %v1415 = vpop.f32.mrf.mxu0
  %v1416 = vadd.f32 0.0, %v1415
  %v1417 = vpop.f32.mrf.mxu0
  %v1418 = vpop.f32.mrf.mxu0
  %v1419 = vadd.f32 0.0, %v1418
  %v1420 = vpop.f32.mrf.mxu0
  %1421 = vmatprep.mubr.bf16.mxu0 %v316
  %1422 = vmatmul.mubr.bf16.gmra.mxu0 %v315
  %v1423 = vpop.f32.mrf.mxu0
  %v1424 = vadd.f32 0.0, %v1423
  %v1425 = vpop.f32.mrf.mxu0
  %v1426 = vpop.f32.mrf.mxu0
  %v1427 = vadd.f32 0.0, %v1426
  %v1428 = vpop.f32.mrf.mxu0
  %1429 = vmatprep.mubr.bf16.mxu0 %v318
  %1430 = vmatmul.mubr.bf16.gmra.mxu0 %v317
  %v1431 = vpop.f32.mrf.mxu0
  %v1432 = vadd.f32 0.0, %v1431
  %v1433 = vpop.f32.mrf.mxu0
  %v1434 = vpop.f32.mrf.mxu0
  %v1435 = vadd.f32 0.0, %v1434
  %v1436 = vpop.f32.mrf.mxu0
  %1437 = vmatprep.mubr.bf16.mxu0 %v320
  %1438 = vmatmul.mubr.bf16.gmra.mxu0 %v319
  %v1439 = vpop.f32.mrf.mxu0
  %v1440 = vadd.f32 0.0, %v1439
  %v1441 = vpop.f32.mrf.mxu0
  %v1442 = vpop.f32.mrf.mxu0
  %v1443 = vadd.f32 0.0, %v1442
  %v1444 = vpop.f32.mrf.mxu0
  %1445 = vmatprep.mubr.bf16.mxu0 %v322
  %1446 = vmatmul.mubr.bf16.gmra.mxu0 %v321
  %v1447 = vpop.f32.mrf.mxu0
  %v1448 = vadd.f32 0.0, %v1447
  %v1449 = vpop.f32.mrf.mxu0
  %v1450 = vpop.f32.mrf.mxu0
  %v1451 = vadd.f32 0.0, %v1450
  %v1452 = vpop.f32.mrf.mxu0
  %1453 = vmatprep.mubr.bf16.mxu0 %v324
  %1454 = vmatmul.mubr.bf16.gmra.mxu0 %v323
  %v1455 = vpop.f32.mrf.mxu0
  %v1456 = vadd.f32 0.0, %v1455
  %v1457 = vpop.f32.mrf.mxu0
  %v1458 = vpop.f32.mrf.mxu0
  %v1459 = vadd.f32 0.0, %v1458
  %v1460 = vpop.f32.mrf.mxu0
  %1461 = vmatprep.mubr.bf16.mxu0 %v326
  %1462 = vmatmul.mubr.bf16.gmra.mxu0 %v325
  %v1463 = vpop.f32.mrf.mxu0
  %v1464 = vadd.f32 0.0, %v1463
  %v1465 = vpop.f32.mrf.mxu0
  %v1466 = vpop.f32.mrf.mxu0
  %v1467 = vadd.f32 0.0, %v1466
  %v1468 = vpop.f32.mrf.mxu0
  %1469 = vmatprep.mubr.bf16.mxu0 %v328
  %1470 = vmatmul.mubr.bf16.gmra.mxu0 %v327
  %v1471 = vpop.f32.mrf.mxu0
  %v1472 = vadd.f32 0.0, %v1471
  %v1473 = vpop.f32.mrf.mxu0
  %v1474 = vpop.f32.mrf.mxu0
  %v1475 = vadd.f32 0.0, %v1474
  %v1476 = vpop.f32.mrf.mxu0
  %1477 = vmatprep.mubr.bf16.mxu0 %v330
  %1478 = vmatmul.mubr.bf16.gmra.mxu0 %v329
  %v1479 = vpop.f32.mrf.mxu0
  %v1480 = vadd.f32 0.0, %v1479
  %v1481 = vpop.f32.mrf.mxu0
  %v1482 = vpop.f32.mrf.mxu0
  %v1483 = vadd.f32 0.0, %v1482
  %v1484 = vpop.f32.mrf.mxu0
  %1485 = vmatprep.mubr.bf16.mxu0 %v332
  %1486 = vmatmul.mubr.bf16.gmra.mxu0 %v331
  %v1487 = vpop.f32.mrf.mxu0
  %v1488 = vadd.f32 0.0, %v1487
  %v1489 = vpop.f32.mrf.mxu0
  %v1490 = vpop.f32.mrf.mxu0
  %v1491 = vadd.f32 0.0, %v1490
  %v1492 = vpop.f32.mrf.mxu0
  %1493 = vmatprep.mubr.bf16.mxu0 %v334
  %1494 = vmatmul.mubr.bf16.gmra.mxu0 %v333
  %v1495 = vpop.f32.mrf.mxu0
  %v1496 = vadd.f32 0.0, %v1495
  %v1497 = vpop.f32.mrf.mxu0
  %v1498 = vpop.f32.mrf.mxu0
  %v1499 = vadd.f32 0.0, %v1498
  %v1500 = vpop.f32.mrf.mxu0
  %1501 = vmatprep.mubr.bf16.mxu0 %v336
  %1502 = vmatmul.mubr.bf16.gmra.mxu0 %v335
  %v1503 = vpop.f32.mrf.mxu0
  %v1504 = vadd.f32 0.0, %v1503
  %v1505 = vpop.f32.mrf.mxu0
  %v1506 = vpop.f32.mrf.mxu0
  %v1507 = vadd.f32 0.0, %v1506
  %v1508 = vpop.f32.mrf.mxu0
  %1509 = vmatprep.mubr.bf16.mxu0 %v338
  %1510 = vmatmul.mubr.bf16.gmra.mxu0 %v337
  %v1511 = vpop.f32.mrf.mxu0
  %v1512 = vadd.f32 0.0, %v1511
  %v1513 = vpop.f32.mrf.mxu0
  %v1514 = vpop.f32.mrf.mxu0
  %v1515 = vadd.f32 0.0, %v1514
  %v1516 = vpop.f32.mrf.mxu0
  %1517 = vmatprep.mubr.bf16.mxu0 %v340
  %1518 = vmatmul.mubr.bf16.gmra.mxu0 %v339
  %v1519 = vpop.f32.mrf.mxu0
  %v1520 = vadd.f32 0.0, %v1519
  %v1521 = vpop.f32.mrf.mxu0
  %v1522 = vpop.f32.mrf.mxu0
  %v1523 = vadd.f32 0.0, %v1522
  %v1524 = vpop.f32.mrf.mxu0
  %1525 = vmatprep.mubr.bf16.mxu0 %v342
  %1526 = vmatmul.mubr.bf16.gmra.mxu0 %v341
  %v1527 = vpop.f32.mrf.mxu0
  %v1528 = vadd.f32 0.0, %v1527
  %v1529 = vpop.f32.mrf.mxu0
  %v1530 = vpop.f32.mrf.mxu0
  %v1531 = vadd.f32 0.0, %v1530
  %v1532 = vpop.f32.mrf.mxu0
  %1533 = vmatprep.mubr.bf16.mxu0 %v344
  %1534 = vmatmul.mubr.bf16.gmra.mxu0 %v343
  %v1535 = vpop.f32.mrf.mxu0
  %v1536 = vadd.f32 0.0, %v1535
  %v1537 = vpop.f32.mrf.mxu0
  %v1538 = vpop.f32.mrf.mxu0
  %v1539 = vadd.f32 0.0, %v1538
  %v1540 = vpop.f32.mrf.mxu0
  %1541 = vmatprep.mubr.bf16.mxu0 %v346
  %1542 = vmatmul.mubr.bf16.gmra.mxu0 %v345
  %v1543 = vpop.f32.mrf.mxu0
  %v1544 = vadd.f32 0.0, %v1543
  %v1545 = vpop.f32.mrf.mxu0
  %v1546 = vpop.f32.mrf.mxu0
  %v1547 = vadd.f32 0.0, %v1546
  %v1548 = vpop.f32.mrf.mxu0
  %1549 = vmatprep.mubr.bf16.mxu0 %v348
  %1550 = vmatmul.mubr.bf16.gmra.mxu0 %v347
  %v1551 = vpop.f32.mrf.mxu0
  %v1552 = vadd.f32 0.0, %v1551
  %v1553 = vpop.f32.mrf.mxu0
  %v1554 = vpop.f32.mrf.mxu0
  %v1555 = vadd.f32 0.0, %v1554
  %v1556 = vpop.f32.mrf.mxu0
  %1557 = vdwg.mxu0
  %v1558 = vmul.f32 %v1416, %v121
  %v1559 = vmul.f32 %v1419, %v122
  %v1560 = vmul.f32 %v1424, %v123
  %v1561 = vmul.f32 %v1427, %v124
  %v1562 = vmul.f32 %v1432, %v125
  %v1563 = vmul.f32 %v1435, %v126
  %v1564 = vmul.f32 %v1440, %v127
  %v1565 = vmul.f32 %v1443, %v128
  %v1566 = vmul.f32 %v1448, %v129
  %v1567 = vmul.f32 %v1451, %v130
  %v1568 = vmul.f32 %v1456, %v131
  %v1569 = vmul.f32 %v1459, %v132
  %v1570 = vmul.f32 %v1464, %v133
  %v1571 = vmul.f32 %v1467, %v134
  %v1572 = vmul.f32 %v1472, %v135
  %v1573 = vmul.f32 %v1475, %v136
  %v1574 = vmul.f32 %v1480, %v137
  %v1575 = vmul.f32 %v1483, %v138
  %v1576 = vmul.f32 %v1488, %v139
  %v1577 = vmul.f32 %v1491, %v140
  %v1578 = vmul.f32 %v1496, %v141
  %v1579 = vmul.f32 %v1499, %v142
  %v1580 = vmul.f32 %v1504, %v143
  %v1581 = vmul.f32 %v1507, %v144
  %v1582 = vmul.f32 %v1512, %v145
  %v1583 = vmul.f32 %v1515, %v146
  %v1584 = vmul.f32 %v1520, %v147
  %v1585 = vmul.f32 %v1523, %v148
  %v1586 = vmul.f32 %v1528, %v149
  %v1587 = vmul.f32 %v1531, %v150
  %v1588 = vmul.f32 %v1536, %v151
  %v1589 = vmul.f32 %v1539, %v152
  %v1590 = vmul.f32 %v1544, %v153
  %v1591 = vmul.f32 %v1547, %v154
  %v1592 = vmul.f32 %v1552, %v155
  %v1593 = vmul.f32 %v1555, %v156
  %v1594 = vsub.f32 %v1558, %v1576
  %v1595 = vsub.f32 %v1559, %v1577
  %v1596 = vsub.f32 %v1560, %v1578
  %v1597 = vsub.f32 %v1561, %v1579
  %v1598 = vsub.f32 %v1562, %v1580
  %v1599 = vsub.f32 %v1563, %v1581
  %v1600 = vsub.f32 %v1564, %v1582
  %v1601 = vsub.f32 %v1565, %v1583
  %v1602 = vsub.f32 %v1566, %v1584
  %v1603 = vsub.f32 %v1567, %v1585
  %v1604 = vsub.f32 %v1568, %v1586
  %v1605 = vsub.f32 %v1569, %v1587
  %v1606 = vsub.f32 %v1570, %v1588
  %v1607 = vsub.f32 %v1571, %v1589
  %v1608 = vsub.f32 %v1572, %v1590
  %v1609 = vsub.f32 %v1573, %v1591
  %v1610 = vsub.f32 %v1574, %v1592
  %v1611 = vsub.f32 %v1575, %v1593
  %v1612 = vpack.c.bf16 %v1595, %v1594
  %v1613 = vpack.c.bf16 %v1597, %v1596
  %v1614 = vpack.c.bf16 %v1599, %v1598
  %v1615 = vpack.c.bf16 %v1601, %v1600
  %v1616 = vpack.c.bf16 %v1603, %v1602
  %v1617 = vpack.c.bf16 %v1605, %v1604
  %v1618 = vpack.c.bf16 %v1607, %v1606
  %v1619 = vpack.c.bf16 %v1609, %v1608
  %v1620 = vpack.c.bf16 %v1611, %v1610
  %v1621 = vmul.f32 %v1416, %v139
  %v1622 = vmul.f32 %v1419, %v140
  %v1623 = vmul.f32 %v1424, %v141
  %v1624 = vmul.f32 %v1427, %v142
  %v1625 = vmul.f32 %v1432, %v143
  %v1626 = vmul.f32 %v1435, %v144
  %v1627 = vmul.f32 %v1440, %v145
  %v1628 = vmul.f32 %v1443, %v146
  %v1629 = vmul.f32 %v1448, %v147
  %v1630 = vmul.f32 %v1451, %v148
  %v1631 = vmul.f32 %v1456, %v149
  %v1632 = vmul.f32 %v1459, %v150
  %v1633 = vmul.f32 %v1464, %v151
  %v1634 = vmul.f32 %v1467, %v152
  %v1635 = vmul.f32 %v1472, %v153
  %v1636 = vmul.f32 %v1475, %v154
  %v1637 = vmul.f32 %v1480, %v155
  %v1638 = vmul.f32 %v1483, %v156
  %v1639 = vmul.f32 %v1488, %v121
  %v1640 = vmul.f32 %v1491, %v122
  %v1641 = vmul.f32 %v1496, %v123
  %v1642 = vmul.f32 %v1499, %v124
  %v1643 = vmul.f32 %v1504, %v125
  %v1644 = vmul.f32 %v1507, %v126
  %v1645 = vmul.f32 %v1512, %v127
  %v1646 = vmul.f32 %v1515, %v128
  %v1647 = vmul.f32 %v1520, %v129
  %v1648 = vmul.f32 %v1523, %v130
  %v1649 = vmul.f32 %v1528, %v131
  %v1650 = vmul.f32 %v1531, %v132
  %v1651 = vmul.f32 %v1536, %v133
  %v1652 = vmul.f32 %v1539, %v134
  %v1653 = vmul.f32 %v1544, %v135
  %v1654 = vmul.f32 %v1547, %v136
  %v1655 = vmul.f32 %v1552, %v137
  %v1656 = vmul.f32 %v1555, %v138
  %v1657 = vadd.f32 %v1621, %v1639
  %v1658 = vadd.f32 %v1622, %v1640
  %v1659 = vadd.f32 %v1623, %v1641
  %v1660 = vadd.f32 %v1624, %v1642
  %v1661 = vadd.f32 %v1625, %v1643
  %v1662 = vadd.f32 %v1626, %v1644
  %v1663 = vadd.f32 %v1627, %v1645
  %v1664 = vadd.f32 %v1628, %v1646
  %v1665 = vadd.f32 %v1629, %v1647
  %v1666 = vadd.f32 %v1630, %v1648
  %v1667 = vadd.f32 %v1631, %v1649
  %v1668 = vadd.f32 %v1632, %v1650
  %v1669 = vadd.f32 %v1633, %v1651
  %v1670 = vadd.f32 %v1634, %v1652
  %v1671 = vadd.f32 %v1635, %v1653
  %v1672 = vadd.f32 %v1636, %v1654
  %v1673 = vadd.f32 %v1637, %v1655
  %v1674 = vadd.f32 %v1638, %v1656
  %v1675 = vpack.c.bf16 %v1658, %v1657
  %v1676 = vpack.c.bf16 %v1660, %v1659
  %v1677 = vpack.c.bf16 %v1662, %v1661
  %v1678 = vpack.c.bf16 %v1664, %v1663
  %v1679 = vpack.c.bf16 %v1666, %v1665
  %v1680 = vpack.c.bf16 %v1668, %v1667
  %v1681 = vpack.c.bf16 %v1670, %v1669
  %v1682 = vpack.c.bf16 %v1672, %v1671
  %v1683 = vpack.c.bf16 %v1674, %v1673
  %1684 = vmatprep.subr.bf16.mxu0 0
  %1685 = vmatpush1.bf16.msra.mxu0 %v1619
  %1686 = vmatprep.subr.bf16.mxu0 0
  %1687 = vmatpush1.bf16.msra.mxu0 %v1618
  %1688 = vmatprep.subr.bf16.mxu0 0
  %1689 = vmatpush1.bf16.msra.mxu0 %v1617
  %1690 = vmatprep.subr.bf16.mxu0 0
  %1691 = vmatpush1.bf16.msra.mxu0 %v1616
  %1692 = vmatprep.subr.bf16.mxu0 0
  %1693 = vmatpush1.bf16.msra.mxu0 %v1615
  %1694 = vmatprep.subr.bf16.mxu0 0
  %1695 = vmatpush1.bf16.msra.mxu0 %v1614
  %1696 = vmatprep.subr.bf16.mxu0 0
  %1697 = vmatpush1.bf16.msra.mxu0 %v1613
  %1698 = vmatprep.subr.bf16.mxu0 0
  %1699 = vmatpush1.bf16.msra.mxu0 %v1612
  %1700 = vmatprep.subr.bf16.mxu0 0
  %1701 = vmatpush2.bf16.msra.mxu0 %v1681
  %1702 = vmatprep.subr.bf16.mxu0 0
  %1703 = vmatpush2.bf16.msra.mxu0 %v1680
  %1704 = vmatprep.subr.bf16.mxu0 0
  %1705 = vmatpush2.bf16.msra.mxu0 %v1679
  %1706 = vmatprep.subr.bf16.mxu0 0
  %1707 = vmatpush2.bf16.msra.mxu0 %v1678
  %1708 = vmatprep.subr.bf16.mxu0 0
  %1709 = vmatpush2.bf16.msra.mxu0 %v1677
  %1710 = vmatprep.subr.bf16.mxu0 0
  %1711 = vmatpush2.bf16.msra.mxu0 %v1676
  %1712 = vmatprep.subr.bf16.mxu0 0
  %1713 = vmatpush2.bf16.msra.mxu0 %v1675
  %1714 = vmatprep.subr.bf16.mxu0 0
  %1715 = vmatpush2.bf16.msra.mxu0 %v1620
  %1716 = vmatprep.mubr.bf16.mxu0 %v849
  %1717 = vmatmul.mubr.bf16.gmra.mxu0 %v848
  %v1718 = vpop.f32.mrf.mxu0
  %v1719 = vadd.f32 0.0, %v1718
  %v1720 = vpop.f32.mrf.mxu0
  %v1721 = vpop.f32.mrf.mxu0
  %v1722 = vadd.f32 0.0, %v1721
  %v1723 = vpop.f32.mrf.mxu0
  %1724 = vmatprep.mubr.bf16.mxu0 %v852
  %1725 = vmatmul.mubr.bf16.gmra.mxu0 %v851
  %v1726 = vpop.f32.mrf.mxu0
  %v1727 = vadd.f32 0.0, %v1726
  %v1728 = vpop.f32.mrf.mxu0
  %v1729 = vpop.f32.mrf.mxu0
  %v1730 = vadd.f32 0.0, %v1729
  %v1731 = vpop.f32.mrf.mxu0
  %1732 = vmatprep.mubr.bf16.mxu0 %v855
  %1733 = vmatmul.mubr.bf16.gmra.mxu0 %v854
  %v1734 = vpop.f32.mrf.mxu0
  %v1735 = vadd.f32 0.0, %v1734
  %v1736 = vpop.f32.mrf.mxu0
  %v1737 = vpop.f32.mrf.mxu0
  %v1738 = vadd.f32 0.0, %v1737
  %v1739 = vpop.f32.mrf.mxu0
  %1740 = vmatprep.mubr.bf16.mxu0 %v858
  %1741 = vmatmul.mubr.bf16.gmra.mxu0 %v857
  %v1742 = vpop.f32.mrf.mxu0
  %v1743 = vadd.f32 0.0, %v1742
  %v1744 = vpop.f32.mrf.mxu0
  %v1745 = vpop.f32.mrf.mxu0
  %v1746 = vadd.f32 0.0, %v1745
  %v1747 = vpop.f32.mrf.mxu0
  %1748 = vmatprep.mubr.bf16.mxu0 %v861
  %1749 = vmatmul.mubr.bf16.gmra.mxu0 %v860
  %v1750 = vpop.f32.mrf.mxu0
  %v1751 = vadd.f32 0.0, %v1750
  %v1752 = vpop.f32.mrf.mxu0
  %v1753 = vpop.f32.mrf.mxu0
  %v1754 = vadd.f32 0.0, %v1753
  %v1755 = vpop.f32.mrf.mxu0
  %1756 = vmatprep.mubr.bf16.mxu0 %v864
  %1757 = vmatmul.mubr.bf16.gmra.mxu0 %v863
  %v1758 = vpop.f32.mrf.mxu0
  %v1759 = vadd.f32 0.0, %v1758
  %v1760 = vpop.f32.mrf.mxu0
  %v1761 = vpop.f32.mrf.mxu0
  %v1762 = vadd.f32 0.0, %v1761
  %v1763 = vpop.f32.mrf.mxu0
  %1764 = vmatprep.mubr.bf16.mxu0 %v867
  %1765 = vmatmul.mubr.bf16.gmra.mxu0 %v866
  %v1766 = vpop.f32.mrf.mxu0
  %v1767 = vadd.f32 0.0, %v1766
  %v1768 = vpop.f32.mrf.mxu0
  %v1769 = vpop.f32.mrf.mxu0
  %v1770 = vadd.f32 0.0, %v1769
  %v1771 = vpop.f32.mrf.mxu0
  %1772 = vmatprep.mubr.bf16.mxu0 %v870
  %1773 = vmatmul.mubr.bf16.gmra.mxu0 %v869
  %v1774 = vpop.f32.mrf.mxu0
  %v1775 = vadd.f32 0.0, %v1774
  %v1776 = vpop.f32.mrf.mxu0
  %v1777 = vpop.f32.mrf.mxu0
  %v1778 = vadd.f32 0.0, %v1777
  %v1779 = vpop.f32.mrf.mxu0
  %1780 = vmatprep.mubr.bf16.mxu0 %v873
  %1781 = vmatmul.mubr.bf16.gmra.mxu0 %v872
  %v1782 = vpop.f32.mrf.mxu0
  %v1783 = vadd.f32 0.0, %v1782
  %v1784 = vpop.f32.mrf.mxu0
  %v1785 = vpop.f32.mrf.mxu0
  %v1786 = vadd.f32 0.0, %v1785
  %v1787 = vpop.f32.mrf.mxu0
  %1788 = vmatprep.mubr.bf16.mxu0 %v876
  %1789 = vmatmul.mubr.bf16.gmra.mxu0 %v875
  %v1790 = vpop.f32.mrf.mxu0
  %v1791 = vadd.f32 0.0, %v1790
  %v1792 = vpop.f32.mrf.mxu0
  %v1793 = vpop.f32.mrf.mxu0
  %v1794 = vadd.f32 0.0, %v1793
  %v1795 = vpop.f32.mrf.mxu0
  %1796 = vmatprep.mubr.bf16.mxu0 %v879
  %1797 = vmatmul.mubr.bf16.gmra.mxu0 %v878
  %v1798 = vpop.f32.mrf.mxu0
  %v1799 = vadd.f32 0.0, %v1798
  %v1800 = vpop.f32.mrf.mxu0
  %v1801 = vpop.f32.mrf.mxu0
  %v1802 = vadd.f32 0.0, %v1801
  %v1803 = vpop.f32.mrf.mxu0
  %1804 = vmatprep.mubr.bf16.mxu0 %v882
  %1805 = vmatmul.mubr.bf16.gmra.mxu0 %v881
  %v1806 = vpop.f32.mrf.mxu0
  %v1807 = vadd.f32 0.0, %v1806
  %v1808 = vpop.f32.mrf.mxu0
  %v1809 = vpop.f32.mrf.mxu0
  %v1810 = vadd.f32 0.0, %v1809
  %v1811 = vpop.f32.mrf.mxu0
  %1812 = vmatprep.mubr.bf16.mxu0 %v885
  %1813 = vmatmul.mubr.bf16.gmra.mxu0 %v884
  %v1814 = vpop.f32.mrf.mxu0
  %v1815 = vadd.f32 0.0, %v1814
  %v1816 = vpop.f32.mrf.mxu0
  %v1817 = vpop.f32.mrf.mxu0
  %v1818 = vadd.f32 0.0, %v1817
  %v1819 = vpop.f32.mrf.mxu0
  %1820 = vmatprep.mubr.bf16.mxu0 %v888
  %1821 = vmatmul.mubr.bf16.gmra.mxu0 %v887
  %v1822 = vpop.f32.mrf.mxu0
  %v1823 = vadd.f32 0.0, %v1822
  %v1824 = vpop.f32.mrf.mxu0
  %v1825 = vpop.f32.mrf.mxu0
  %v1826 = vadd.f32 0.0, %v1825
  %v1827 = vpop.f32.mrf.mxu0
  %1828 = vmatprep.mubr.bf16.mxu0 %v891
  %1829 = vmatmul.mubr.bf16.gmra.mxu0 %v890
  %v1830 = vpop.f32.mrf.mxu0
  %v1831 = vadd.f32 0.0, %v1830
  %v1832 = vpop.f32.mrf.mxu0
  %v1833 = vpop.f32.mrf.mxu0
  %v1834 = vadd.f32 0.0, %v1833
  %v1835 = vpop.f32.mrf.mxu0
  %1836 = vmatprep.mubr.bf16.mxu0 %v894
  %1837 = vmatmul.mubr.bf16.gmra.mxu0 %v893
  %v1838 = vpop.f32.mrf.mxu0
  %v1839 = vadd.f32 0.0, %v1838
  %v1840 = vpop.f32.mrf.mxu0
  %v1841 = vpop.f32.mrf.mxu0
  %v1842 = vadd.f32 0.0, %v1841
  %v1843 = vpop.f32.mrf.mxu0
  %1844 = vdwg.mxu0
  %1845 = vmatprep.subr.bf16.mxu0 0
  %1846 = vmatpush1.bf16.msra.mxu0 0
  %1847 = vmatprep.subr.bf16.mxu0 0
  %1848 = vmatpush1.bf16.msra.mxu0 0
  %1849 = vmatprep.subr.bf16.mxu0 0
  %1850 = vmatpush1.bf16.msra.mxu0 0
  %1851 = vmatprep.subr.bf16.mxu0 0
  %1852 = vmatpush1.bf16.msra.mxu0 0
  %1853 = vmatprep.subr.bf16.mxu0 0
  %1854 = vmatpush1.bf16.msra.mxu0 0
  %1855 = vmatprep.subr.bf16.mxu0 0
  %1856 = vmatpush1.bf16.msra.mxu0 0
  %1857 = vmatprep.subr.bf16.mxu0 0
  %1858 = vmatpush1.bf16.msra.mxu0 %v1683
  %1859 = vmatprep.subr.bf16.mxu0 0
  %1860 = vmatpush1.bf16.msra.mxu0 %v1682
  %1861 = vmatprep.subr.bf16.mxu0 0
  %1862 = vmatpush2.bf16.msra.mxu0 0
  %1863 = vmatprep.subr.bf16.mxu0 0
  %1864 = vmatpush2.bf16.msra.mxu0 0
  %1865 = vmatprep.subr.bf16.mxu0 0
  %1866 = vmatpush2.bf16.msra.mxu0 0
  %1867 = vmatprep.subr.bf16.mxu0 0
  %1868 = vmatpush2.bf16.msra.mxu0 0
  %1869 = vmatprep.subr.bf16.mxu0 0
  %1870 = vmatpush2.bf16.msra.mxu0 0
  %1871 = vmatprep.subr.bf16.mxu0 0
  %1872 = vmatpush2.bf16.msra.mxu0 0
  %1873 = vmatprep.subr.bf16.mxu0 0
  %1874 = vmatpush2.bf16.msra.mxu0 0
  %1875 = vmatprep.subr.bf16.mxu0 0
  %1876 = vmatpush2.bf16.msra.mxu0 0
  %1877 = vmatprep.mubr.bf16.mxu0 0
  %1878 = vmatmul.mubr.bf16.gmra.mxu0 %v930
  %v1879 = vpop.f32.mrf.mxu0
  %v1880 = vadd.f32 %v1719, %v1879
  %v1881 = vpop.f32.mrf.mxu0
  %v1882 = vpop.f32.mrf.mxu0
  %v1883 = vadd.f32 %v1722, %v1882
  %v1884 = vpop.f32.mrf.mxu0
  %1885 = vmatprep.mubr.bf16.mxu0 0
  %1886 = vmatmul.mubr.bf16.gmra.mxu0 %v933
  %v1887 = vpop.f32.mrf.mxu0
  %v1888 = vadd.f32 %v1727, %v1887
  %v1889 = vpop.f32.mrf.mxu0
  %v1890 = vpop.f32.mrf.mxu0
  %v1891 = vadd.f32 %v1730, %v1890
  %v1892 = vpop.f32.mrf.mxu0
  %1893 = vmatprep.mubr.bf16.mxu0 0
  %1894 = vmatmul.mubr.bf16.gmra.mxu0 %v936
  %v1895 = vpop.f32.mrf.mxu0
  %v1896 = vadd.f32 %v1735, %v1895
  %v1897 = vpop.f32.mrf.mxu0
  %v1898 = vpop.f32.mrf.mxu0
  %v1899 = vadd.f32 %v1738, %v1898
  %v1900 = vpop.f32.mrf.mxu0
  %1901 = vmatprep.mubr.bf16.mxu0 0
  %1902 = vmatmul.mubr.bf16.gmra.mxu0 %v939
  %v1903 = vpop.f32.mrf.mxu0
  %v1904 = vadd.f32 %v1743, %v1903
  %v1905 = vpop.f32.mrf.mxu0
  %v1906 = vpop.f32.mrf.mxu0
  %v1907 = vadd.f32 %v1746, %v1906
  %v1908 = vpop.f32.mrf.mxu0
  %1909 = vmatprep.mubr.bf16.mxu0 0
  %1910 = vmatmul.mubr.bf16.gmra.mxu0 %v942
  %v1911 = vpop.f32.mrf.mxu0
  %v1912 = vadd.f32 %v1751, %v1911
  %v1913 = vpop.f32.mrf.mxu0
  %v1914 = vpop.f32.mrf.mxu0
  %v1915 = vadd.f32 %v1754, %v1914
  %v1916 = vpop.f32.mrf.mxu0
  %1917 = vmatprep.mubr.bf16.mxu0 0
  %1918 = vmatmul.mubr.bf16.gmra.mxu0 %v945
  %v1919 = vpop.f32.mrf.mxu0
  %v1920 = vadd.f32 %v1759, %v1919
  %v1921 = vpop.f32.mrf.mxu0
  %v1922 = vpop.f32.mrf.mxu0
  %v1923 = vadd.f32 %v1762, %v1922
  %v1924 = vpop.f32.mrf.mxu0
  %1925 = vmatprep.mubr.bf16.mxu0 0
  %1926 = vmatmul.mubr.bf16.gmra.mxu0 %v948
  %v1927 = vpop.f32.mrf.mxu0
  %v1928 = vadd.f32 %v1767, %v1927
  %v1929 = vpop.f32.mrf.mxu0
  %v1930 = vpop.f32.mrf.mxu0
  %v1931 = vadd.f32 %v1770, %v1930
  %v1932 = vpop.f32.mrf.mxu0
  %1933 = vmatprep.mubr.bf16.mxu0 0
  %1934 = vmatmul.mubr.bf16.gmra.mxu0 %v951
  %v1935 = vpop.f32.mrf.mxu0
  %v1936 = vadd.f32 %v1775, %v1935
  %v1937 = vpop.f32.mrf.mxu0
  %v1938 = vpop.f32.mrf.mxu0
  %v1939 = vadd.f32 %v1778, %v1938
  %v1940 = vpop.f32.mrf.mxu0
  %1941 = vmatprep.mubr.bf16.mxu0 0
  %1942 = vmatmul.mubr.bf16.gmra.mxu0 %v954
  %v1943 = vpop.f32.mrf.mxu0
  %v1944 = vadd.f32 %v1783, %v1943
  %v1945 = vpop.f32.mrf.mxu0
  %v1946 = vpop.f32.mrf.mxu0
  %v1947 = vadd.f32 %v1786, %v1946
  %v1948 = vpop.f32.mrf.mxu0
  %1949 = vmatprep.mubr.bf16.mxu0 0
  %1950 = vmatmul.mubr.bf16.gmra.mxu0 %v957
  %v1951 = vpop.f32.mrf.mxu0
  %v1952 = vadd.f32 %v1791, %v1951
  %v1953 = vpop.f32.mrf.mxu0
  %v1954 = vpop.f32.mrf.mxu0
  %v1955 = vadd.f32 %v1794, %v1954
  %v1956 = vpop.f32.mrf.mxu0
  %1957 = vmatprep.mubr.bf16.mxu0 0
  %1958 = vmatmul.mubr.bf16.gmra.mxu0 %v960
  %v1959 = vpop.f32.mrf.mxu0
  %v1960 = vadd.f32 %v1799, %v1959
  %v1961 = vpop.f32.mrf.mxu0
  %v1962 = vpop.f32.mrf.mxu0
  %v1963 = vadd.f32 %v1802, %v1962
  %v1964 = vpop.f32.mrf.mxu0
  %1965 = vmatprep.mubr.bf16.mxu0 0
  %1966 = vmatmul.mubr.bf16.gmra.mxu0 %v963
  %v1967 = vpop.f32.mrf.mxu0
  %v1968 = vadd.f32 %v1807, %v1967
  %v1969 = vpop.f32.mrf.mxu0
  %v1970 = vpop.f32.mrf.mxu0
  %v1971 = vadd.f32 %v1810, %v1970
  %v1972 = vpop.f32.mrf.mxu0
  %1973 = vmatprep.mubr.bf16.mxu0 0
  %1974 = vmatmul.mubr.bf16.gmra.mxu0 %v966
  %v1975 = vpop.f32.mrf.mxu0
  %v1976 = vadd.f32 %v1815, %v1975
  %v1977 = vpop.f32.mrf.mxu0
  %v1978 = vpop.f32.mrf.mxu0
  %v1979 = vadd.f32 %v1818, %v1978
  %v1980 = vpop.f32.mrf.mxu0
  %1981 = vmatprep.mubr.bf16.mxu0 0
  %1982 = vmatmul.mubr.bf16.gmra.mxu0 %v969
  %v1983 = vpop.f32.mrf.mxu0
  %v1984 = vadd.f32 %v1823, %v1983
  %v1985 = vpop.f32.mrf.mxu0
  %v1986 = vpop.f32.mrf.mxu0
  %v1987 = vadd.f32 %v1826, %v1986
  %v1988 = vpop.f32.mrf.mxu0
  %1989 = vmatprep.mubr.bf16.mxu0 0
  %1990 = vmatmul.mubr.bf16.gmra.mxu0 %v972
  %v1991 = vpop.f32.mrf.mxu0
  %v1992 = vadd.f32 %v1831, %v1991
  %v1993 = vpop.f32.mrf.mxu0
  %v1994 = vpop.f32.mrf.mxu0
  %v1995 = vadd.f32 %v1834, %v1994
  %v1996 = vpop.f32.mrf.mxu0
  %1997 = vmatprep.mubr.bf16.mxu0 0
  %1998 = vmatmul.mubr.bf16.gmra.mxu0 %v975
  %v1999 = vpop.f32.mrf.mxu0
  %v2000 = vadd.f32 %v1839, %v1999
  %v2001 = vpop.f32.mrf.mxu0
  %v2002 = vpop.f32.mrf.mxu0
  %v2003 = vadd.f32 %v1842, %v2002
  %v2004 = vpop.f32.mrf.mxu0
  %2005 = vdwg.mxu0
  %s2006 = scalar_lea.vmem %s5, 256
  %2007 = vst.msk [vmem:[%s2006] sm:$0xff] %vm1299, %v1880
  %2008 = vst.msk [vmem:[%s2006 + $0x8] sm:$0xff] %vm1299, %v1883
  %2009 = vst.msk [vmem:[%s2006 + $0x10] sm:$0xff] %vm1299, %v1888
  %2010 = vst.msk [vmem:[%s2006 + $0x18] sm:$0xff] %vm1299, %v1891
  %2011 = vst.msk [vmem:[%s2006 + $0x20] sm:$0xff] %vm1299, %v1896
  %2012 = vst.msk [vmem:[%s2006 + $0x28] sm:$0xff] %vm1299, %v1899
  %2013 = vst.msk [vmem:[%s2006 + $0x30] sm:$0xff] %vm1299, %v1904
  %2014 = vst.msk [vmem:[%s2006 + $0x38] sm:$0xff] %vm1299, %v1907
  %2015 = vst.msk [vmem:[%s2006 + $0x40] sm:$0xff] %vm1299, %v1912
  %2016 = vst.msk [vmem:[%s2006 + $0x48] sm:$0xff] %vm1299, %v1915
  %2017 = vst.msk [vmem:[%s2006 + $0x50] sm:$0xff] %vm1299, %v1920
  %2018 = vst.msk [vmem:[%s2006 + $0x58] sm:$0xff] %vm1299, %v1923
  %2019 = vst.msk [vmem:[%s2006 + $0x60] sm:$0xff] %vm1299, %v1928
  %2020 = vst.msk [vmem:[%s2006 + $0x68] sm:$0xff] %vm1299, %v1931
  %2021 = vst.msk [vmem:[%s2006 + $0x70] sm:$0xff] %vm1299, %v1936
  %2022 = vst.msk [vmem:[%s2006 + $0x78] sm:$0xff] %vm1299, %v1939
  %2023 = vst.msk [vmem:[%s2006 + $0x80] sm:$0xff] %vm1299, %v1944
  %2024 = vst.msk [vmem:[%s2006 + $0x88] sm:$0xff] %vm1299, %v1947
  %2025 = vst.msk [vmem:[%s2006 + $0x90] sm:$0xff] %vm1299, %v1952
  %2026 = vst.msk [vmem:[%s2006 + $0x98] sm:$0xff] %vm1299, %v1955
  %2027 = vst.msk [vmem:[%s2006 + $0xa0] sm:$0xff] %vm1299, %v1960
  %2028 = vst.msk [vmem:[%s2006 + $0xa8] sm:$0xff] %vm1299, %v1963
  %2029 = vst.msk [vmem:[%s2006 + $0xb0] sm:$0xff] %vm1299, %v1968
  %2030 = vst.msk [vmem:[%s2006 + $0xb8] sm:$0xff] %vm1299, %v1971
  %2031 = vst.msk [vmem:[%s2006 + $0xc0] sm:$0xff] %vm1299, %v1976
  %2032 = vst.msk [vmem:[%s2006 + $0xc8] sm:$0xff] %vm1299, %v1979
  %2033 = vst.msk [vmem:[%s2006 + $0xd0] sm:$0xff] %vm1299, %v1984
  %2034 = vst.msk [vmem:[%s2006 + $0xd8] sm:$0xff] %vm1299, %v1987
  %2035 = vst.msk [vmem:[%s2006 + $0xe0] sm:$0xff] %vm1299, %v1992
  %2036 = vst.msk [vmem:[%s2006 + $0xe8] sm:$0xff] %vm1299, %v1995
  %2037 = vst.msk [vmem:[%s2006 + $0xf0] sm:$0xff] %vm1299, %v2000
  %2038 = vst.msk [vmem:[%s2006 + $0xf8] sm:$0xff] %vm1299, %v2003
  // Predicated region
  $region22: #{tpu_custom_call.1} parent=0 // pred_check
    _
  $region23: #{tpu_custom_call.1} parent=0 // pred_check_branch
    %2040 = sbr.rel (0) target = $region25
  $region24: #{tpu_custom_call.1} parent=0 // pred_region
    _
  $region25: #{tpu_custom_call.1} parent=0 // pred_fallthru
    _
  // Predicated region
  $region26: #{tpu_custom_call.1} parent=0 // pred_check
    _
  $region27: #{tpu_custom_call.1} parent=0 // pred_check_branch
    %2042 = sbr.rel (0) target = $region29
  $region28: #{tpu_custom_call.1} parent=0 // pred_region
    _
  $region29: #{tpu_custom_call.1} parent=0 // pred_fallthru
    _

// kernel: tpu_custom_call.1
$region0: #{tpu_custom_call.1}
  #allocation0 [shape = 'u32[]', space=smem, size = 0x4, offset = 0x4, fixed_abs, tag = 'smem constant byte address 0x4 - core index']
  #allocation1 [shape = 'u32[144,128]{1,0:T(1,128)}', space=vmem, size = 0x12000, scoped, tag = 'internal scratch']
  %s0 = inlined_call_operand.vmem [shape: f32[2,256,4], index: 0, kind: input, shape index: {}]
  %s1 = inlined_call_operand.vmem [shape: f32[144,4], index: 1, kind: input, shape index: {}]
  %s2 = inlined_call_operand.vmem [shape: f32[144,4], index: 2, kind: input, shape index: {}]
  %s3 = inlined_call_operand.vmem [shape: bf16[288,256], index: 3, kind: input, shape index: {}]
  %s4 = inlined_call_operand.vmem [shape: bf16[256,288], index: 4, kind: input, shape index: {}]
  %s5 = inlined_call_operand.vmem [shape: f32[2,256,4], index: 5, kind: output, shape index: {}]
  %s6 = sld [smem:[#allocation0]]
  $region30: #{tpu_custom_call.1} parent=0
    _
  %s8 = ssub.s32 1, %s6
  %s9 = scalar_select 0, %s8, %s6
  // Predicated region
  $region2: #{tpu_custom_call.1} parent=0 // pred_check
    _
  $region3: #{tpu_custom_call.1} parent=0 // pred_check_branch
    %11 = sbr.rel (0) target = $region5
  $region4: #{tpu_custom_call.1} parent=0 // pred_region
    _
  $region5: #{tpu_custom_call.1} parent=0 // pred_fallthru
    _
  // Predicated region
  $region6: #{tpu_custom_call.1} parent=0 // pred_check
    _
  $region7: #{tpu_custom_call.1} parent=0 // pred_check_branch
    %13 = sbr.rel (0) target = $region9
  $region8: #{tpu_custom_call.1} parent=0 // pred_region
    _
  $region9: #{tpu_custom_call.1} parent=0 // pred_fallthru
    _
  // Predicated region
  $region10: #{tpu_custom_call.1} parent=0 // pred_check
    _
  $region11: #{tpu_custom_call.1} parent=0 // pred_check_branch
    %15 = sbr.rel (0) target = $region13
  $region12: #{tpu_custom_call.1} parent=0 // pred_region
    _
  $region13: #{tpu_custom_call.1} parent=0 // pred_fallthru
    _
  // Predicated region
  $region14: #{tpu_custom_call.1} parent=0 // pred_check
    _
  $region15: #{tpu_custom_call.1} parent=0 // pred_check_branch
    %17 = sbr.rel (0) target = $region17
  $region16: #{tpu_custom_call.1} parent=0 // pred_region
    _
  $region17: #{tpu_custom_call.1} parent=0 // pred_fallthru
    _
  // Predicated region
  $region18: #{tpu_custom_call.1} parent=0 // pred_check
    _
  $region19: #{tpu_custom_call.1} parent=0 // pred_check_branch
    %19 = sbr.rel (0) target = $region21
  $region20: #{tpu_custom_call.1} parent=0 // pred_region
    _
  $region21: #{tpu_custom_call.1} parent=0 // pred_fallthru
    _
  %v21 = vld [vmem:[%s3] sm:$0xff]
  %v22 = vld [vmem:[%s3 + $0x8] sm:$0xff]
  %v23 = vld [vmem:[%s3 + $0x10] sm:$0xff]
  %v24 = vld [vmem:[%s3 + $0x18] sm:$0xff]
  %v25 = vld [vmem:[%s3 + $0x20] sm:$0xff]
  %v26 = vld [vmem:[%s3 + $0x28] sm:$0xff]
  %v27 = vld [vmem:[%s3 + $0x30] sm:$0xff]
  %v28 = vld [vmem:[%s3 + $0x38] sm:$0xff]
  %v29 = vld [vmem:[%s3 + $0x40] sm:$0xff]
  %v30 = vld [vmem:[%s3 + $0x48] sm:$0xff]
  %v31 = vld [vmem:[%s3 + $0x50] sm:$0xff]
  %v32 = vld [vmem:[%s3 + $0x58] sm:$0xff]
  %v33 = vld [vmem:[%s3 + $0x60] sm:$0xff]
  %v34 = vld [vmem:[%s3 + $0x68] sm:$0xff]
  %v35 = vld [vmem:[%s3 + $0x70] sm:$0xff]
  %v36 = vld [vmem:[%s3 + $0x78] sm:$0xff]
  %v37 = vld [vmem:[%s3 + $0x80] sm:$0xff]
  %v38 = vld [vmem:[%s3 + $0x88] sm:$0xff]
  %v39 = vld [vmem:[%s3 + $0x90] sm:$0xff]
  %v40 = vld [vmem:[%s3 + $0x98] sm:$0xff]
  %v41 = vld [vmem:[%s3 + $0xa0] sm:$0xff]
  %v42 = vld [vmem:[%s3 + $0xa8] sm:$0xff]
  %v43 = vld [vmem:[%s3 + $0xb0] sm:$0xff]
  %v44 = vld [vmem:[%s3 + $0xb8] sm:$0xff]
  %v45 = vld [vmem:[%s3 + $0xc0] sm:$0xff]
  %v46 = vld [vmem:[%s3 + $0xc8] sm:$0xff]
  %v47 = vld [vmem:[%s3 + $0xd0] sm:$0xff]
  %v48 = vld [vmem:[%s3 + $0xd8] sm:$0xff]
  %v49 = vld [vmem:[%s3 + $0xe0] sm:$0xff]
  %v50 = vld [vmem:[%s3 + $0xe8] sm:$0xff]
  %v51 = vld [vmem:[%s3 + $0xf0] sm:$0xff]
  %v52 = vld [vmem:[%s3 + $0xf8] sm:$0xff]
  %v53 = vld [vmem:[%s3 + $0x100] sm:$0xff]
  %v54 = vld [vmem:[%s3 + $0x108] sm:$0xff]
  %v55 = vld [vmem:[%s3 + $0x110] sm:$0xff]
  %v56 = vld [vmem:[%s3 + $0x118] sm:$0xff]
  %v57 = vld [vmem:[%s4] sm:$0xff]
  %v58 = vld [vmem:[%s4 + $0x8] sm:$0xf]
  %v59 = vld [vmem:[%s4 + $0xc] sm:$0xff]
  %v60 = vld [vmem:[%s4 + $0x14] sm:$0xf]
  %v61 = vld [vmem:[%s4 + $0x18] sm:$0xff]
  %v62 = vld [vmem:[%s4 + $0x20] sm:$0xf]
  %v63 = vld [vmem:[%s4 + $0x24] sm:$0xff]
  %v64 = vld [vmem:[%s4 + $0x2c] sm:$0xf]
  %v65 = vld [vmem:[%s4 + $0x30] sm:$0xff]
  %v66 = vld [vmem:[%s4 + $0x38] sm:$0xf]
  %v67 = vld [vmem:[%s4 + $0x3c] sm:$0xff]
  %v68 = vld [vmem:[%s4 + $0x44] sm:$0xf]
  %v69 = vld [vmem:[%s4 + $0x48] sm:$0xff]
  %v70 = vld [vmem:[%s4 + $0x50] sm:$0xf]
  %v71 = vld [vmem:[%s4 + $0x54] sm:$0xff]
  %v72 = vld [vmem:[%s4 + $0x5c] sm:$0xf]
  %v73 = vld [vmem:[%s4 + $0x60] sm:$0xff]
  %v74 = vld [vmem:[%s4 + $0x68] sm:$0xf]
  %v75 = vld [vmem:[%s4 + $0x6c] sm:$0xff]
  %v76 = vld [vmem:[%s4 + $0x74] sm:$0xf]
  %v77 = vld [vmem:[%s4 + $0x78] sm:$0xff]
  %v78 = vld [vmem:[%s4 + $0x80] sm:$0xf]
  %v79 = vld [vmem:[%s4 + $0x84] sm:$0xff]
  %v80 = vld [vmem:[%s4 + $0x8c] sm:$0xf]
  %v81 = vld [vmem:[%s4 + $0x90] sm:$0xff]
  %v82 = vld [vmem:[%s4 + $0x98] sm:$0xf]
  %v83 = vld [vmem:[%s4 + $0x9c] sm:$0xff]
  %v84 = vld [vmem:[%s4 + $0xa4] sm:$0xf]
  %v85 = vld [vmem:[%s4 + $0xa8] sm:$0xff]
  %v86 = vld [vmem:[%s4 + $0xb0] sm:$0xf]
  %v87 = vld [vmem:[%s4 + $0xb4] sm:$0xff]
  %v88 = vld [vmem:[%s4 + $0xbc] sm:$0xf]
  %v89 = vld [vmem:[%s4 + $0xc0] sm:$0xff]
  %v90 = vld [vmem:[%s4 + $0xc8] sm:$0xf]
  %v91 = vld [vmem:[%s4 + $0xcc] sm:$0xff]
  %v92 = vld [vmem:[%s4 + $0xd4] sm:$0xf]
  %v93 = vld [vmem:[%s4 + $0xd8] sm:$0xff]
  %v94 = vld [vmem:[%s4 + $0xe0] sm:$0xf]
  %v95 = vld [vmem:[%s4 + $0xe4] sm:$0xff]
  %v96 = vld [vmem:[%s4 + $0xec] sm:$0xf]
  %v97 = vld [vmem:[%s4 + $0xf0] sm:$0xff]
  %v98 = vld [vmem:[%s4 + $0xf8] sm:$0xf]
  %v99 = vld [vmem:[%s4 + $0xfc] sm:$0xff]
  %v100 = vld [vmem:[%s4 + $0x104] sm:$0xf]
  %v101 = vld [vmem:[%s4 + $0x108] sm:$0xff]
  %v102 = vld [vmem:[%s4 + $0x110] sm:$0xf]
  %v103 = vld [vmem:[%s4 + $0x114] sm:$0xff]
  %v104 = vld [vmem:[%s4 + $0x11c] sm:$0xf]
  %v105 = vld [vmem:[%s4 + $0x120] sm:$0xff]
  %v106 = vld [vmem:[%s4 + $0x128] sm:$0xf]
  %v107 = vld [vmem:[%s4 + $0x12c] sm:$0xff]
  %v108 = vld [vmem:[%s4 + $0x134] sm:$0xf]
  %v109 = vld [vmem:[%s4 + $0x138] sm:$0xff]
  %v110 = vld [vmem:[%s4 + $0x140] sm:$0xf]
  %v111 = vld [vmem:[%s4 + $0x144] sm:$0xff]
  %v112 = vld [vmem:[%s4 + $0x14c] sm:$0xf]
  %v113 = vld [vmem:[%s4 + $0x150] sm:$0xff]
  %v114 = vld [vmem:[%s4 + $0x158] sm:$0xf]
  %v115 = vld [vmem:[%s4 + $0x15c] sm:$0xff]
  %v116 = vld [vmem:[%s4 + $0x164] sm:$0xf]
  %v117 = vld [vmem:[%s4 + $0x168] sm:$0xff]
  %v118 = vld [vmem:[%s4 + $0x170] sm:$0xf]
  %v119 = vld [vmem:[%s4 + $0x174] sm:$0xff]
  %v120 = vld [vmem:[%s4 + $0x17c] sm:$0xf]
  %v121 = vld [vmem:[%s1] sm:$0xff]
  %v122 = vld [vmem:[%s1 + $0x8] sm:$0xff]
  %v123 = vld [vmem:[%s1 + $0x10] sm:$0xff]
  %v124 = vld [vmem:[%s1 + $0x18] sm:$0xff]
  %v125 = vld [vmem:[%s1 + $0x20] sm:$0xff]
  %v126 = vld [vmem:[%s1 + $0x28] sm:$0xff]
  %v127 = vld [vmem:[%s1 + $0x30] sm:$0xff]
  %v128 = vld [vmem:[%s1 + $0x38] sm:$0xff]
  %v129 = vld [vmem:[%s1 + $0x40] sm:$0xff]
  %v130 = vld [vmem:[%s1 + $0x48] sm:$0xff]
  %v131 = vld [vmem:[%s1 + $0x50] sm:$0xff]
  %v132 = vld [vmem:[%s1 + $0x58] sm:$0xff]
  %v133 = vld [vmem:[%s1 + $0x60] sm:$0xff]
  %v134 = vld [vmem:[%s1 + $0x68] sm:$0xff]
  %v135 = vld [vmem:[%s1 + $0x70] sm:$0xff]
  %v136 = vld [vmem:[%s1 + $0x78] sm:$0xff]
  %v137 = vld [vmem:[%s1 + $0x80] sm:$0xff]
  %v138 = vld [vmem:[%s1 + $0x88] sm:$0xff]
  %v139 = vld [vmem:[%s2] sm:$0xff]
  %v140 = vld [vmem:[%s2 + $0x8] sm:$0xff]
  %v141 = vld [vmem:[%s2 + $0x10] sm:$0xff]
  %v142 = vld [vmem:[%s2 + $0x18] sm:$0xff]
  %v143 = vld [vmem:[%s2 + $0x20] sm:$0xff]
  %v144 = vld [vmem:[%s2 + $0x28] sm:$0xff]
  %v145 = vld [vmem:[%s2 + $0x30] sm:$0xff]
  %v146 = vld [vmem:[%s2 + $0x38] sm:$0xff]
  %v147 = vld [vmem:[%s2 + $0x40] sm:$0xff]
  %v148 = vld [vmem:[%s2 + $0x48] sm:$0xff]
  %v149 = vld [vmem:[%s2 + $0x50] sm:$0xff]
  %v150 = vld [vmem:[%s2 + $0x58] sm:$0xff]
  %v151 = vld [vmem:[%s2 + $0x60] sm:$0xff]
  %v152 = vld [vmem:[%s2 + $0x68] sm:$0xff]
  %v153 = vld [vmem:[%s2 + $0x70] sm:$0xff]
  %v154 = vld [vmem:[%s2 + $0x78] sm:$0xff]
  %v155 = vld [vmem:[%s2 + $0x80] sm:$0xff]
  %v156 = vld [vmem:[%s2 + $0x88] sm:$0xff]
  %v157 = vld [vmem:[%s0] sm:$0xff]
  %v158 = vld [vmem:[%s0 + $0x8] sm:$0xff]
  %v159 = vld [vmem:[%s0 + $0x10] sm:$0xff]
  %v160 = vld [vmem:[%s0 + $0x18] sm:$0xff]
  %v161 = vld [vmem:[%s0 + $0x20] sm:$0xff]
  %v162 = vld [vmem:[%s0 + $0x28] sm:$0xff]
  %v163 = vld [vmem:[%s0 + $0x30] sm:$0xff]
  %v164 = vld [vmem:[%s0 + $0x38] sm:$0xff]
  %v165 = vld [vmem:[%s0 + $0x40] sm:$0xff]
  %v166 = vld [vmem:[%s0 + $0x48] sm:$0xff]
  %v167 = vld [vmem:[%s0 + $0x50] sm:$0xff]
  %v168 = vld [vmem:[%s0 + $0x58] sm:$0xff]
  %v169 = vld [vmem:[%s0 + $0x60] sm:$0xff]
  %v170 = vld [vmem:[%s0 + $0x68] sm:$0xff]
  %v171 = vld [vmem:[%s0 + $0x70] sm:$0xff]
  %v172 = vld [vmem:[%s0 + $0x78] sm:$0xff]
  %v173 = vld [vmem:[%s0 + $0x80] sm:$0xff]
  %v174 = vld [vmem:[%s0 + $0x88] sm:$0xff]
  %v175 = vld [vmem:[%s0 + $0x90] sm:$0xff]
  %v176 = vld [vmem:[%s0 + $0x98] sm:$0xff]
  %v177 = vld [vmem:[%s0 + $0xa0] sm:$0xff]
  %v178 = vld [vmem:[%s0 + $0xa8] sm:$0xff]
  %v179 = vld [vmem:[%s0 + $0xb0] sm:$0xff]
  %v180 = vld [vmem:[%s0 + $0xb8] sm:$0xff]
  %v181 = vld [vmem:[%s0 + $0xc0] sm:$0xff]
  %v182 = vld [vmem:[%s0 + $0xc8] sm:$0xff]
  %v183 = vld [vmem:[%s0 + $0xd0] sm:$0xff]
  %v184 = vld [vmem:[%s0 + $0xd8] sm:$0xff]
  %v185 = vld [vmem:[%s0 + $0xe0] sm:$0xff]
  %v186 = vld [vmem:[%s0 + $0xe8] sm:$0xff]
  %v187 = vld [vmem:[%s0 + $0xf0] sm:$0xff]
  %v188 = vld [vmem:[%s0 + $0xf8] sm:$0xff]
  %v189 = vpack.c.bf16 %v158, %v157
  %v190 = vpack.c.bf16 %v160, %v159
  %v191 = vpack.c.bf16 %v162, %v161
  %v192 = vpack.c.bf16 %v164, %v163
  %v193 = vpack.c.bf16 %v166, %v165
  %v194 = vpack.c.bf16 %v168, %v167
  %v195 = vpack.c.bf16 %v170, %v169
  %v196 = vpack.c.bf16 %v172, %v171
  %v197 = vpack.c.bf16 %v174, %v173
  %v198 = vpack.c.bf16 %v176, %v175
  %v199 = vpack.c.bf16 %v178, %v177
  %v200 = vpack.c.bf16 %v180, %v179
  %v201 = vpack.c.bf16 %v182, %v181
  %v202 = vpack.c.bf16 %v184, %v183
  %v203 = vpack.c.bf16 %v186, %v185
  %v204 = vpack.c.bf16 %v188, %v187
  %v241 = vunpack.c.l.b16 %v21
  %v242 = vunpack.c.h.b16 %v21
  %v243 = vunpack.c.l.b16 %v22
  %v244 = vunpack.c.h.b16 %v22
  %v245 = vunpack.c.l.b16 %v23
  %v246 = vunpack.c.h.b16 %v23
  %v247 = vunpack.c.l.b16 %v24
  %v248 = vunpack.c.h.b16 %v24
  %v249 = vunpack.c.l.b16 %v25
  %v250 = vunpack.c.h.b16 %v25
  %v251 = vunpack.c.l.b16 %v26
  %v252 = vunpack.c.h.b16 %v26
  %v253 = vunpack.c.l.b16 %v27
  %v254 = vunpack.c.h.b16 %v27
  %v255 = vunpack.c.l.b16 %v28
  %v256 = vunpack.c.h.b16 %v28
  %v257 = vunpack.c.l.b16 %v29
  %v258 = vunpack.c.h.b16 %v29
  %v259 = vunpack.c.l.b16 %v30
  %v260 = vunpack.c.h.b16 %v30
  %v261 = vunpack.c.l.b16 %v31
  %v262 = vunpack.c.h.b16 %v31
  %v263 = vunpack.c.l.b16 %v32
  %v264 = vunpack.c.h.b16 %v32
  %v265 = vunpack.c.l.b16 %v33
  %v266 = vunpack.c.h.b16 %v33
  %v267 = vunpack.c.l.b16 %v34
  %v268 = vunpack.c.h.b16 %v34
  %v269 = vunpack.c.l.b16 %v35
  %v270 = vunpack.c.h.b16 %v35
  %v271 = vunpack.c.l.b16 %v36
  %v272 = vunpack.c.h.b16 %v36
  %v273 = vunpack.c.l.b16 %v37
  %v274 = vunpack.c.h.b16 %v37
  %v275 = vunpack.c.l.b16 %v38
  %v276 = vunpack.c.h.b16 %v38
  %v277 = vunpack.c.l.b16 %v39
  %v278 = vunpack.c.h.b16 %v39
  %v279 = vunpack.c.l.b16 %v40
  %v280 = vunpack.c.h.b16 %v40
  %v281 = vunpack.c.l.b16 %v41
  %v282 = vunpack.c.h.b16 %v41
  %v283 = vunpack.c.l.b16 %v42
  %v284 = vunpack.c.h.b16 %v42
  %v285 = vunpack.c.l.b16 %v43
  %v286 = vunpack.c.h.b16 %v43
  %v287 = vunpack.c.l.b16 %v44
  %v288 = vunpack.c.h.b16 %v44
  %v289 = vunpack.c.l.b16 %v45
  %v290 = vunpack.c.h.b16 %v45
  %v291 = vunpack.c.l.b16 %v46
  %v292 = vunpack.c.h.b16 %v46
  %v293 = vunpack.c.l.b16 %v47
  %v294 = vunpack.c.h.b16 %v47
  %v295 = vunpack.c.l.b16 %v48
  %v296 = vunpack.c.h.b16 %v48
  %v297 = vunpack.c.l.b16 %v49
  %v298 = vunpack.c.h.b16 %v49
  %v299 = vunpack.c.l.b16 %v50
  %v300 = vunpack.c.h.b16 %v50
  %v301 = vunpack.c.l.b16 %v51
  %v302 = vunpack.c.h.b16 %v51
  %v303 = vunpack.c.l.b16 %v52
  %v304 = vunpack.c.h.b16 %v52
  %v305 = vunpack.c.l.b16 %v53
  %v306 = vunpack.c.h.b16 %v53
  %v307 = vunpack.c.l.b16 %v54
  %v308 = vunpack.c.h.b16 %v54
  %v309 = vunpack.c.l.b16 %v55
  %v310 = vunpack.c.h.b16 %v55
  %v311 = vunpack.c.l.b16 %v56
  %v312 = vunpack.c.h.b16 %v56
  %v313 = vpack.c.b16 %v243, %v241
  %v314 = vpack.c.b16 %v244, %v242
  %v315 = vpack.c.b16 %v247, %v245
  %v316 = vpack.c.b16 %v248, %v246
  %v317 = vpack.c.b16 %v251, %v249
  %v318 = vpack.c.b16 %v252, %v250
  %v319 = vpack.c.b16 %v255, %v253
  %v320 = vpack.c.b16 %v256, %v254
  %v321 = vpack.c.b16 %v259, %v257
  %v322 = vpack.c.b16 %v260, %v258
  %v323 = vpack.c.b16 %v263, %v261
  %v324 = vpack.c.b16 %v264, %v262
  %v325 = vpack.c.b16 %v267, %v265
  %v326 = vpack.c.b16 %v268, %v266
  %v327 = vpack.c.b16 %v271, %v269
  %v328 = vpack.c.b16 %v272, %v270
  %v329 = vpack.c.b16 %v275, %v273
  %v330 = vpack.c.b16 %v276, %v274
  %v331 = vpack.c.b16 %v279, %v277
  %v332 = vpack.c.b16 %v280, %v278
  %v333 = vpack.c.b16 %v283, %v281
  %v334 = vpack.c.b16 %v284, %v282
  %v335 = vpack.c.b16 %v287, %v285
  %v336 = vpack.c.b16 %v288, %v286
  %v337 = vpack.c.b16 %v291, %v289
  %v338 = vpack.c.b16 %v292, %v290
  %v339 = vpack.c.b16 %v295, %v293
  %v340 = vpack.c.b16 %v296, %v294
  %v341 = vpack.c.b16 %v299, %v297
  %v342 = vpack.c.b16 %v300, %v298
  %v343 = vpack.c.b16 %v303, %v301
  %v344 = vpack.c.b16 %v304, %v302
  %v345 = vpack.c.b16 %v307, %v305
  %v346 = vpack.c.b16 %v308, %v306
  %v347 = vpack.c.b16 %v311, %v309
  %v348 = vpack.c.b16 %v312, %v310
  %385 = vmatprep.subr.bf16.mxu0 0
  %386 = vmatpush1.bf16.msra.mxu0 %v196
  %387 = vmatprep.subr.bf16.mxu0 0
  %388 = vmatpush1.bf16.msra.mxu0 %v195
  %389 = vmatprep.subr.bf16.mxu0 0
  %390 = vmatpush1.bf16.msra.mxu0 %v194
  %391 = vmatprep.subr.bf16.mxu0 0
  %392 = vmatpush1.bf16.msra.mxu0 %v193
  %393 = vmatprep.subr.bf16.mxu0 0
  %394 = vmatpush1.bf16.msra.mxu0 %v192
  %395 = vmatprep.subr.bf16.mxu0 0
  %396 = vmatpush1.bf16.msra.mxu0 %v191
  %397 = vmatprep.subr.bf16.mxu0 0
  %398 = vmatpush1.bf16.msra.mxu0 %v190
  %399 = vmatprep.subr.bf16.mxu0 0
  %400 = vmatpush1.bf16.msra.mxu0 %v189
  %401 = vmatprep.subr.bf16.mxu0 0
  %402 = vmatpush2.bf16.msra.mxu0 %v204
  %403 = vmatprep.subr.bf16.mxu0 0
  %404 = vmatpush2.bf16.msra.mxu0 %v203
  %405 = vmatprep.subr.bf16.mxu0 0
  %406 = vmatpush2.bf16.msra.mxu0 %v202
  %407 = vmatprep.subr.bf16.mxu0 0
  %408 = vmatpush2.bf16.msra.mxu0 %v201
  %409 = vmatprep.subr.bf16.mxu0 0
  %410 = vmatpush2.bf16.msra.mxu0 %v200
  %411 = vmatprep.subr.bf16.mxu0 0
  %412 = vmatpush2.bf16.msra.mxu0 %v199
  %413 = vmatprep.subr.bf16.mxu0 0
  %414 = vmatpush2.bf16.msra.mxu0 %v198
  %415 = vmatprep.subr.bf16.mxu0 0
  %416 = vmatpush2.bf16.msra.mxu0 %v197
  %417 = vmatprep.mubr.bf16.mxu0 %v314
  %418 = vmatmul.mubr.bf16.gmra.mxu0 %v313
  %v419 = vpop.f32.mrf.mxu0
  %v420 = vadd.f32 0.0, %v419
  %v421 = vpop.f32.mrf.mxu0
  %v422 = vpop.f32.mrf.mxu0
  %v423 = vadd.f32 0.0, %v422
  %v424 = vpop.f32.mrf.mxu0
  %425 = vmatprep.mubr.bf16.mxu0 %v316
  %426 = vmatmul.mubr.bf16.gmra.mxu0 %v315
  %v427 = vpop.f32.mrf.mxu0
  %v428 = vadd.f32 0.0, %v427
  %v429 = vpop.f32.mrf.mxu0
  %v430 = vpop.f32.mrf.mxu0
  %v431 = vadd.f32 0.0, %v430
  %v432 = vpop.f32.mrf.mxu0
  %433 = vmatprep.mubr.bf16.mxu0 %v318
  %434 = vmatmul.mubr.bf16.gmra.mxu0 %v317
  %v435 = vpop.f32.mrf.mxu0
  %v436 = vadd.f32 0.0, %v435
  %v437 = vpop.f32.mrf.mxu0
  %v438 = vpop.f32.mrf.mxu0
  %v439 = vadd.f32 0.0, %v438
  %v440 = vpop.f32.mrf.mxu0
  %441 = vmatprep.mubr.bf16.mxu0 %v320
  %442 = vmatmul.mubr.bf16.gmra.mxu0 %v319
  %v443 = vpop.f32.mrf.mxu0
  %v444 = vadd.f32 0.0, %v443
  %v445 = vpop.f32.mrf.mxu0
  %v446 = vpop.f32.mrf.mxu0
  %v447 = vadd.f32 0.0, %v446
  %v448 = vpop.f32.mrf.mxu0
  %449 = vmatprep.mubr.bf16.mxu0 %v322
  %450 = vmatmul.mubr.bf16.gmra.mxu0 %v321
  %v451 = vpop.f32.mrf.mxu0
  %v452 = vadd.f32 0.0, %v451
  %v453 = vpop.f32.mrf.mxu0
  %v454 = vpop.f32.mrf.mxu0
  %v455 = vadd.f32 0.0, %v454
  %v456 = vpop.f32.mrf.mxu0
  %457 = vmatprep.mubr.bf16.mxu0 %v324
  %458 = vmatmul.mubr.bf16.gmra.mxu0 %v323
  %v459 = vpop.f32.mrf.mxu0
  %v460 = vadd.f32 0.0, %v459
  %v461 = vpop.f32.mrf.mxu0
  %v462 = vpop.f32.mrf.mxu0
  %v463 = vadd.f32 0.0, %v462
  %v464 = vpop.f32.mrf.mxu0
  %465 = vmatprep.mubr.bf16.mxu0 %v326
  %466 = vmatmul.mubr.bf16.gmra.mxu0 %v325
  %v467 = vpop.f32.mrf.mxu0
  %v468 = vadd.f32 0.0, %v467
  %v469 = vpop.f32.mrf.mxu0
  %v470 = vpop.f32.mrf.mxu0
  %v471 = vadd.f32 0.0, %v470
  %v472 = vpop.f32.mrf.mxu0
  %473 = vmatprep.mubr.bf16.mxu0 %v328
  %474 = vmatmul.mubr.bf16.gmra.mxu0 %v327
  %v475 = vpop.f32.mrf.mxu0
  %v476 = vadd.f32 0.0, %v475
  %v477 = vpop.f32.mrf.mxu0
  %v478 = vpop.f32.mrf.mxu0
  %v479 = vadd.f32 0.0, %v478
  %v480 = vpop.f32.mrf.mxu0
  %481 = vmatprep.mubr.bf16.mxu0 %v330
  %482 = vmatmul.mubr.bf16.gmra.mxu0 %v329
  %v483 = vpop.f32.mrf.mxu0
  %v484 = vadd.f32 0.0, %v483
  %v485 = vpop.f32.mrf.mxu0
  %v486 = vpop.f32.mrf.mxu0
  %v487 = vadd.f32 0.0, %v486
  %v488 = vpop.f32.mrf.mxu0
  %489 = vmatprep.mubr.bf16.mxu0 %v332
  %490 = vmatmul.mubr.bf16.gmra.mxu0 %v331
  %v491 = vpop.f32.mrf.mxu0
  %v492 = vadd.f32 0.0, %v491
  %v493 = vpop.f32.mrf.mxu0
  %v494 = vpop.f32.mrf.mxu0
  %v495 = vadd.f32 0.0, %v494
  %v496 = vpop.f32.mrf.mxu0
  %497 = vmatprep.mubr.bf16.mxu0 %v334
  %498 = vmatmul.mubr.bf16.gmra.mxu0 %v333
  %v499 = vpop.f32.mrf.mxu0
  %v500 = vadd.f32 0.0, %v499
  %v501 = vpop.f32.mrf.mxu0
  %v502 = vpop.f32.mrf.mxu0
  %v503 = vadd.f32 0.0, %v502
  %v504 = vpop.f32.mrf.mxu0
  %505 = vmatprep.mubr.bf16.mxu0 %v336
  %506 = vmatmul.mubr.bf16.gmra.mxu0 %v335
  %v507 = vpop.f32.mrf.mxu0
  %v508 = vadd.f32 0.0, %v507
  %v509 = vpop.f32.mrf.mxu0
  %v510 = vpop.f32.mrf.mxu0
  %v511 = vadd.f32 0.0, %v510
  %v512 = vpop.f32.mrf.mxu0
  %513 = vmatprep.mubr.bf16.mxu0 %v338
  %514 = vmatmul.mubr.bf16.gmra.mxu0 %v337
  %v515 = vpop.f32.mrf.mxu0
  %v516 = vadd.f32 0.0, %v515
  %v517 = vpop.f32.mrf.mxu0
  %v518 = vpop.f32.mrf.mxu0
  %v519 = vadd.f32 0.0, %v518
  %v520 = vpop.f32.mrf.mxu0
  %521 = vmatprep.mubr.bf16.mxu0 %v340
  %522 = vmatmul.mubr.bf16.gmra.mxu0 %v339
  %v523 = vpop.f32.mrf.mxu0
  %v524 = vadd.f32 0.0, %v523
  %v525 = vpop.f32.mrf.mxu0
  %v526 = vpop.f32.mrf.mxu0
  %v527 = vadd.f32 0.0, %v526
  %v528 = vpop.f32.mrf.mxu0
  %529 = vmatprep.mubr.bf16.mxu0 %v342
  %530 = vmatmul.mubr.bf16.gmra.mxu0 %v341
  %v531 = vpop.f32.mrf.mxu0
  %v532 = vadd.f32 0.0, %v531
  %v533 = vpop.f32.mrf.mxu0
  %v534 = vpop.f32.mrf.mxu0
  %v535 = vadd.f32 0.0, %v534
  %v536 = vpop.f32.mrf.mxu0
  %537 = vmatprep.mubr.bf16.mxu0 %v344
  %538 = vmatmul.mubr.bf16.gmra.mxu0 %v343
  %v539 = vpop.f32.mrf.mxu0
  %v540 = vadd.f32 0.0, %v539
  %v541 = vpop.f32.mrf.mxu0
  %v542 = vpop.f32.mrf.mxu0
  %v543 = vadd.f32 0.0, %v542
  %v544 = vpop.f32.mrf.mxu0
  %545 = vmatprep.mubr.bf16.mxu0 %v346
  %546 = vmatmul.mubr.bf16.gmra.mxu0 %v345
  %v547 = vpop.f32.mrf.mxu0
  %v548 = vadd.f32 0.0, %v547
  %v549 = vpop.f32.mrf.mxu0
  %v550 = vpop.f32.mrf.mxu0
  %v551 = vadd.f32 0.0, %v550
  %v552 = vpop.f32.mrf.mxu0
  %553 = vmatprep.mubr.bf16.mxu0 %v348
  %554 = vmatmul.mubr.bf16.gmra.mxu0 %v347
  %v555 = vpop.f32.mrf.mxu0
  %v556 = vadd.f32 0.0, %v555
  %v557 = vpop.f32.mrf.mxu0
  %v558 = vpop.f32.mrf.mxu0
  %v559 = vadd.f32 0.0, %v558
  %v560 = vpop.f32.mrf.mxu0
  %561 = vdwg.mxu0
  %v562 = vmul.f32 %v420, %v121
  %v563 = vmul.f32 %v423, %v122
  %v564 = vmul.f32 %v428, %v123
  %v565 = vmul.f32 %v431, %v124
  %v566 = vmul.f32 %v436, %v125
  %v567 = vmul.f32 %v439, %v126
  %v568 = vmul.f32 %v444, %v127
  %v569 = vmul.f32 %v447, %v128
  %v570 = vmul.f32 %v452, %v129
  %v571 = vmul.f32 %v455, %v130
  %v572 = vmul.f32 %v460, %v131
  %v573 = vmul.f32 %v463, %v132
  %v574 = vmul.f32 %v468, %v133
  %v575 = vmul.f32 %v471, %v134
  %v576 = vmul.f32 %v476, %v135
  %v577 = vmul.f32 %v479, %v136
  %v578 = vmul.f32 %v484, %v137
  %v579 = vmul.f32 %v487, %v138
  %v580 = vmul.f32 %v492, %v139
  %v581 = vmul.f32 %v495, %v140
  %v582 = vmul.f32 %v500, %v141
  %v583 = vmul.f32 %v503, %v142
  %v584 = vmul.f32 %v508, %v143
  %v585 = vmul.f32 %v511, %v144
  %v586 = vmul.f32 %v516, %v145
  %v587 = vmul.f32 %v519, %v146
  %v588 = vmul.f32 %v524, %v147
  %v589 = vmul.f32 %v527, %v148
  %v590 = vmul.f32 %v532, %v149
  %v591 = vmul.f32 %v535, %v150
  %v592 = vmul.f32 %v540, %v151
  %v593 = vmul.f32 %v543, %v152
  %v594 = vmul.f32 %v548, %v153
  %v595 = vmul.f32 %v551, %v154
  %v596 = vmul.f32 %v556, %v155
  %v597 = vmul.f32 %v559, %v156
  %v598 = vsub.f32 %v562, %v580
  %v599 = vsub.f32 %v563, %v581
  %v600 = vsub.f32 %v564, %v582
  %v601 = vsub.f32 %v565, %v583
  %v602 = vsub.f32 %v566, %v584
  %v603 = vsub.f32 %v567, %v585
  %v604 = vsub.f32 %v568, %v586
  %v605 = vsub.f32 %v569, %v587
  %v606 = vsub.f32 %v570, %v588
  %v607 = vsub.f32 %v571, %v589
  %v608 = vsub.f32 %v572, %v590
  %v609 = vsub.f32 %v573, %v591
  %v610 = vsub.f32 %v574, %v592
  %v611 = vsub.f32 %v575, %v593
  %v612 = vsub.f32 %v576, %v594
  %v613 = vsub.f32 %v577, %v595
  %v614 = vsub.f32 %v578, %v596
  %v615 = vsub.f32 %v579, %v597
  %v616 = vpack.c.bf16 %v599, %v598
  %v617 = vpack.c.bf16 %v601, %v600
  %v618 = vpack.c.bf16 %v603, %v602
  %v619 = vpack.c.bf16 %v605, %v604
  %v620 = vpack.c.bf16 %v607, %v606
  %v621 = vpack.c.bf16 %v609, %v608
  %v622 = vpack.c.bf16 %v611, %v610
  %v623 = vpack.c.bf16 %v613, %v612
  %v624 = vpack.c.bf16 %v615, %v614
  %v625 = vmul.f32 %v420, %v139
  %v626 = vmul.f32 %v423, %v140
  %v627 = vmul.f32 %v428, %v141
  %v628 = vmul.f32 %v431, %v142
  %v629 = vmul.f32 %v436, %v143
  %v630 = vmul.f32 %v439, %v144
  %v631 = vmul.f32 %v444, %v145
  %v632 = vmul.f32 %v447, %v146
  %v633 = vmul.f32 %v452, %v147
  %v634 = vmul.f32 %v455, %v148
  %v635 = vmul.f32 %v460, %v149
  %v636 = vmul.f32 %v463, %v150
  %v637 = vmul.f32 %v468, %v151
  %v638 = vmul.f32 %v471, %v152
  %v639 = vmul.f32 %v476, %v153
  %v640 = vmul.f32 %v479, %v154
  %v641 = vmul.f32 %v484, %v155
  %v642 = vmul.f32 %v487, %v156
  %v643 = vmul.f32 %v492, %v121
  %v644 = vmul.f32 %v495, %v122
  %v645 = vmul.f32 %v500, %v123
  %v646 = vmul.f32 %v503, %v124
  %v647 = vmul.f32 %v508, %v125
  %v648 = vmul.f32 %v511, %v126
  %v649 = vmul.f32 %v516, %v127
  %v650 = vmul.f32 %v519, %v128
  %v651 = vmul.f32 %v524, %v129
  %v652 = vmul.f32 %v527, %v130
  %v653 = vmul.f32 %v532, %v131
  %v654 = vmul.f32 %v535, %v132
  %v655 = vmul.f32 %v540, %v133
  %v656 = vmul.f32 %v543, %v134
  %v657 = vmul.f32 %v548, %v135
  %v658 = vmul.f32 %v551, %v136
  %v659 = vmul.f32 %v556, %v137
  %v660 = vmul.f32 %v559, %v138
  %v661 = vadd.f32 %v625, %v643
  %v662 = vadd.f32 %v626, %v644
  %v663 = vadd.f32 %v627, %v645
  %v664 = vadd.f32 %v628, %v646
  %v665 = vadd.f32 %v629, %v647
  %v666 = vadd.f32 %v630, %v648
  %v667 = vadd.f32 %v631, %v649
  %v668 = vadd.f32 %v632, %v650
  %v669 = vadd.f32 %v633, %v651
  %v670 = vadd.f32 %v634, %v652
  %v671 = vadd.f32 %v635, %v653
  %v672 = vadd.f32 %v636, %v654
  %v673 = vadd.f32 %v637, %v655
  %v674 = vadd.f32 %v638, %v656
  %v675 = vadd.f32 %v639, %v657
  %v676 = vadd.f32 %v640, %v658
  %v677 = vadd.f32 %v641, %v659
  %v678 = vadd.f32 %v642, %v660
  %v679 = vpack.c.bf16 %v662, %v661
  %v680 = vpack.c.bf16 %v664, %v663
  %v681 = vpack.c.bf16 %v666, %v665
  %v682 = vpack.c.bf16 %v668, %v667
  %v683 = vpack.c.bf16 %v670, %v669
  %v684 = vpack.c.bf16 %v672, %v671
  %v685 = vpack.c.bf16 %v674, %v673
  %v686 = vpack.c.bf16 %v676, %v675
  %v687 = vpack.c.bf16 %v678, %v677
  %v752 = vunpack.c.l.b16 %v57
  %v753 = vunpack.c.h.b16 %v57
  %v754 = vunpack.c.l.b16 %v58
  %v755 = vunpack.c.l.b16 %v59
  %v756 = vunpack.c.h.b16 %v59
  %v757 = vunpack.c.l.b16 %v60
  %v758 = vunpack.c.l.b16 %v61
  %v759 = vunpack.c.h.b16 %v61
  %v760 = vunpack.c.l.b16 %v62
  %v761 = vunpack.c.l.b16 %v63
  %v762 = vunpack.c.h.b16 %v63
  %v763 = vunpack.c.l.b16 %v64
  %v764 = vunpack.c.l.b16 %v65
  %v765 = vunpack.c.h.b16 %v65
  %v766 = vunpack.c.l.b16 %v66
  %v767 = vunpack.c.l.b16 %v67
  %v768 = vunpack.c.h.b16 %v67
  %v769 = vunpack.c.l.b16 %v68
  %v770 = vunpack.c.l.b16 %v69
  %v771 = vunpack.c.h.b16 %v69
  %v772 = vunpack.c.l.b16 %v70
  %v773 = vunpack.c.l.b16 %v71
  %v774 = vunpack.c.h.b16 %v71
  %v775 = vunpack.c.l.b16 %v72
  %v776 = vunpack.c.l.b16 %v73
  %v777 = vunpack.c.h.b16 %v73
  %v778 = vunpack.c.l.b16 %v74
  %v779 = vunpack.c.l.b16 %v75
  %v780 = vunpack.c.h.b16 %v75
  %v781 = vunpack.c.l.b16 %v76
  %v782 = vunpack.c.l.b16 %v77
  %v783 = vunpack.c.h.b16 %v77
  %v784 = vunpack.c.l.b16 %v78
  %v785 = vunpack.c.l.b16 %v79
  %v786 = vunpack.c.h.b16 %v79
  %v787 = vunpack.c.l.b16 %v80
  %v788 = vunpack.c.l.b16 %v81
  %v789 = vunpack.c.h.b16 %v81
  %v790 = vunpack.c.l.b16 %v82
  %v791 = vunpack.c.l.b16 %v83
  %v792 = vunpack.c.h.b16 %v83
  %v793 = vunpack.c.l.b16 %v84
  %v794 = vunpack.c.l.b16 %v85
  %v795 = vunpack.c.h.b16 %v85
  %v796 = vunpack.c.l.b16 %v86
  %v797 = vunpack.c.l.b16 %v87
  %v798 = vunpack.c.h.b16 %v87
  %v799 = vunpack.c.l.b16 %v88
  %v800 = vunpack.c.l.b16 %v89
  %v801 = vunpack.c.h.b16 %v89
  %v802 = vunpack.c.l.b16 %v90
  %v803 = vunpack.c.l.b16 %v91
  %v804 = vunpack.c.h.b16 %v91
  %v805 = vunpack.c.l.b16 %v92
  %v806 = vunpack.c.l.b16 %v93
  %v807 = vunpack.c.h.b16 %v93
  %v808 = vunpack.c.l.b16 %v94
  %v809 = vunpack.c.l.b16 %v95
  %v810 = vunpack.c.h.b16 %v95
  %v811 = vunpack.c.l.b16 %v96
  %v812 = vunpack.c.l.b16 %v97
  %v813 = vunpack.c.h.b16 %v97
  %v814 = vunpack.c.l.b16 %v98
  %v815 = vunpack.c.l.b16 %v99
  %v816 = vunpack.c.h.b16 %v99
  %v817 = vunpack.c.l.b16 %v100
  %v818 = vunpack.c.l.b16 %v101
  %v819 = vunpack.c.h.b16 %v101
  %v820 = vunpack.c.l.b16 %v102
  %v821 = vunpack.c.l.b16 %v103
  %v822 = vunpack.c.h.b16 %v103
  %v823 = vunpack.c.l.b16 %v104
  %v824 = vunpack.c.l.b16 %v105
  %v825 = vunpack.c.h.b16 %v105
  %v826 = vunpack.c.l.b16 %v106
  %v827 = vunpack.c.l.b16 %v107
  %v828 = vunpack.c.h.b16 %v107
  %v829 = vunpack.c.l.b16 %v108
  %v830 = vunpack.c.l.b16 %v109
  %v831 = vunpack.c.h.b16 %v109
  %v832 = vunpack.c.l.b16 %v110
  %v833 = vunpack.c.l.b16 %v111
  %v834 = vunpack.c.h.b16 %v111
  %v835 = vunpack.c.l.b16 %v112
  %v836 = vunpack.c.l.b16 %v113
  %v837 = vunpack.c.h.b16 %v113
  %v838 = vunpack.c.l.b16 %v114
  %v839 = vunpack.c.l.b16 %v115
  %v840 = vunpack.c.h.b16 %v115
  %v841 = vunpack.c.l.b16 %v116
  %v842 = vunpack.c.l.b16 %v117
  %v843 = vunpack.c.h.b16 %v117
  %v844 = vunpack.c.l.b16 %v118
  %v845 = vunpack.c.l.b16 %v119
  %v846 = vunpack.c.h.b16 %v119
  %v847 = vunpack.c.l.b16 %v120
  %v848 = vpack.c.b16 %v755, %v752
  %v849 = vpack.c.b16 %v756, %v753
  %v850 = vpack.c.b16 %v757, %v754
  %v851 = vpack.c.b16 %v761, %v758
  %v852 = vpack.c.b16 %v762, %v759
  %v853 = vpack.c.b16 %v763, %v760
  %v854 = vpack.c.b16 %v767, %v764
  %v855 = vpack.c.b16 %v768, %v765
  %v856 = vpack.c.b16 %v769, %v766
  %v857 = vpack.c.b16 %v773, %v770
  %v858 = vpack.c.b16 %v774, %v771
  %v859 = vpack.c.b16 %v775, %v772
  %v860 = vpack.c.b16 %v779, %v776
  %v861 = vpack.c.b16 %v780, %v777
  %v862 = vpack.c.b16 %v781, %v778
  %v863 = vpack.c.b16 %v785, %v782
  %v864 = vpack.c.b16 %v786, %v783
  %v865 = vpack.c.b16 %v787, %v784
  %v866 = vpack.c.b16 %v791, %v788
  %v867 = vpack.c.b16 %v792, %v789
  %v868 = vpack.c.b16 %v793, %v790
  %v869 = vpack.c.b16 %v797, %v794
  %v870 = vpack.c.b16 %v798, %v795
  %v871 = vpack.c.b16 %v799, %v796
  %v872 = vpack.c.b16 %v803, %v800
  %v873 = vpack.c.b16 %v804, %v801
  %v874 = vpack.c.b16 %v805, %v802
  %v875 = vpack.c.b16 %v809, %v806
  %v876 = vpack.c.b16 %v810, %v807
  %v877 = vpack.c.b16 %v811, %v808
  %v878 = vpack.c.b16 %v815, %v812
  %v879 = vpack.c.b16 %v816, %v813
  %v880 = vpack.c.b16 %v817, %v814
  %v881 = vpack.c.b16 %v821, %v818
  %v882 = vpack.c.b16 %v822, %v819
  %v883 = vpack.c.b16 %v823, %v820
  %v884 = vpack.c.b16 %v827, %v824
  %v885 = vpack.c.b16 %v828, %v825
  %v886 = vpack.c.b16 %v829, %v826
  %v887 = vpack.c.b16 %v833, %v830
  %v888 = vpack.c.b16 %v834, %v831
  %v889 = vpack.c.b16 %v835, %v832
  %v890 = vpack.c.b16 %v839, %v836
  %v891 = vpack.c.b16 %v840, %v837
  %v892 = vpack.c.b16 %v841, %v838
  %v893 = vpack.c.b16 %v845, %v842
  %v894 = vpack.c.b16 %v846, %v843
  %v895 = vpack.c.b16 %v847, %v844
  %vm928 = vcmask 261120
  %v930 = vsel %vm928, %v850, 0
  %v933 = vsel %vm928, %v853, 0
  %v936 = vsel %vm928, %v856, 0
  %v939 = vsel %vm928, %v859, 0
  %v942 = vsel %vm928, %v862, 0
  %v945 = vsel %vm928, %v865, 0
  %v948 = vsel %vm928, %v868, 0
  %v951 = vsel %vm928, %v871, 0
  %v954 = vsel %vm928, %v874, 0
  %v957 = vsel %vm928, %v877, 0
  %v960 = vsel %vm928, %v880, 0
  %v963 = vsel %vm928, %v883, 0
  %v966 = vsel %vm928, %v886, 0
  %v969 = vsel %vm928, %v889, 0
  %v972 = vsel %vm928, %v892, 0
  %v975 = vsel %vm928, %v895, 0
  %977 = vmatprep.subr.bf16.mxu0 0
  %978 = vmatpush1.bf16.msra.mxu0 %v623
  %979 = vmatprep.subr.bf16.mxu0 0
  %980 = vmatpush1.bf16.msra.mxu0 %v622
  %981 = vmatprep.subr.bf16.mxu0 0
  %982 = vmatpush1.bf16.msra.mxu0 %v621
  %983 = vmatprep.subr.bf16.mxu0 0
  %984 = vmatpush1.bf16.msra.mxu0 %v620
  %985 = vmatprep.subr.bf16.mxu0 0
  %986 = vmatpush1.bf16.msra.mxu0 %v619
  %987 = vmatprep.subr.bf16.mxu0 0
  %988 = vmatpush1.bf16.msra.mxu0 %v618
  %989 = vmatprep.subr.bf16.mxu0 0
  %990 = vmatpush1.bf16.msra.mxu0 %v617
  %991 = vmatprep.subr.bf16.mxu0 0
  %992 = vmatpush1.bf16.msra.mxu0 %v616
  %993 = vmatprep.subr.bf16.mxu0 0
  %994 = vmatpush2.bf16.msra.mxu0 %v685
  %995 = vmatprep.subr.bf16.mxu0 0
  %996 = vmatpush2.bf16.msra.mxu0 %v684
  %997 = vmatprep.subr.bf16.mxu0 0
  %998 = vmatpush2.bf16.msra.mxu0 %v683
  %999 = vmatprep.subr.bf16.mxu0 0
  %1000 = vmatpush2.bf16.msra.mxu0 %v682
  %1001 = vmatprep.subr.bf16.mxu0 0
  %1002 = vmatpush2.bf16.msra.mxu0 %v681
  %1003 = vmatprep.subr.bf16.mxu0 0
  %1004 = vmatpush2.bf16.msra.mxu0 %v680
  %1005 = vmatprep.subr.bf16.mxu0 0
  %1006 = vmatpush2.bf16.msra.mxu0 %v679
  %1007 = vmatprep.subr.bf16.mxu0 0
  %1008 = vmatpush2.bf16.msra.mxu0 %v624
  %1009 = vmatprep.mubr.bf16.mxu0 %v849
  %1010 = vmatmul.mubr.bf16.gmra.mxu0 %v848
  %v1011 = vpop.f32.mrf.mxu0
  %v1012 = vadd.f32 0.0, %v1011
  %v1013 = vpop.f32.mrf.mxu0
  %v1014 = vpop.f32.mrf.mxu0
  %v1015 = vadd.f32 0.0, %v1014
  %v1016 = vpop.f32.mrf.mxu0
  %1017 = vmatprep.mubr.bf16.mxu0 %v852
  %1018 = vmatmul.mubr.bf16.gmra.mxu0 %v851
  %v1019 = vpop.f32.mrf.mxu0
  %v1020 = vadd.f32 0.0, %v1019
  %v1021 = vpop.f32.mrf.mxu0
  %v1022 = vpop.f32.mrf.mxu0
  %v1023 = vadd.f32 0.0, %v1022
  %v1024 = vpop.f32.mrf.mxu0
  %1025 = vmatprep.mubr.bf16.mxu0 %v855
  %1026 = vmatmul.mubr.bf16.gmra.mxu0 %v854
  %v1027 = vpop.f32.mrf.mxu0
  %v1028 = vadd.f32 0.0, %v1027
  %v1029 = vpop.f32.mrf.mxu0
  %v1030 = vpop.f32.mrf.mxu0
  %v1031 = vadd.f32 0.0, %v1030
  %v1032 = vpop.f32.mrf.mxu0
  %1033 = vmatprep.mubr.bf16.mxu0 %v858
  %1034 = vmatmul.mubr.bf16.gmra.mxu0 %v857
  %v1035 = vpop.f32.mrf.mxu0
  %v1036 = vadd.f32 0.0, %v1035
  %v1037 = vpop.f32.mrf.mxu0
  %v1038 = vpop.f32.mrf.mxu0
  %v1039 = vadd.f32 0.0, %v1038
  %v1040 = vpop.f32.mrf.mxu0
  %1041 = vmatprep.mubr.bf16.mxu0 %v861
  %1042 = vmatmul.mubr.bf16.gmra.mxu0 %v860
  %v1043 = vpop.f32.mrf.mxu0
  %v1044 = vadd.f32 0.0, %v1043
  %v1045 = vpop.f32.mrf.mxu0
  %v1046 = vpop.f32.mrf.mxu0
  %v1047 = vadd.f32 0.0, %v1046
  %v1048 = vpop.f32.mrf.mxu0
  %1049 = vmatprep.mubr.bf16.mxu0 %v864
  %1050 = vmatmul.mubr.bf16.gmra.mxu0 %v863
  %v1051 = vpop.f32.mrf.mxu0
  %v1052 = vadd.f32 0.0, %v1051
  %v1053 = vpop.f32.mrf.mxu0
  %v1054 = vpop.f32.mrf.mxu0
  %v1055 = vadd.f32 0.0, %v1054
  %v1056 = vpop.f32.mrf.mxu0
  %1057 = vmatprep.mubr.bf16.mxu0 %v867
  %1058 = vmatmul.mubr.bf16.gmra.mxu0 %v866
  %v1059 = vpop.f32.mrf.mxu0
  %v1060 = vadd.f32 0.0, %v1059
  %v1061 = vpop.f32.mrf.mxu0
  %v1062 = vpop.f32.mrf.mxu0
  %v1063 = vadd.f32 0.0, %v1062
  %v1064 = vpop.f32.mrf.mxu0
  %1065 = vmatprep.mubr.bf16.mxu0 %v870
  %1066 = vmatmul.mubr.bf16.gmra.mxu0 %v869
  %v1067 = vpop.f32.mrf.mxu0
  %v1068 = vadd.f32 0.0, %v1067
  %v1069 = vpop.f32.mrf.mxu0
  %v1070 = vpop.f32.mrf.mxu0
  %v1071 = vadd.f32 0.0, %v1070
  %v1072 = vpop.f32.mrf.mxu0
  %1073 = vmatprep.mubr.bf16.mxu0 %v873
  %1074 = vmatmul.mubr.bf16.gmra.mxu0 %v872
  %v1075 = vpop.f32.mrf.mxu0
  %v1076 = vadd.f32 0.0, %v1075
  %v1077 = vpop.f32.mrf.mxu0
  %v1078 = vpop.f32.mrf.mxu0
  %v1079 = vadd.f32 0.0, %v1078
  %v1080 = vpop.f32.mrf.mxu0
  %1081 = vmatprep.mubr.bf16.mxu0 %v876
  %1082 = vmatmul.mubr.bf16.gmra.mxu0 %v875
  %v1083 = vpop.f32.mrf.mxu0
  %v1084 = vadd.f32 0.0, %v1083
  %v1085 = vpop.f32.mrf.mxu0
  %v1086 = vpop.f32.mrf.mxu0
  %v1087 = vadd.f32 0.0, %v1086
  %v1088 = vpop.f32.mrf.mxu0
  %1089 = vmatprep.mubr.bf16.mxu0 %v879
  %1090 = vmatmul.mubr.bf16.gmra.mxu0 %v878
  %v1091 = vpop.f32.mrf.mxu0
  %v1092 = vadd.f32 0.0, %v1091
  %v1093 = vpop.f32.mrf.mxu0
  %v1094 = vpop.f32.mrf.mxu0
  %v1095 = vadd.f32 0.0, %v1094
  %v1096 = vpop.f32.mrf.mxu0
  %1097 = vmatprep.mubr.bf16.mxu0 %v882
  %1098 = vmatmul.mubr.bf16.gmra.mxu0 %v881
  %v1099 = vpop.f32.mrf.mxu0
  %v1100 = vadd.f32 0.0, %v1099
  %v1101 = vpop.f32.mrf.mxu0
  %v1102 = vpop.f32.mrf.mxu0
  %v1103 = vadd.f32 0.0, %v1102
  %v1104 = vpop.f32.mrf.mxu0
  %1105 = vmatprep.mubr.bf16.mxu0 %v885
  %1106 = vmatmul.mubr.bf16.gmra.mxu0 %v884
  %v1107 = vpop.f32.mrf.mxu0
  %v1108 = vadd.f32 0.0, %v1107
  %v1109 = vpop.f32.mrf.mxu0
  %v1110 = vpop.f32.mrf.mxu0
  %v1111 = vadd.f32 0.0, %v1110
  %v1112 = vpop.f32.mrf.mxu0
  %1113 = vmatprep.mubr.bf16.mxu0 %v888
  %1114 = vmatmul.mubr.bf16.gmra.mxu0 %v887
  %v1115 = vpop.f32.mrf.mxu0
  %v1116 = vadd.f32 0.0, %v1115
  %v1117 = vpop.f32.mrf.mxu0
  %v1118 = vpop.f32.mrf.mxu0
  %v1119 = vadd.f32 0.0, %v1118
  %v1120 = vpop.f32.mrf.mxu0
  %1121 = vmatprep.mubr.bf16.mxu0 %v891
  %1122 = vmatmul.mubr.bf16.gmra.mxu0 %v890
  %v1123 = vpop.f32.mrf.mxu0
  %v1124 = vadd.f32 0.0, %v1123
  %v1125 = vpop.f32.mrf.mxu0
  %v1126 = vpop.f32.mrf.mxu0
  %v1127 = vadd.f32 0.0, %v1126
  %v1128 = vpop.f32.mrf.mxu0
  %1129 = vmatprep.mubr.bf16.mxu0 %v894
  %1130 = vmatmul.mubr.bf16.gmra.mxu0 %v893
  %v1131 = vpop.f32.mrf.mxu0
  %v1132 = vadd.f32 0.0, %v1131
  %v1133 = vpop.f32.mrf.mxu0
  %v1134 = vpop.f32.mrf.mxu0
  %v1135 = vadd.f32 0.0, %v1134
  %v1136 = vpop.f32.mrf.mxu0
  %1137 = vdwg.mxu0
  %1138 = vmatprep.subr.bf16.mxu0 0
  %1139 = vmatpush1.bf16.msra.mxu0 0
  %1140 = vmatprep.subr.bf16.mxu0 0
  %1141 = vmatpush1.bf16.msra.mxu0 0
  %1142 = vmatprep.subr.bf16.mxu0 0
  %1143 = vmatpush1.bf16.msra.mxu0 0
  %1144 = vmatprep.subr.bf16.mxu0 0
  %1145 = vmatpush1.bf16.msra.mxu0 0
  %1146 = vmatprep.subr.bf16.mxu0 0
  %1147 = vmatpush1.bf16.msra.mxu0 0
  %1148 = vmatprep.subr.bf16.mxu0 0
  %1149 = vmatpush1.bf16.msra.mxu0 0
  %1150 = vmatprep.subr.bf16.mxu0 0
  %1151 = vmatpush1.bf16.msra.mxu0 %v687
  %1152 = vmatprep.subr.bf16.mxu0 0
  %1153 = vmatpush1.bf16.msra.mxu0 %v686
  %1154 = vmatprep.subr.bf16.mxu0 0
  %1155 = vmatpush2.bf16.msra.mxu0 0
  %1156 = vmatprep.subr.bf16.mxu0 0
  %1157 = vmatpush2.bf16.msra.mxu0 0
  %1158 = vmatprep.subr.bf16.mxu0 0
  %1159 = vmatpush2.bf16.msra.mxu0 0
  %1160 = vmatprep.subr.bf16.mxu0 0
  %1161 = vmatpush2.bf16.msra.mxu0 0
  %1162 = vmatprep.subr.bf16.mxu0 0
  %1163 = vmatpush2.bf16.msra.mxu0 0
  %1164 = vmatprep.subr.bf16.mxu0 0
  %1165 = vmatpush2.bf16.msra.mxu0 0
  %1166 = vmatprep.subr.bf16.mxu0 0
  %1167 = vmatpush2.bf16.msra.mxu0 0
  %1168 = vmatprep.subr.bf16.mxu0 0
  %1169 = vmatpush2.bf16.msra.mxu0 0
  %1170 = vmatprep.mubr.bf16.mxu0 0
  %1171 = vmatmul.mubr.bf16.gmra.mxu0 %v930
  %v1172 = vpop.f32.mrf.mxu0
  %v1173 = vadd.f32 %v1012, %v1172
  %v1174 = vpop.f32.mrf.mxu0
  %v1175 = vpop.f32.mrf.mxu0
  %v1176 = vadd.f32 %v1015, %v1175
  %v1177 = vpop.f32.mrf.mxu0
  %1178 = vmatprep.mubr.bf16.mxu0 0
  %1179 = vmatmul.mubr.bf16.gmra.mxu0 %v933
  %v1180 = vpop.f32.mrf.mxu0
  %v1181 = vadd.f32 %v1020, %v1180
  %v1182 = vpop.f32.mrf.mxu0
  %v1183 = vpop.f32.mrf.mxu0
  %v1184 = vadd.f32 %v1023, %v1183
  %v1185 = vpop.f32.mrf.mxu0
  %1186 = vmatprep.mubr.bf16.mxu0 0
  %1187 = vmatmul.mubr.bf16.gmra.mxu0 %v936
  %v1188 = vpop.f32.mrf.mxu0
  %v1189 = vadd.f32 %v1028, %v1188
  %v1190 = vpop.f32.mrf.mxu0
  %v1191 = vpop.f32.mrf.mxu0
  %v1192 = vadd.f32 %v1031, %v1191
  %v1193 = vpop.f32.mrf.mxu0
  %1194 = vmatprep.mubr.bf16.mxu0 0
  %1195 = vmatmul.mubr.bf16.gmra.mxu0 %v939
  %v1196 = vpop.f32.mrf.mxu0
  %v1197 = vadd.f32 %v1036, %v1196
  %v1198 = vpop.f32.mrf.mxu0
  %v1199 = vpop.f32.mrf.mxu0
  %v1200 = vadd.f32 %v1039, %v1199
  %v1201 = vpop.f32.mrf.mxu0
  %1202 = vmatprep.mubr.bf16.mxu0 0
  %1203 = vmatmul.mubr.bf16.gmra.mxu0 %v942
  %v1204 = vpop.f32.mrf.mxu0
  %v1205 = vadd.f32 %v1044, %v1204
  %v1206 = vpop.f32.mrf.mxu0
  %v1207 = vpop.f32.mrf.mxu0
  %v1208 = vadd.f32 %v1047, %v1207
  %v1209 = vpop.f32.mrf.mxu0
  %1210 = vmatprep.mubr.bf16.mxu0 0
  %1211 = vmatmul.mubr.bf16.gmra.mxu0 %v945
  %v1212 = vpop.f32.mrf.mxu0
  %v1213 = vadd.f32 %v1052, %v1212
  %v1214 = vpop.f32.mrf.mxu0
  %v1215 = vpop.f32.mrf.mxu0
  %v1216 = vadd.f32 %v1055, %v1215
  %v1217 = vpop.f32.mrf.mxu0
  %1218 = vmatprep.mubr.bf16.mxu0 0
  %1219 = vmatmul.mubr.bf16.gmra.mxu0 %v948
  %v1220 = vpop.f32.mrf.mxu0
  %v1221 = vadd.f32 %v1060, %v1220
  %v1222 = vpop.f32.mrf.mxu0
  %v1223 = vpop.f32.mrf.mxu0
  %v1224 = vadd.f32 %v1063, %v1223
  %v1225 = vpop.f32.mrf.mxu0
  %1226 = vmatprep.mubr.bf16.mxu0 0
  %1227 = vmatmul.mubr.bf16.gmra.mxu0 %v951
  %v1228 = vpop.f32.mrf.mxu0
  %v1229 = vadd.f32 %v1068, %v1228
  %v1230 = vpop.f32.mrf.mxu0
  %v1231 = vpop.f32.mrf.mxu0
  %v1232 = vadd.f32 %v1071, %v1231
  %v1233 = vpop.f32.mrf.mxu0
  %1234 = vmatprep.mubr.bf16.mxu0 0
  %1235 = vmatmul.mubr.bf16.gmra.mxu0 %v954
  %v1236 = vpop.f32.mrf.mxu0
  %v1237 = vadd.f32 %v1076, %v1236
  %v1238 = vpop.f32.mrf.mxu0
  %v1239 = vpop.f32.mrf.mxu0
  %v1240 = vadd.f32 %v1079, %v1239
  %v1241 = vpop.f32.mrf.mxu0
  %1242 = vmatprep.mubr.bf16.mxu0 0
  %1243 = vmatmul.mubr.bf16.gmra.mxu0 %v957
  %v1244 = vpop.f32.mrf.mxu0
  %v1245 = vadd.f32 %v1084, %v1244
  %v1246 = vpop.f32.mrf.mxu0
  %v1247 = vpop.f32.mrf.mxu0
  %v1248 = vadd.f32 %v1087, %v1247
  %v1249 = vpop.f32.mrf.mxu0
  %1250 = vmatprep.mubr.bf16.mxu0 0
  %1251 = vmatmul.mubr.bf16.gmra.mxu0 %v960
  %v1252 = vpop.f32.mrf.mxu0
  %v1253 = vadd.f32 %v1092, %v1252
  %v1254 = vpop.f32.mrf.mxu0
  %v1255 = vpop.f32.mrf.mxu0
  %v1256 = vadd.f32 %v1095, %v1255
  %v1257 = vpop.f32.mrf.mxu0
  %1258 = vmatprep.mubr.bf16.mxu0 0
  %1259 = vmatmul.mubr.bf16.gmra.mxu0 %v963
  %v1260 = vpop.f32.mrf.mxu0
  %v1261 = vadd.f32 %v1100, %v1260
  %v1262 = vpop.f32.mrf.mxu0
  %v1263 = vpop.f32.mrf.mxu0
  %v1264 = vadd.f32 %v1103, %v1263
  %v1265 = vpop.f32.mrf.mxu0
  %1266 = vmatprep.mubr.bf16.mxu0 0
  %1267 = vmatmul.mubr.bf16.gmra.mxu0 %v966
  %v1268 = vpop.f32.mrf.mxu0
  %v1269 = vadd.f32 %v1108, %v1268
  %v1270 = vpop.f32.mrf.mxu0
  %v1271 = vpop.f32.mrf.mxu0
  %v1272 = vadd.f32 %v1111, %v1271
  %v1273 = vpop.f32.mrf.mxu0
  %1274 = vmatprep.mubr.bf16.mxu0 0
  %1275 = vmatmul.mubr.bf16.gmra.mxu0 %v969
  %v1276 = vpop.f32.mrf.mxu0
  %v1277 = vadd.f32 %v1116, %v1276
  %v1278 = vpop.f32.mrf.mxu0
  %v1279 = vpop.f32.mrf.mxu0
  %v1280 = vadd.f32 %v1119, %v1279
  %v1281 = vpop.f32.mrf.mxu0
  %1282 = vmatprep.mubr.bf16.mxu0 0
  %1283 = vmatmul.mubr.bf16.gmra.mxu0 %v972
  %v1284 = vpop.f32.mrf.mxu0
  %v1285 = vadd.f32 %v1124, %v1284
  %v1286 = vpop.f32.mrf.mxu0
  %v1287 = vpop.f32.mrf.mxu0
  %v1288 = vadd.f32 %v1127, %v1287
  %v1289 = vpop.f32.mrf.mxu0
  %1290 = vmatprep.mubr.bf16.mxu0 0
  %1291 = vmatmul.mubr.bf16.gmra.mxu0 %v975
  %v1292 = vpop.f32.mrf.mxu0
  %v1293 = vadd.f32 %v1132, %v1292
  %v1294 = vpop.f32.mrf.mxu0
  %v1295 = vpop.f32.mrf.mxu0
  %v1296 = vadd.f32 %v1135, %v1295
  %v1297 = vpop.f32.mrf.mxu0
  %1298 = vdwg.mxu0
  %vm1299 = vcmask 31744
  %1300 = vst.msk [vmem:[%s5] sm:$0xff] %vm1299, %v1173
  %1301 = vst.msk [vmem:[%s5 + $0x8] sm:$0xff] %vm1299, %v1176
  %1302 = vst.msk [vmem:[%s5 + $0x10] sm:$0xff] %vm1299, %v1181
  %1303 = vst.msk [vmem:[%s5 + $0x18] sm:$0xff] %vm1299, %v1184
  %1304 = vst.msk [vmem:[%s5 + $0x20] sm:$0xff] %vm1299, %v1189
  %1305 = vst.msk [vmem:[%s5 + $0x28] sm:$0xff] %vm1299, %v1192
  %1306 = vst.msk [vmem:[%s5 + $0x30] sm:$0xff] %vm1299, %v1197
  %1307 = vst.msk [vmem:[%s5 + $0x38] sm:$0xff] %vm1299, %v1200
  %1308 = vst.msk [vmem:[%s5 + $0x40] sm:$0xff] %vm1299, %v1205
  %1309 = vst.msk [vmem:[%s5 + $0x48] sm:$0xff] %vm1299, %v1208
  %1310 = vst.msk [vmem:[%s5 + $0x50] sm:$0xff] %vm1299, %v1213
  %1311 = vst.msk [vmem:[%s5 + $0x58] sm:$0xff] %vm1299, %v1216
  %1312 = vst.msk [vmem:[%s5 + $0x60] sm:$0xff] %vm1299, %v1221
  %1313 = vst.msk [vmem:[%s5 + $0x68] sm:$0xff] %vm1299, %v1224
  %1314 = vst.msk [vmem:[%s5 + $0x70] sm:$0xff] %vm1299, %v1229
  %1315 = vst.msk [vmem:[%s5 + $0x78] sm:$0xff] %vm1299, %v1232
  %1316 = vst.msk [vmem:[%s5 + $0x80] sm:$0xff] %vm1299, %v1237
  %1317 = vst.msk [vmem:[%s5 + $0x88] sm:$0xff] %vm1299, %v1240
  %1318 = vst.msk [vmem:[%s5 + $0x90] sm:$0xff] %vm1299, %v1245
  %1319 = vst.msk [vmem:[%s5 + $0x98] sm:$0xff] %vm1299, %v1248
  %1320 = vst.msk [vmem:[%s5 + $0xa0] sm:$0xff] %vm1299, %v1253
  %1321 = vst.msk [vmem:[%s5 + $0xa8] sm:$0xff] %vm1299, %v1256
  %1322 = vst.msk [vmem:[%s5 + $0xb0] sm:$0xff] %vm1299, %v1261
  %1323 = vst.msk [vmem:[%s5 + $0xb8] sm:$0xff] %vm1299, %v1264
  %1324 = vst.msk [vmem:[%s5 + $0xc0] sm:$0xff] %vm1299, %v1269
  %1325 = vst.msk [vmem:[%s5 + $0xc8] sm:$0xff] %vm1299, %v1272
  %1326 = vst.msk [vmem:[%s5 + $0xd0] sm:$0xff] %vm1299, %v1277
  %1327 = vst.msk [vmem:[%s5 + $0xd8] sm:$0xff] %vm1299, %v1280
  %1328 = vst.msk [vmem:[%s5 + $0xe0] sm:$0xff] %vm1299, %v1285
  %1329 = vst.msk [vmem:[%s5 + $0xe8] sm:$0xff] %vm1299, %v1288
  %1330 = vst.msk [vmem:[%s5 + $0xf0] sm:$0xff] %vm1299, %v1293
  %1331 = vst.msk [vmem:[%s5 + $0xf8] sm:$0xff] %vm1299, %v1296
  %s1332 = scalar_lea.vmem %s0, 256
  %v1333 = vld [vmem:[%s1332] sm:$0xff]
  %v1334 = vld [vmem:[%s1332 + $0x8] sm:$0xff]
  %v1335 = vld [vmem:[%s1332 + $0x10] sm:$0xff]
  %v1336 = vld [vmem:[%s1332 + $0x18] sm:$0xff]
  %v1337 = vld [vmem:[%s1332 + $0x20] sm:$0xff]
  %v1338 = vld [vmem:[%s1332 + $0x28] sm:$0xff]
  %v1339 = vld [vmem:[%s1332 + $0x30] sm:$0xff]
  %v1340 = vld [vmem:[%s1332 + $0x38] sm:$0xff]
  %v1341 = vld [vmem:[%s1332 + $0x40] sm:$0xff]
  %v1342 = vld [vmem:[%s1332 + $0x48] sm:$0xff]
  %v1343 = vld [vmem:[%s1332 + $0x50] sm:$0xff]
  %v1344 = vld [vmem:[%s1332 + $0x58] sm:$0xff]
  %v1345 = vld [vmem:[%s1332 + $0x60] sm:$0xff]
  %v1346 = vld [vmem:[%s1332 + $0x68] sm:$0xff]
  %v1347 = vld [vmem:[%s1332 + $0x70] sm:$0xff]
  %v1348 = vld [vmem:[%s1332 + $0x78] sm:$0xff]
  %v1349 = vld [vmem:[%s1332 + $0x80] sm:$0xff]
  %v1350 = vld [vmem:[%s1332 + $0x88] sm:$0xff]
  %v1351 = vld [vmem:[%s1332 + $0x90] sm:$0xff]
  %v1352 = vld [vmem:[%s1332 + $0x98] sm:$0xff]
  %v1353 = vld [vmem:[%s1332 + $0xa0] sm:$0xff]
  %v1354 = vld [vmem:[%s1332 + $0xa8] sm:$0xff]
  %v1355 = vld [vmem:[%s1332 + $0xb0] sm:$0xff]
  %v1356 = vld [vmem:[%s1332 + $0xb8] sm:$0xff]
  %v1357 = vld [vmem:[%s1332 + $0xc0] sm:$0xff]
  %v1358 = vld [vmem:[%s1332 + $0xc8] sm:$0xff]
  %v1359 = vld [vmem:[%s1332 + $0xd0] sm:$0xff]
  %v1360 = vld [vmem:[%s1332 + $0xd8] sm:$0xff]
  %v1361 = vld [vmem:[%s1332 + $0xe0] sm:$0xff]
  %v1362 = vld [vmem:[%s1332 + $0xe8] sm:$0xff]
  %v1363 = vld [vmem:[%s1332 + $0xf0] sm:$0xff]
  %v1364 = vld [vmem:[%s1332 + $0xf8] sm:$0xff]
  %v1365 = vpack.c.bf16 %v1334, %v1333
  %v1366 = vpack.c.bf16 %v1336, %v1335
  %v1367 = vpack.c.bf16 %v1338, %v1337
  %v1368 = vpack.c.bf16 %v1340, %v1339
  %v1369 = vpack.c.bf16 %v1342, %v1341
  %v1370 = vpack.c.bf16 %v1344, %v1343
  %v1371 = vpack.c.bf16 %v1346, %v1345
  %v1372 = vpack.c.bf16 %v1348, %v1347
  %v1373 = vpack.c.bf16 %v1350, %v1349
  %v1374 = vpack.c.bf16 %v1352, %v1351
  %v1375 = vpack.c.bf16 %v1354, %v1353
  %v1376 = vpack.c.bf16 %v1356, %v1355
  %v1377 = vpack.c.bf16 %v1358, %v1357
  %v1378 = vpack.c.bf16 %v1360, %v1359
  %v1379 = vpack.c.bf16 %v1362, %v1361
  %v1380 = vpack.c.bf16 %v1364, %v1363
  %1381 = vmatprep.subr.bf16.mxu0 0
  %1382 = vmatpush1.bf16.msra.mxu0 %v1372
  %1383 = vmatprep.subr.bf16.mxu0 0
  %1384 = vmatpush1.bf16.msra.mxu0 %v1371
  %1385 = vmatprep.subr.bf16.mxu0 0
  %1386 = vmatpush1.bf16.msra.mxu0 %v1370
  %1387 = vmatprep.subr.bf16.mxu0 0
  %1388 = vmatpush1.bf16.msra.mxu0 %v1369
  %1389 = vmatprep.subr.bf16.mxu0 0
  %1390 = vmatpush1.bf16.msra.mxu0 %v1368
  %1391 = vmatprep.subr.bf16.mxu0 0
  %1392 = vmatpush1.bf16.msra.mxu0 %v1367
  %1393 = vmatprep.subr.bf16.mxu0 0
  %1394 = vmatpush1.bf16.msra.mxu0 %v1366
  %1395 = vmatprep.subr.bf16.mxu0 0
  %1396 = vmatpush1.bf16.msra.mxu0 %v1365
  %1397 = vmatprep.subr.bf16.mxu0 0
  %1398 = vmatpush2.bf16.msra.mxu0 %v1380
  %1399 = vmatprep.subr.bf16.mxu0 0
  %1400 = vmatpush2.bf16.msra.mxu0 %v1379
  %1401 = vmatprep.subr.bf16.mxu0 0
  %1402 = vmatpush2.bf16.msra.mxu0 %v1378
  %1403 = vmatprep.subr.bf16.mxu0 0
  %1404 = vmatpush2.bf16.msra.mxu0 %v1377
  %1405 = vmatprep.subr.bf16.mxu0 0
  %1406 = vmatpush2.bf16.msra.mxu0 %v1376
  %1407 = vmatprep.subr.bf16.mxu0 0
  %1408 = vmatpush2.bf16.msra.mxu0 %v1375
  %1409 = vmatprep.subr.bf16.mxu0 0
  %1410 = vmatpush2.bf16.msra.mxu0 %v1374
  %1411 = vmatprep.subr.bf16.mxu0 0
  %1412 = vmatpush2.bf16.msra.mxu0 %v1373
  %1413 = vmatprep.mubr.bf16.mxu0 %v314
  %1414 = vmatmul.mubr.bf16.gmra.mxu0 %v313
  %v1415 = vpop.f32.mrf.mxu0
  %v1416 = vadd.f32 0.0, %v1415
  %v1417 = vpop.f32.mrf.mxu0
  %v1418 = vpop.f32.mrf.mxu0
  %v1419 = vadd.f32 0.0, %v1418
  %v1420 = vpop.f32.mrf.mxu0
  %1421 = vmatprep.mubr.bf16.mxu0 %v316
  %1422 = vmatmul.mubr.bf16.gmra.mxu0 %v315
  %v1423 = vpop.f32.mrf.mxu0
  %v1424 = vadd.f32 0.0, %v1423
  %v1425 = vpop.f32.mrf.mxu0
  %v1426 = vpop.f32.mrf.mxu0
  %v1427 = vadd.f32 0.0, %v1426
  %v1428 = vpop.f32.mrf.mxu0
  %1429 = vmatprep.mubr.bf16.mxu0 %v318
  %1430 = vmatmul.mubr.bf16.gmra.mxu0 %v317
  %v1431 = vpop.f32.mrf.mxu0
  %v1432 = vadd.f32 0.0, %v1431
  %v1433 = vpop.f32.mrf.mxu0
  %v1434 = vpop.f32.mrf.mxu0
  %v1435 = vadd.f32 0.0, %v1434
  %v1436 = vpop.f32.mrf.mxu0
  %1437 = vmatprep.mubr.bf16.mxu0 %v320
  %1438 = vmatmul.mubr.bf16.gmra.mxu0 %v319
  %v1439 = vpop.f32.mrf.mxu0
  %v1440 = vadd.f32 0.0, %v1439
  %v1441 = vpop.f32.mrf.mxu0
  %v1442 = vpop.f32.mrf.mxu0
  %v1443 = vadd.f32 0.0, %v1442
  %v1444 = vpop.f32.mrf.mxu0
  %1445 = vmatprep.mubr.bf16.mxu0 %v322
  %1446 = vmatmul.mubr.bf16.gmra.mxu0 %v321
  %v1447 = vpop.f32.mrf.mxu0
  %v1448 = vadd.f32 0.0, %v1447
  %v1449 = vpop.f32.mrf.mxu0
  %v1450 = vpop.f32.mrf.mxu0
  %v1451 = vadd.f32 0.0, %v1450
  %v1452 = vpop.f32.mrf.mxu0
  %1453 = vmatprep.mubr.bf16.mxu0 %v324
  %1454 = vmatmul.mubr.bf16.gmra.mxu0 %v323
  %v1455 = vpop.f32.mrf.mxu0
  %v1456 = vadd.f32 0.0, %v1455
  %v1457 = vpop.f32.mrf.mxu0
  %v1458 = vpop.f32.mrf.mxu0
  %v1459 = vadd.f32 0.0, %v1458
  %v1460 = vpop.f32.mrf.mxu0
  %1461 = vmatprep.mubr.bf16.mxu0 %v326
  %1462 = vmatmul.mubr.bf16.gmra.mxu0 %v325
  %v1463 = vpop.f32.mrf.mxu0
  %v1464 = vadd.f32 0.0, %v1463
  %v1465 = vpop.f32.mrf.mxu0
  %v1466 = vpop.f32.mrf.mxu0
  %v1467 = vadd.f32 0.0, %v1466
  %v1468 = vpop.f32.mrf.mxu0
  %1469 = vmatprep.mubr.bf16.mxu0 %v328
  %1470 = vmatmul.mubr.bf16.gmra.mxu0 %v327
  %v1471 = vpop.f32.mrf.mxu0
  %v1472 = vadd.f32 0.0, %v1471
  %v1473 = vpop.f32.mrf.mxu0
  %v1474 = vpop.f32.mrf.mxu0
  %v1475 = vadd.f32 0.0, %v1474
  %v1476 = vpop.f32.mrf.mxu0
  %1477 = vmatprep.mubr.bf16.mxu0 %v330
  %1478 = vmatmul.mubr.bf16.gmra.mxu0 %v329
  %v1479 = vpop.f32.mrf.mxu0
  %v1480 = vadd.f32 0.0, %v1479
  %v1481 = vpop.f32.mrf.mxu0
  %v1482 = vpop.f32.mrf.mxu0
  %v1483 = vadd.f32 0.0, %v1482
  %v1484 = vpop.f32.mrf.mxu0
  %1485 = vmatprep.mubr.bf16.mxu0 %v332
  %1486 = vmatmul.mubr.bf16.gmra.mxu0 %v331
  %v1487 = vpop.f32.mrf.mxu0
  %v1488 = vadd.f32 0.0, %v1487
  %v1489 = vpop.f32.mrf.mxu0
  %v1490 = vpop.f32.mrf.mxu0
  %v1491 = vadd.f32 0.0, %v1490
  %v1492 = vpop.f32.mrf.mxu0
  %1493 = vmatprep.mubr.bf16.mxu0 %v334
  %1494 = vmatmul.mubr.bf16.gmra.mxu0 %v333
  %v1495 = vpop.f32.mrf.mxu0
  %v1496 = vadd.f32 0.0, %v1495
  %v1497 = vpop.f32.mrf.mxu0
  %v1498 = vpop.f32.mrf.mxu0
  %v1499 = vadd.f32 0.0, %v1498
  %v1500 = vpop.f32.mrf.mxu0
  %1501 = vmatprep.mubr.bf16.mxu0 %v336
  %1502 = vmatmul.mubr.bf16.gmra.mxu0 %v335
  %v1503 = vpop.f32.mrf.mxu0
  %v1504 = vadd.f32 0.0, %v1503
  %v1505 = vpop.f32.mrf.mxu0
  %v1506 = vpop.f32.mrf.mxu0
  %v1507 = vadd.f32 0.0, %v1506
  %v1508 = vpop.f32.mrf.mxu0
  %1509 = vmatprep.mubr.bf16.mxu0 %v338
  %1510 = vmatmul.mubr.bf16.gmra.mxu0 %v337
  %v1511 = vpop.f32.mrf.mxu0
  %v1512 = vadd.f32 0.0, %v1511
  %v1513 = vpop.f32.mrf.mxu0
  %v1514 = vpop.f32.mrf.mxu0
  %v1515 = vadd.f32 0.0, %v1514
  %v1516 = vpop.f32.mrf.mxu0
  %1517 = vmatprep.mubr.bf16.mxu0 %v340
  %1518 = vmatmul.mubr.bf16.gmra.mxu0 %v339
  %v1519 = vpop.f32.mrf.mxu0
  %v1520 = vadd.f32 0.0, %v1519
  %v1521 = vpop.f32.mrf.mxu0
  %v1522 = vpop.f32.mrf.mxu0
  %v1523 = vadd.f32 0.0, %v1522
  %v1524 = vpop.f32.mrf.mxu0
  %1525 = vmatprep.mubr.bf16.mxu0 %v342
  %1526 = vmatmul.mubr.bf16.gmra.mxu0 %v341
  %v1527 = vpop.f32.mrf.mxu0
  %v1528 = vadd.f32 0.0, %v1527
  %v1529 = vpop.f32.mrf.mxu0
  %v1530 = vpop.f32.mrf.mxu0
  %v1531 = vadd.f32 0.0, %v1530
  %v1532 = vpop.f32.mrf.mxu0
  %1533 = vmatprep.mubr.bf16.mxu0 %v344
  %1534 = vmatmul.mubr.bf16.gmra.mxu0 %v343
  %v1535 = vpop.f32.mrf.mxu0
  %v1536 = vadd.f32 0.0, %v1535
  %v1537 = vpop.f32.mrf.mxu0
  %v1538 = vpop.f32.mrf.mxu0
  %v1539 = vadd.f32 0.0, %v1538
  %v1540 = vpop.f32.mrf.mxu0
  %1541 = vmatprep.mubr.bf16.mxu0 %v346
  %1542 = vmatmul.mubr.bf16.gmra.mxu0 %v345
  %v1543 = vpop.f32.mrf.mxu0
  %v1544 = vadd.f32 0.0, %v1543
  %v1545 = vpop.f32.mrf.mxu0
  %v1546 = vpop.f32.mrf.mxu0
  %v1547 = vadd.f32 0.0, %v1546
  %v1548 = vpop.f32.mrf.mxu0
  %1549 = vmatprep.mubr.bf16.mxu0 %v348
  %1550 = vmatmul.mubr.bf16.gmra.mxu0 %v347
  %v1551 = vpop.f32.mrf.mxu0
  %v1552 = vadd.f32 0.0, %v1551
  %v1553 = vpop.f32.mrf.mxu0
  %v1554 = vpop.f32.mrf.mxu0
  %v1555 = vadd.f32 0.0, %v1554
  %v1556 = vpop.f32.mrf.mxu0
  %1557 = vdwg.mxu0
  %v1558 = vmul.f32 %v1416, %v121
  %v1559 = vmul.f32 %v1419, %v122
  %v1560 = vmul.f32 %v1424, %v123
  %v1561 = vmul.f32 %v1427, %v124
  %v1562 = vmul.f32 %v1432, %v125
  %v1563 = vmul.f32 %v1435, %v126
  %v1564 = vmul.f32 %v1440, %v127
  %v1565 = vmul.f32 %v1443, %v128
  %v1566 = vmul.f32 %v1448, %v129
  %v1567 = vmul.f32 %v1451, %v130
  %v1568 = vmul.f32 %v1456, %v131
  %v1569 = vmul.f32 %v1459, %v132
  %v1570 = vmul.f32 %v1464, %v133
  %v1571 = vmul.f32 %v1467, %v134
  %v1572 = vmul.f32 %v1472, %v135
  %v1573 = vmul.f32 %v1475, %v136
  %v1574 = vmul.f32 %v1480, %v137
  %v1575 = vmul.f32 %v1483, %v138
  %v1576 = vmul.f32 %v1488, %v139
  %v1577 = vmul.f32 %v1491, %v140
  %v1578 = vmul.f32 %v1496, %v141
  %v1579 = vmul.f32 %v1499, %v142
  %v1580 = vmul.f32 %v1504, %v143
  %v1581 = vmul.f32 %v1507, %v144
  %v1582 = vmul.f32 %v1512, %v145
  %v1583 = vmul.f32 %v1515, %v146
  %v1584 = vmul.f32 %v1520, %v147
  %v1585 = vmul.f32 %v1523, %v148
  %v1586 = vmul.f32 %v1528, %v149
  %v1587 = vmul.f32 %v1531, %v150
  %v1588 = vmul.f32 %v1536, %v151
  %v1589 = vmul.f32 %v1539, %v152
  %v1590 = vmul.f32 %v1544, %v153
  %v1591 = vmul.f32 %v1547, %v154
  %v1592 = vmul.f32 %v1552, %v155
  %v1593 = vmul.f32 %v1555, %v156
  %v1594 = vsub.f32 %v1558, %v1576
  %v1595 = vsub.f32 %v1559, %v1577
  %v1596 = vsub.f32 %v1560, %v1578
  %v1597 = vsub.f32 %v1561, %v1579
  %v1598 = vsub.f32 %v1562, %v1580
  %v1599 = vsub.f32 %v1563, %v1581
  %v1600 = vsub.f32 %v1564, %v1582
  %v1601 = vsub.f32 %v1565, %v1583
  %v1602 = vsub.f32 %v1566, %v1584
  %v1603 = vsub.f32 %v1567, %v1585
  %v1604 = vsub.f32 %v1568, %v1586
  %v1605 = vsub.f32 %v1569, %v1587
  %v1606 = vsub.f32 %v1570, %v1588
  %v1607 = vsub.f32 %v1571, %v1589
  %v1608 = vsub.f32 %v1572, %v1590
  %v1609 = vsub.f32 %v1573, %v1591
  %v1610 = vsub.f32 %v1574, %v1592
  %v1611 = vsub.f32 %v1575, %v1593
  %v1612 = vpack.c.bf16 %v1595, %v1594
  %v1613 = vpack.c.bf16 %v1597, %v1596
  %v1614 = vpack.c.bf16 %v1599, %v1598
  %v1615 = vpack.c.bf16 %v1601, %v1600
  %v1616 = vpack.c.bf16 %v1603, %v1602
  %v1617 = vpack.c.bf16 %v1605, %v1604
  %v1618 = vpack.c.bf16 %v1607, %v1606
  %v1619 = vpack.c.bf16 %v1609, %v1608
  %v1620 = vpack.c.bf16 %v1611, %v1610
  %v1621 = vmul.f32 %v1416, %v139
  %v1622 = vmul.f32 %v1419, %v140
  %v1623 = vmul.f32 %v1424, %v141
  %v1624 = vmul.f32 %v1427, %v142
  %v1625 = vmul.f32 %v1432, %v143
  %v1626 = vmul.f32 %v1435, %v144
  %v1627 = vmul.f32 %v1440, %v145
  %v1628 = vmul.f32 %v1443, %v146
  %v1629 = vmul.f32 %v1448, %v147
  %v1630 = vmul.f32 %v1451, %v148
  %v1631 = vmul.f32 %v1456, %v149
  %v1632 = vmul.f32 %v1459, %v150
  %v1633 = vmul.f32 %v1464, %v151
  %v1634 = vmul.f32 %v1467, %v152
  %v1635 = vmul.f32 %v1472, %v153
  %v1636 = vmul.f32 %v1475, %v154
  %v1637 = vmul.f32 %v1480, %v155
  %v1638 = vmul.f32 %v1483, %v156
  %v1639 = vmul.f32 %v1488, %v121
  %v1640 = vmul.f32 %v1491, %v122
  %v1641 = vmul.f32 %v1496, %v123
  %v1642 = vmul.f32 %v1499, %v124
  %v1643 = vmul.f32 %v1504, %v125
  %v1644 = vmul.f32 %v1507, %v126
  %v1645 = vmul.f32 %v1512, %v127
  %v1646 = vmul.f32 %v1515, %v128
  %v1647 = vmul.f32 %v1520, %v129
  %v1648 = vmul.f32 %v1523, %v130
  %v1649 = vmul.f32 %v1528, %v131
  %v1650 = vmul.f32 %v1531, %v132
  %v1651 = vmul.f32 %v1536, %v133
  %v1652 = vmul.f32 %v1539, %v134
  %v1653 = vmul.f32 %v1544, %v135
  %v1654 = vmul.f32 %v1547, %v136
  %v1655 = vmul.f32 %v1552, %v137
  %v1656 = vmul.f32 %v1555, %v138
  %v1657 = vadd.f32 %v1621, %v1639
  %v1658 = vadd.f32 %v1622, %v1640
  %v1659 = vadd.f32 %v1623, %v1641
  %v1660 = vadd.f32 %v1624, %v1642
  %v1661 = vadd.f32 %v1625, %v1643
  %v1662 = vadd.f32 %v1626, %v1644
  %v1663 = vadd.f32 %v1627, %v1645
  %v1664 = vadd.f32 %v1628, %v1646
  %v1665 = vadd.f32 %v1629, %v1647
  %v1666 = vadd.f32 %v1630, %v1648
  %v1667 = vadd.f32 %v1631, %v1649
  %v1668 = vadd.f32 %v1632, %v1650
  %v1669 = vadd.f32 %v1633, %v1651
  %v1670 = vadd.f32 %v1634, %v1652
  %v1671 = vadd.f32 %v1635, %v1653
  %v1672 = vadd.f32 %v1636, %v1654
  %v1673 = vadd.f32 %v1637, %v1655
  %v1674 = vadd.f32 %v1638, %v1656
  %v1675 = vpack.c.bf16 %v1658, %v1657
  %v1676 = vpack.c.bf16 %v1660, %v1659
  %v1677 = vpack.c.bf16 %v1662, %v1661
  %v1678 = vpack.c.bf16 %v1664, %v1663
  %v1679 = vpack.c.bf16 %v1666, %v1665
  %v1680 = vpack.c.bf16 %v1668, %v1667
  %v1681 = vpack.c.bf16 %v1670, %v1669
  %v1682 = vpack.c.bf16 %v1672, %v1671
  %v1683 = vpack.c.bf16 %v1674, %v1673
  %1684 = vmatprep.subr.bf16.mxu0 0
  %1685 = vmatpush1.bf16.msra.mxu0 %v1619
  %1686 = vmatprep.subr.bf16.mxu0 0
  %1687 = vmatpush1.bf16.msra.mxu0 %v1618
  %1688 = vmatprep.subr.bf16.mxu0 0
  %1689 = vmatpush1.bf16.msra.mxu0 %v1617
  %1690 = vmatprep.subr.bf16.mxu0 0
  %1691 = vmatpush1.bf16.msra.mxu0 %v1616
  %1692 = vmatprep.subr.bf16.mxu0 0
  %1693 = vmatpush1.bf16.msra.mxu0 %v1615
  %1694 = vmatprep.subr.bf16.mxu0 0
  %1695 = vmatpush1.bf16.msra.mxu0 %v1614
  %1696 = vmatprep.subr.bf16.mxu0 0
  %1697 = vmatpush1.bf16.msra.mxu0 %v1613
  %1698 = vmatprep.subr.bf16.mxu0 0
  %1699 = vmatpush1.bf16.msra.mxu0 %v1612
  %1700 = vmatprep.subr.bf16.mxu0 0
  %1701 = vmatpush2.bf16.msra.mxu0 %v1681
  %1702 = vmatprep.subr.bf16.mxu0 0
  %1703 = vmatpush2.bf16.msra.mxu0 %v1680
  %1704 = vmatprep.subr.bf16.mxu0 0
  %1705 = vmatpush2.bf16.msra.mxu0 %v1679
  %1706 = vmatprep.subr.bf16.mxu0 0
  %1707 = vmatpush2.bf16.msra.mxu0 %v1678
  %1708 = vmatprep.subr.bf16.mxu0 0
  %1709 = vmatpush2.bf16.msra.mxu0 %v1677
  %1710 = vmatprep.subr.bf16.mxu0 0
  %1711 = vmatpush2.bf16.msra.mxu0 %v1676
  %1712 = vmatprep.subr.bf16.mxu0 0
  %1713 = vmatpush2.bf16.msra.mxu0 %v1675
  %1714 = vmatprep.subr.bf16.mxu0 0
  %1715 = vmatpush2.bf16.msra.mxu0 %v1620
  %1716 = vmatprep.mubr.bf16.mxu0 %v849
  %1717 = vmatmul.mubr.bf16.gmra.mxu0 %v848
  %v1718 = vpop.f32.mrf.mxu0
  %v1719 = vadd.f32 0.0, %v1718
  %v1720 = vpop.f32.mrf.mxu0
  %v1721 = vpop.f32.mrf.mxu0
  %v1722 = vadd.f32 0.0, %v1721
  %v1723 = vpop.f32.mrf.mxu0
  %1724 = vmatprep.mubr.bf16.mxu0 %v852
  %1725 = vmatmul.mubr.bf16.gmra.mxu0 %v851
  %v1726 = vpop.f32.mrf.mxu0
  %v1727 = vadd.f32 0.0, %v1726
  %v1728 = vpop.f32.mrf.mxu0
  %v1729 = vpop.f32.mrf.mxu0
  %v1730 = vadd.f32 0.0, %v1729
  %v1731 = vpop.f32.mrf.mxu0
  %1732 = vmatprep.mubr.bf16.mxu0 %v855
  %1733 = vmatmul.mubr.bf16.gmra.mxu0 %v854
  %v1734 = vpop.f32.mrf.mxu0
  %v1735 = vadd.f32 0.0, %v1734
  %v1736 = vpop.f32.mrf.mxu0
  %v1737 = vpop.f32.mrf.mxu0
  %v1738 = vadd.f32 0.0, %v1737
  %v1739 = vpop.f32.mrf.mxu0
  %1740 = vmatprep.mubr.bf16.mxu0 %v858
  %1741 = vmatmul.mubr.bf16.gmra.mxu0 %v857
  %v1742 = vpop.f32.mrf.mxu0
  %v1743 = vadd.f32 0.0, %v1742
  %v1744 = vpop.f32.mrf.mxu0
  %v1745 = vpop.f32.mrf.mxu0
  %v1746 = vadd.f32 0.0, %v1745
  %v1747 = vpop.f32.mrf.mxu0
  %1748 = vmatprep.mubr.bf16.mxu0 %v861
  %1749 = vmatmul.mubr.bf16.gmra.mxu0 %v860
  %v1750 = vpop.f32.mrf.mxu0
  %v1751 = vadd.f32 0.0, %v1750
  %v1752 = vpop.f32.mrf.mxu0
  %v1753 = vpop.f32.mrf.mxu0
  %v1754 = vadd.f32 0.0, %v1753
  %v1755 = vpop.f32.mrf.mxu0
  %1756 = vmatprep.mubr.bf16.mxu0 %v864
  %1757 = vmatmul.mubr.bf16.gmra.mxu0 %v863
  %v1758 = vpop.f32.mrf.mxu0
  %v1759 = vadd.f32 0.0, %v1758
  %v1760 = vpop.f32.mrf.mxu0
  %v1761 = vpop.f32.mrf.mxu0
  %v1762 = vadd.f32 0.0, %v1761
  %v1763 = vpop.f32.mrf.mxu0
  %1764 = vmatprep.mubr.bf16.mxu0 %v867
  %1765 = vmatmul.mubr.bf16.gmra.mxu0 %v866
  %v1766 = vpop.f32.mrf.mxu0
  %v1767 = vadd.f32 0.0, %v1766
  %v1768 = vpop.f32.mrf.mxu0
  %v1769 = vpop.f32.mrf.mxu0
  %v1770 = vadd.f32 0.0, %v1769
  %v1771 = vpop.f32.mrf.mxu0
  %1772 = vmatprep.mubr.bf16.mxu0 %v870
  %1773 = vmatmul.mubr.bf16.gmra.mxu0 %v869
  %v1774 = vpop.f32.mrf.mxu0
  %v1775 = vadd.f32 0.0, %v1774
  %v1776 = vpop.f32.mrf.mxu0
  %v1777 = vpop.f32.mrf.mxu0
  %v1778 = vadd.f32 0.0, %v1777
  %v1779 = vpop.f32.mrf.mxu0
  %1780 = vmatprep.mubr.bf16.mxu0 %v873
  %1781 = vmatmul.mubr.bf16.gmra.mxu0 %v872
  %v1782 = vpop.f32.mrf.mxu0
  %v1783 = vadd.f32 0.0, %v1782
  %v1784 = vpop.f32.mrf.mxu0
  %v1785 = vpop.f32.mrf.mxu0
  %v1786 = vadd.f32 0.0, %v1785
  %v1787 = vpop.f32.mrf.mxu0
  %1788 = vmatprep.mubr.bf16.mxu0 %v876
  %1789 = vmatmul.mubr.bf16.gmra.mxu0 %v875
  %v1790 = vpop.f32.mrf.mxu0
  %v1791 = vadd.f32 0.0, %v1790
  %v1792 = vpop.f32.mrf.mxu0
  %v1793 = vpop.f32.mrf.mxu0
  %v1794 = vadd.f32 0.0, %v1793
  %v1795 = vpop.f32.mrf.mxu0
  %1796 = vmatprep.mubr.bf16.mxu0 %v879
  %1797 = vmatmul.mubr.bf16.gmra.mxu0 %v878
  %v1798 = vpop.f32.mrf.mxu0
  %v1799 = vadd.f32 0.0, %v1798
  %v1800 = vpop.f32.mrf.mxu0
  %v1801 = vpop.f32.mrf.mxu0
  %v1802 = vadd.f32 0.0, %v1801
  %v1803 = vpop.f32.mrf.mxu0
  %1804 = vmatprep.mubr.bf16.mxu0 %v882
  %1805 = vmatmul.mubr.bf16.gmra.mxu0 %v881
  %v1806 = vpop.f32.mrf.mxu0
  %v1807 = vadd.f32 0.0, %v1806
  %v1808 = vpop.f32.mrf.mxu0
  %v1809 = vpop.f32.mrf.mxu0
  %v1810 = vadd.f32 0.0, %v1809
  %v1811 = vpop.f32.mrf.mxu0
  %1812 = vmatprep.mubr.bf16.mxu0 %v885
  %1813 = vmatmul.mubr.bf16.gmra.mxu0 %v884
  %v1814 = vpop.f32.mrf.mxu0
  %v1815 = vadd.f32 0.0, %v1814
  %v1816 = vpop.f32.mrf.mxu0
  %v1817 = vpop.f32.mrf.mxu0
  %v1818 = vadd.f32 0.0, %v1817
  %v1819 = vpop.f32.mrf.mxu0
  %1820 = vmatprep.mubr.bf16.mxu0 %v888
  %1821 = vmatmul.mubr.bf16.gmra.mxu0 %v887
  %v1822 = vpop.f32.mrf.mxu0
  %v1823 = vadd.f32 0.0, %v1822
  %v1824 = vpop.f32.mrf.mxu0
  %v1825 = vpop.f32.mrf.mxu0
  %v1826 = vadd.f32 0.0, %v1825
  %v1827 = vpop.f32.mrf.mxu0
  %1828 = vmatprep.mubr.bf16.mxu0 %v891
  %1829 = vmatmul.mubr.bf16.gmra.mxu0 %v890
  %v1830 = vpop.f32.mrf.mxu0
  %v1831 = vadd.f32 0.0, %v1830
  %v1832 = vpop.f32.mrf.mxu0
  %v1833 = vpop.f32.mrf.mxu0
  %v1834 = vadd.f32 0.0, %v1833
  %v1835 = vpop.f32.mrf.mxu0
  %1836 = vmatprep.mubr.bf16.mxu0 %v894
  %1837 = vmatmul.mubr.bf16.gmra.mxu0 %v893
  %v1838 = vpop.f32.mrf.mxu0
  %v1839 = vadd.f32 0.0, %v1838
  %v1840 = vpop.f32.mrf.mxu0
  %v1841 = vpop.f32.mrf.mxu0
  %v1842 = vadd.f32 0.0, %v1841
  %v1843 = vpop.f32.mrf.mxu0
  %1844 = vdwg.mxu0
  %1845 = vmatprep.subr.bf16.mxu0 0
  %1846 = vmatpush1.bf16.msra.mxu0 0
  %1847 = vmatprep.subr.bf16.mxu0 0
  %1848 = vmatpush1.bf16.msra.mxu0 0
  %1849 = vmatprep.subr.bf16.mxu0 0
  %1850 = vmatpush1.bf16.msra.mxu0 0
  %1851 = vmatprep.subr.bf16.mxu0 0
  %1852 = vmatpush1.bf16.msra.mxu0 0
  %1853 = vmatprep.subr.bf16.mxu0 0
  %1854 = vmatpush1.bf16.msra.mxu0 0
  %1855 = vmatprep.subr.bf16.mxu0 0
  %1856 = vmatpush1.bf16.msra.mxu0 0
  %1857 = vmatprep.subr.bf16.mxu0 0
  %1858 = vmatpush1.bf16.msra.mxu0 %v1683
  %1859 = vmatprep.subr.bf16.mxu0 0
  %1860 = vmatpush1.bf16.msra.mxu0 %v1682
  %1861 = vmatprep.subr.bf16.mxu0 0
  %1862 = vmatpush2.bf16.msra.mxu0 0
  %1863 = vmatprep.subr.bf16.mxu0 0
  %1864 = vmatpush2.bf16.msra.mxu0 0
  %1865 = vmatprep.subr.bf16.mxu0 0
  %1866 = vmatpush2.bf16.msra.mxu0 0
  %1867 = vmatprep.subr.bf16.mxu0 0
  %1868 = vmatpush2.bf16.msra.mxu0 0
  %1869 = vmatprep.subr.bf16.mxu0 0
  %1870 = vmatpush2.bf16.msra.mxu0 0
  %1871 = vmatprep.subr.bf16.mxu0 0
  %1872 = vmatpush2.bf16.msra.mxu0 0
  %1873 = vmatprep.subr.bf16.mxu0 0
  %1874 = vmatpush2.bf16.msra.mxu0 0
  %1875 = vmatprep.subr.bf16.mxu0 0
  %1876 = vmatpush2.bf16.msra.mxu0 0
  %1877 = vmatprep.mubr.bf16.mxu0 0
  %1878 = vmatmul.mubr.bf16.gmra.mxu0 %v930
  %v1879 = vpop.f32.mrf.mxu0
  %v1880 = vadd.f32 %v1719, %v1879
  %v1881 = vpop.f32.mrf.mxu0
  %v1882 = vpop.f32.mrf.mxu0
  %v1883 = vadd.f32 %v1722, %v1882
  %v1884 = vpop.f32.mrf.mxu0
  %1885 = vmatprep.mubr.bf16.mxu0 0
  %1886 = vmatmul.mubr.bf16.gmra.mxu0 %v933
  %v1887 = vpop.f32.mrf.mxu0
  %v1888 = vadd.f32 %v1727, %v1887
  %v1889 = vpop.f32.mrf.mxu0
  %v1890 = vpop.f32.mrf.mxu0
  %v1891 = vadd.f32 %v1730, %v1890
  %v1892 = vpop.f32.mrf.mxu0
  %1893 = vmatprep.mubr.bf16.mxu0 0
  %1894 = vmatmul.mubr.bf16.gmra.mxu0 %v936
  %v1895 = vpop.f32.mrf.mxu0
  %v1896 = vadd.f32 %v1735, %v1895
  %v1897 = vpop.f32.mrf.mxu0
  %v1898 = vpop.f32.mrf.mxu0
  %v1899 = vadd.f32 %v1738, %v1898
  %v1900 = vpop.f32.mrf.mxu0
  %1901 = vmatprep.mubr.bf16.mxu0 0
  %1902 = vmatmul.mubr.bf16.gmra.mxu0 %v939
  %v1903 = vpop.f32.mrf.mxu0
  %v1904 = vadd.f32 %v1743, %v1903
  %v1905 = vpop.f32.mrf.mxu0
  %v1906 = vpop.f32.mrf.mxu0
  %v1907 = vadd.f32 %v1746, %v1906
  %v1908 = vpop.f32.mrf.mxu0
  %1909 = vmatprep.mubr.bf16.mxu0 0
  %1910 = vmatmul.mubr.bf16.gmra.mxu0 %v942
  %v1911 = vpop.f32.mrf.mxu0
  %v1912 = vadd.f32 %v1751, %v1911
  %v1913 = vpop.f32.mrf.mxu0
  %v1914 = vpop.f32.mrf.mxu0
  %v1915 = vadd.f32 %v1754, %v1914
  %v1916 = vpop.f32.mrf.mxu0
  %1917 = vmatprep.mubr.bf16.mxu0 0
  %1918 = vmatmul.mubr.bf16.gmra.mxu0 %v945
  %v1919 = vpop.f32.mrf.mxu0
  %v1920 = vadd.f32 %v1759, %v1919
  %v1921 = vpop.f32.mrf.mxu0
  %v1922 = vpop.f32.mrf.mxu0
  %v1923 = vadd.f32 %v1762, %v1922
  %v1924 = vpop.f32.mrf.mxu0
  %1925 = vmatprep.mubr.bf16.mxu0 0
  %1926 = vmatmul.mubr.bf16.gmra.mxu0 %v948
  %v1927 = vpop.f32.mrf.mxu0
  %v1928 = vadd.f32 %v1767, %v1927
  %v1929 = vpop.f32.mrf.mxu0
  %v1930 = vpop.f32.mrf.mxu0
  %v1931 = vadd.f32 %v1770, %v1930
  %v1932 = vpop.f32.mrf.mxu0
  %1933 = vmatprep.mubr.bf16.mxu0 0
  %1934 = vmatmul.mubr.bf16.gmra.mxu0 %v951
  %v1935 = vpop.f32.mrf.mxu0
  %v1936 = vadd.f32 %v1775, %v1935
  %v1937 = vpop.f32.mrf.mxu0
  %v1938 = vpop.f32.mrf.mxu0
  %v1939 = vadd.f32 %v1778, %v1938
  %v1940 = vpop.f32.mrf.mxu0
  %1941 = vmatprep.mubr.bf16.mxu0 0
  %1942 = vmatmul.mubr.bf16.gmra.mxu0 %v954
  %v1943 = vpop.f32.mrf.mxu0
  %v1944 = vadd.f32 %v1783, %v1943
  %v1945 = vpop.f32.mrf.mxu0
  %v1946 = vpop.f32.mrf.mxu0
  %v1947 = vadd.f32 %v1786, %v1946
  %v1948 = vpop.f32.mrf.mxu0
  %1949 = vmatprep.mubr.bf16.mxu0 0
  %1950 = vmatmul.mubr.bf16.gmra.mxu0 %v957
  %v1951 = vpop.f32.mrf.mxu0
  %v1952 = vadd.f32 %v1791, %v1951
  %v1953 = vpop.f32.mrf.mxu0
  %v1954 = vpop.f32.mrf.mxu0
  %v1955 = vadd.f32 %v1794, %v1954
  %v1956 = vpop.f32.mrf.mxu0
  %1957 = vmatprep.mubr.bf16.mxu0 0
  %1958 = vmatmul.mubr.bf16.gmra.mxu0 %v960
  %v1959 = vpop.f32.mrf.mxu0
  %v1960 = vadd.f32 %v1799, %v1959
  %v1961 = vpop.f32.mrf.mxu0
  %v1962 = vpop.f32.mrf.mxu0
  %v1963 = vadd.f32 %v1802, %v1962
  %v1964 = vpop.f32.mrf.mxu0
  %1965 = vmatprep.mubr.bf16.mxu0 0
  %1966 = vmatmul.mubr.bf16.gmra.mxu0 %v963
  %v1967 = vpop.f32.mrf.mxu0
  %v1968 = vadd.f32 %v1807, %v1967
  %v1969 = vpop.f32.mrf.mxu0
  %v1970 = vpop.f32.mrf.mxu0
  %v1971 = vadd.f32 %v1810, %v1970
  %v1972 = vpop.f32.mrf.mxu0
  %1973 = vmatprep.mubr.bf16.mxu0 0
  %1974 = vmatmul.mubr.bf16.gmra.mxu0 %v966
  %v1975 = vpop.f32.mrf.mxu0
  %v1976 = vadd.f32 %v1815, %v1975
  %v1977 = vpop.f32.mrf.mxu0
  %v1978 = vpop.f32.mrf.mxu0
  %v1979 = vadd.f32 %v1818, %v1978
  %v1980 = vpop.f32.mrf.mxu0
  %1981 = vmatprep.mubr.bf16.mxu0 0
  %1982 = vmatmul.mubr.bf16.gmra.mxu0 %v969
  %v1983 = vpop.f32.mrf.mxu0
  %v1984 = vadd.f32 %v1823, %v1983
  %v1985 = vpop.f32.mrf.mxu0
  %v1986 = vpop.f32.mrf.mxu0
  %v1987 = vadd.f32 %v1826, %v1986
  %v1988 = vpop.f32.mrf.mxu0
  %1989 = vmatprep.mubr.bf16.mxu0 0
  %1990 = vmatmul.mubr.bf16.gmra.mxu0 %v972
  %v1991 = vpop.f32.mrf.mxu0
  %v1992 = vadd.f32 %v1831, %v1991
  %v1993 = vpop.f32.mrf.mxu0
  %v1994 = vpop.f32.mrf.mxu0
  %v1995 = vadd.f32 %v1834, %v1994
  %v1996 = vpop.f32.mrf.mxu0
  %1997 = vmatprep.mubr.bf16.mxu0 0
  %1998 = vmatmul.mubr.bf16.gmra.mxu0 %v975
  %v1999 = vpop.f32.mrf.mxu0
  %v2000 = vadd.f32 %v1839, %v1999
  %v2001 = vpop.f32.mrf.mxu0
  %v2002 = vpop.f32.mrf.mxu0
  %v2003 = vadd.f32 %v1842, %v2002
  %v2004 = vpop.f32.mrf.mxu0
  %2005 = vdwg.mxu0
  %s2006 = scalar_lea.vmem %s5, 256
  %2007 = vst.msk [vmem:[%s2006] sm:$0xff] %vm1299, %v1880
  %2008 = vst.msk [vmem:[%s2006 + $0x8] sm:$0xff] %vm1299, %v1883
  %2009 = vst.msk [vmem:[%s2006 + $0x10] sm:$0xff] %vm1299, %v1888
  %2010 = vst.msk [vmem:[%s2006 + $0x18] sm:$0xff] %vm1299, %v1891
  %2011 = vst.msk [vmem:[%s2006 + $0x20] sm:$0xff] %vm1299, %v1896
  %2012 = vst.msk [vmem:[%s2006 + $0x28] sm:$0xff] %vm1299, %v1899
  %2013 = vst.msk [vmem:[%s2006 + $0x30] sm:$0xff] %vm1299, %v1904
  %2014 = vst.msk [vmem:[%s2006 + $0x38] sm:$0xff] %vm1299, %v1907
  %2015 = vst.msk [vmem:[%s2006 + $0x40] sm:$0xff] %vm1299, %v1912
  %2016 = vst.msk [vmem:[%s2006 + $0x48] sm:$0xff] %vm1299, %v1915
  %2017 = vst.msk [vmem:[%s2006 + $0x50] sm:$0xff] %vm1299, %v1920
  %2018 = vst.msk [vmem:[%s2006 + $0x58] sm:$0xff] %vm1299, %v1923
  %2019 = vst.msk [vmem:[%s2006 + $0x60] sm:$0xff] %vm1299, %v1928
  %2020 = vst.msk [vmem:[%s2006 + $0x68] sm:$0xff] %vm1299, %v1931
  %2021 = vst.msk [vmem:[%s2006 + $0x70] sm:$0xff] %vm1299, %v1936
  %2022 = vst.msk [vmem:[%s2006 + $0x78] sm:$0xff] %vm1299, %v1939
  %2023 = vst.msk [vmem:[%s2006 + $0x80] sm:$0xff] %vm1299, %v1944
  %2024 = vst.msk [vmem:[%s2006 + $0x88] sm:$0xff] %vm1299, %v1947
  %2025 = vst.msk [vmem:[%s2006 + $0x90] sm:$0xff] %vm1299, %v1952
  %2026 = vst.msk [vmem:[%s2006 + $0x98] sm:$0xff] %vm1299, %v1955
  %2027 = vst.msk [vmem:[%s2006 + $0xa0] sm:$0xff] %vm1299, %v1960
  %2028 = vst.msk [vmem:[%s2006 + $0xa8] sm:$0xff] %vm1299, %v1963
  %2029 = vst.msk [vmem:[%s2006 + $0xb0] sm:$0xff] %vm1299, %v1968
  %2030 = vst.msk [vmem:[%s2006 + $0xb8] sm:$0xff] %vm1299, %v1971
  %2031 = vst.msk [vmem:[%s2006 + $0xc0] sm:$0xff] %vm1299, %v1976
  %2032 = vst.msk [vmem:[%s2006 + $0xc8] sm:$0xff] %vm1299, %v1979
  %2033 = vst.msk [vmem:[%s2006 + $0xd0] sm:$0xff] %vm1299, %v1984
  %2034 = vst.msk [vmem:[%s2006 + $0xd8] sm:$0xff] %vm1299, %v1987
  %2035 = vst.msk [vmem:[%s2006 + $0xe0] sm:$0xff] %vm1299, %v1992
  %2036 = vst.msk [vmem:[%s2006 + $0xe8] sm:$0xff] %vm1299, %v1995
  %2037 = vst.msk [vmem:[%s2006 + $0xf0] sm:$0xff] %vm1299, %v2000
  %2038 = vst.msk [vmem:[%s2006 + $0xf8] sm:$0xff] %vm1299, %v2003
  // Predicated region
  $region22: #{tpu_custom_call.1} parent=0 // pred_check
    _
  $region23: #{tpu_custom_call.1} parent=0 // pred_check_branch
    %2040 = sbr.rel (0) target = $region25
  $region24: #{tpu_custom_call.1} parent=0 // pred_region
    _
  $region25: #{tpu_custom_call.1} parent=0 // pred_fallthru
    _
  // Predicated region
  $region26: #{tpu_custom_call.1} parent=0 // pred_check
    _
  $region27: #{tpu_custom_call.1} parent=0 // pred_check_branch
    %2042 = sbr.rel (0) target = $region29
  $region28: #{tpu_custom_call.1} parent=0 // pred_region
    _
  $region29: #{tpu_custom_call.1} parent=0 // pred_fallthru
    _

</llo_original>
